<compile_context>
chip_gen: v7x
topology: tpu7x:2x2x1
jax: 0.10.0
libtpu: 0.0.40
codegen_flags: <defaults>
</compile_context>

<pallas_src>
import jax
import jax.numpy as jnp
from jax import lax
from jax.experimental import pallas as pl
from jax.experimental.pallas import tpu as pltpu


def _round_up(n, m):
    return (n + m - 1) // m * m


def gru_fc_kernel(x_ref, wx_ref, bx_ref, whr_ref, whz_ref, whn_ref, bhn_ref,
                  wfc_ref, bfc_ref, o_ref, gr_ref, gz_ref, gn_ref):
    T, TB, In = x_ref.shape
    H = whr_ref.shape[0]
    C = o_ref.shape[1]
    use_vpu = H <= 8  # tiny contraction: VPU FMAs beat f32 MXU push/pop latency

    # ---- Prologue: one MXU matmul covers every input projection of the sequence ----
    # (T, TB, In) -> (T*TB, In) is a layout-preserving collapse (TB is a sublane multiple).
    x2d = x_ref[...].reshape(T * TB, In)
    g_all = (jnp.dot(x2d, wx_ref[...], preferred_element_type=jnp.float32)
             + jnp.broadcast_to(bx_ref[...], (T * TB, 3 * H)))
    gr_ref[...] = g_all[:, 0:H]            # x@Wir^T + b_ir + b_hr
    gz_ref[...] = g_all[:, H:2 * H]        # x@Wiz^T + b_iz + b_hz
    gn_ref[...] = g_all[:, 2 * H:3 * H]    # x@Win^T + b_in

    # ---- Loop-invariant broadcasts (hoisted: JAX does not CSE broadcast_in_dim) ----
    bhn = jnp.broadcast_to(bhn_ref[...], (TB, H))
    bfc = jnp.broadcast_to(bfc_ref[...], (TB, C))

    if use_vpu:
        # Recurrent mat-vec as H VPU FMAs: keeps the serial h-chain off the MXU.
        whr_rows = [jnp.broadcast_to(whr_ref[k:k + 1, :], (TB, H)) for k in range(H)]
        whz_rows = [jnp.broadcast_to(whz_ref[k:k + 1, :], (TB, H)) for k in range(H)]
        whn_rows = [jnp.broadcast_to(whn_ref[k:k + 1, :], (TB, H)) for k in range(H)]

        def _hmat(h, rows):
            out = h[:, 0:1] * rows[0]
            for k in range(1, H):
                out = out + h[:, k:k + 1] * rows[k]
            return out

        rmul = lambda h: _hmat(h, whr_rows)
        zmul = lambda h: _hmat(h, whz_rows)
        nmul = lambda h: _hmat(h, whn_rows)
    else:
        whr, whz, whn = whr_ref[...], whz_ref[...], whn_ref[...]
        rmul = lambda h: jnp.dot(h, whr, preferred_element_type=jnp.float32)
        zmul = lambda h: jnp.dot(h, whz, preferred_element_type=jnp.float32)
        nmul = lambda h: jnp.dot(h, whn, preferred_element_type=jnp.float32)

    def step(t, carry):
        h, acc = carry
        row = pl.multiple_of(t * TB, TB)
        gxr = gr_ref[pl.ds(row, TB), :]
        gxz = gz_ref[pl.ds(row, TB), :]
        gxn = gn_ref[pl.ds(row, TB), :]

        r = jax.nn.sigmoid(gxr + rmul(h))
        z = jax.nn.sigmoid(gxz + zmul(h))
        n = jnp.tanh(gxn + r * (nmul(h) + bhn))
        h_new = (1.0 - z) * n + z * h                       # (TB, H)

        # Fused final Linear: flatten(h_seq) @ W_fc.T == sum_t h_t @ wfc[t]
        # (off the h critical path; done on the VPU so the loop has zero MXU issues).
        wt = wfc_ref[t]                                     # (H, C)
        if use_vpu:
            for k in range(H):
                acc = acc + h_new[:, k:k + 1] * wt[k:k + 1, :]
        else:
            acc = acc + jnp.dot(h_new, wt, preferred_element_type=jnp.float32)
        return h_new, acc

    h0 = jnp.zeros((TB, H), jnp.float32)
    acc0 = jnp.zeros((TB, C), jnp.float32)
    _, acc = lax.fori_loop(0, T, step, (h0, acc0), unroll=True)

    # Dropout(0.5) is identity in eval mode.
    o_ref[...] = acc + bfc


def gru_forward(x, weight_ih, weight_hh, bias_ih, bias_hh, fc_weight, fc_bias):
    """Forward pass matching the PyTorch module (single-layer GRU, eval-mode dropout).

    x:          (B, T, In) float32, batch_first
    weight_ih:  (3H, In)   PyTorch layout, gate order [r, z, n]
    weight_hh:  (3H, H)
    bias_ih:    (3H,)
    bias_hh:    (3H,)
    fc_weight:  (C, T*H)
    fc_bias:    (C,)
    """
    x = x.astype(jnp.float32)
    B, T, In = x.shape
    H = weight_hh.shape[1]
    C = fc_weight.shape[0]

    LANE, SUB = 128, 8
    C_pad = _round_up(C, LANE)           # lane-dense output, sliced back below

    # Batch tiling: pad to a sublane multiple; use >= 2 tiles when the batch allows so
    # both v7x TensorCores get work; pad B up to a multiple of the tile so cdiv-grids
    # never drop rows at large batch.
    B_pad = max(_round_up(B, SUB), SUB)
    if B_pad >= 2 * SUB:
        n_tiles = max(2, pl.cdiv(B_pad, 256))
        TB = _round_up(pl.cdiv(B_pad, n_tiles), SUB)
    else:
        TB = B_pad
    n_tiles = pl.cdiv(B_pad, TB)
    B_pad = n_tiles * TB

    # ---- per-gate weights, (in, out) layout; input-side gates fused into one matrix ----
    w_ir, w_iz, w_in_ = jnp.split(weight_ih.astype(jnp.float32), 3, axis=0)
    w_hr, w_hz, w_hn = jnp.split(weight_hh.astype(jnp.float32), 3, axis=0)
    b_ir, b_iz, b_in_ = jnp.split(bias_ih.astype(jnp.float32), 3)
    b_hr, b_hz, b_hn = jnp.split(bias_hh.astype(jnp.float32), 3)

    wx = jnp.concatenate([w_ir.T, w_iz.T, w_in_.T], axis=1)               # (In, 3H)
    bx = jnp.concatenate([b_ir + b_hr, b_iz + b_hz, b_in_]).reshape(1, 3 * H)
    whr, whz, whn = w_hr.T, w_hz.T, w_hn.T                                # (H, H)
    bhn = b_hn.reshape(1, H)

    # fc weight reshaped to (T, H, C_pad), zero-padded classes.
    wfc = fc_weight.astype(jnp.float32).T.reshape(T, H, C)
    wfc = jnp.pad(wfc, ((0, 0), (0, 0), (0, C_pad - C)))
    bfc = jnp.pad(fc_bias.astype(jnp.float32), (0, C_pad - C)).reshape(1, C_pad)

    # x: pad batch to the tile multiple, time-major so the kernel collapses (T, TB) rows.
    x_pad = jnp.pad(x, ((0, B_pad - B), (0, 0), (0, 0)))
    x_tbf = jnp.transpose(x_pad, (1, 0, 2))                               # (T, B_pad, In)

    fixed2 = lambda i: (0, 0)
    fixed3 = lambda i: (0, 0, 0)
    in_specs = [
        pl.BlockSpec((T, TB, In), lambda i: (0, i, 0)),   # x (batch-tiled)
        pl.BlockSpec((In, 3 * H), fixed2),                # wx (fused input-gate weights)
        pl.BlockSpec((1, 3 * H), fixed2),                 # bx (fused input-gate biases)
        pl.BlockSpec((H, H), fixed2),                     # whr
        pl.BlockSpec((H, H), fixed2),                     # whz
        pl.BlockSpec((H, H), fixed2),                     # whn
        pl.BlockSpec((1, H), fixed2),                     # bhn
        pl.BlockSpec((T, H, C_pad), fixed3),              # wfc
        pl.BlockSpec((1, C_pad), fixed2),                 # bfc
    ]
    out_specs = pl.BlockSpec((TB, C_pad), lambda i: (i, 0))

    flops = 2 * B_pad * T * (3 * In * H + 3 * H * H + H * C_pad)
    transcendentals = 3 * B_pad * T * H
    bytes_accessed = 4 * (x_tbf.size + In * 3 * H + 3 * H * H + 4 * H
                          + T * H * C_pad + C_pad + B_pad * C_pad)

    out_pad = pl.pallas_call(
        gru_fc_kernel,
        out_shape=jax.ShapeDtypeStruct((B_pad, C_pad), jnp.float32),
        grid=(n_tiles,),
        in_specs=in_specs,
        out_specs=out_specs,
        scratch_shapes=[pltpu.VMEM((T * TB, H), jnp.float32),   # gr precompute
                        pltpu.VMEM((T * TB, H), jnp.float32),   # gz precompute
                        pltpu.VMEM((T * TB, H), jnp.float32)],  # gn precompute
        compiler_params=pltpu.CompilerParams(
            dimension_semantics=("parallel",)),
        cost_estimate=pl.CostEstimate(
            flops=flops,
            transcendentals=transcendentals,
            bytes_accessed=bytes_accessed),
    )(x_tbf, wx, bx, whr, whz, whn, bhn, wfc, bfc)

    return out_pad[:B, :C]


def init_params(key, input_size=28, hidden_size=2, seq_len=28, num_classes=10):
    """Deterministic init mimicking PyTorch nn.GRU / nn.Linear uniform init."""
    k = jax.random.split(key, 6)
    s_gru = 1.0 / jnp.sqrt(hidden_size)
    s_fc = 1.0 / jnp.sqrt(seq_len * hidden_size)
    weight_ih = jax.random.uniform(k[0], (3 * hidden_size, input_size), jnp.float32, -s_gru, s_gru)
    weight_hh = jax.random.uniform(k[1], (3 * hidden_size, hidden_size), jnp.float32, -s_gru, s_gru)
    bias_ih = jax.random.uniform(k[2], (3 * hidden_size,), jnp.float32, -s_gru, s_gru)
    bias_hh = jax.random.uniform(k[3], (3 * hidden_size,), jnp.float32, -s_gru, s_gru)
    fc_weight = jax.random.uniform(k[4], (num_classes, seq_len * hidden_size), jnp.float32, -s_fc, s_fc)
    fc_bias = jax.random.uniform(k[5], (num_classes,), jnp.float32, -s_fc, s_fc)
    return weight_ih, weight_hh, bias_ih, bias_hh, fc_weight, fc_bias


def gru_reference(x, weight_ih, weight_hh, bias_ih, bias_hh, fc_weight, fc_bias):
    """Plain-JAX reference with PyTorch GRU semantics (eval-mode dropout)."""
    B, T, _ = x.shape
    H = weight_hh.shape[1]
    h = jnp.zeros((B, H), jnp.float32)
    outs = []
    for t in range(T):
        xt = x[:, t, :]
        gi = xt @ weight_ih.T + bias_ih          # (B, 3H)
        gh = h @ weight_hh.T + bias_hh           # (B, 3H)
        i_r, i_z, i_n = jnp.split(gi, 3, axis=1)
        h_r, h_z, h_n = jnp.split(gh, 3, axis=1)
        r = jax.nn.sigmoid(i_r + h_r)
        z = jax.nn.sigmoid(i_z + h_z)
        n = jnp.tanh(i_n + r * h_n)
        h = (1.0 - z) * n + z * h
        outs.append(h)
    seq = jnp.stack(outs, axis=1)                # (B, T, H)
    flat = seq.reshape(B, T * H)
    return flat @ fc_weight.T + fc_bias


if __name__ == "__main__":
    key = jax.random.PRNGKey(0)
    kx, kp = jax.random.split(key)

    B, T, In, H, C = 2, 28, 28, 2, 10            # module defaults: hidden=2, seq=28, classes=10
    x = jax.random.normal(kx, (B, T, In), jnp.float32)
    params = init_params(kp, input_size=In, hidden_size=H, seq_len=T, num_classes=C)

    out = gru_forward(x, *params)
    out = jax.block_until_ready(out)

    ref = gru_reference(x, *params)
    assert out.shape == (B, C), out.shape
    assert jnp.allclose(out, ref, atol=2e-4, rtol=2e-4), float(jnp.max(jnp.abs(out - ref)))

    print("KERNEL_OK")
</pallas_src>

<mosaic_0001>
module attributes {stable_mosaic.version = 11 : i64} {
  func.func @gru_fc_kernel(%arg0: i32, %arg1: memref<28x8x28xf32, #tpu.memory_space<vmem>>, %arg2: memref<28x6xf32, #tpu.memory_space<vmem>>, %arg3: memref<1x6xf32, #tpu.memory_space<vmem>>, %arg4: memref<2x2xf32, #tpu.memory_space<vmem>>, %arg5: memref<2x2xf32, #tpu.memory_space<vmem>>, %arg6: memref<2x2xf32, #tpu.memory_space<vmem>>, %arg7: memref<1x2xf32, #tpu.memory_space<vmem>>, %arg8: memref<28x2x128xf32, #tpu.memory_space<vmem>>, %arg9: memref<1x128xf32, #tpu.memory_space<vmem>>, %arg10: memref<8x128xf32, #tpu.memory_space<vmem>>, %arg11: memref<224x2xf32, #tpu.memory_space<vmem>>, %arg12: memref<224x2xf32, #tpu.memory_space<vmem>>, %arg13: memref<224x2xf32, #tpu.memory_space<vmem>>) attributes {dimension_semantics = [#tpu.dimension_semantics<parallel>], iteration_bounds = array<i64: 1>, scalar_prefetch = 0 : i64, scratch_operands = 3 : i64, tpu.core_type = #tpu.core_type<tc>, window_params = [{transform_indices = @transform_0, window_bounds = array<i64: 28, 8, 28>}, {pipeline_mode = #tpu.pipeline_mode<synchronous>, transform_indices = @transform_1, window_bounds = array<i64: 28, 6>}, {pipeline_mode = #tpu.pipeline_mode<synchronous>, transform_indices = @transform_2, window_bounds = array<i64: 1, 6>}, {pipeline_mode = #tpu.pipeline_mode<synchronous>, transform_indices = @transform_3, window_bounds = array<i64: 2, 2>}, {pipeline_mode = #tpu.pipeline_mode<synchronous>, transform_indices = @transform_4, window_bounds = array<i64: 2, 2>}, {pipeline_mode = #tpu.pipeline_mode<synchronous>, transform_indices = @transform_5, window_bounds = array<i64: 2, 2>}, {pipeline_mode = #tpu.pipeline_mode<synchronous>, transform_indices = @transform_6, window_bounds = array<i64: 1, 2>}, {pipeline_mode = #tpu.pipeline_mode<synchronous>, transform_indices = @transform_7, window_bounds = array<i64: 28, 2, 128>}, {pipeline_mode = #tpu.pipeline_mode<synchronous>, transform_indices = @transform_8, window_bounds = array<i64: 1, 128>}, {transform_indices = @transform_9, window_bounds = array<i64: 8, 128>}]} {
    %c0 = arith.constant 0 : index
    %c0_0 = arith.constant 0 : index
    %c0_1 = arith.constant 0 : index
    %0 = vector.load %arg1[%c0, %c0_0, %c0_1] : memref<28x8x28xf32, #tpu.memory_space<vmem>>, vector<28x8x28xf32>
    %1 = vector.shape_cast %0 : vector<28x8x28xf32> to vector<224x28xf32>
    %c0_2 = arith.constant 0 : index
    %c0_3 = arith.constant 0 : index
    %2 = vector.load %arg2[%c0_2, %c0_3] : memref<28x6xf32, #tpu.memory_space<vmem>>, vector<28x6xf32>
    %cst = arith.constant dense<0.000000e+00> : vector<224x6xf32>
    %3 = tpu.matmul %1, %2, %cst {dimension_numbers = #tpu.dot_dimension_numbers<[1], [0], [0], [1], [0, 0, 1, 1], [], []>} : vector<224x28xf32>, vector<28x6xf32>, vector<224x6xf32> -> vector<224x6xf32>
    %c0_4 = arith.constant 0 : index
    %c0_5 = arith.constant 0 : index
    %4 = vector.load %arg3[%c0_4, %c0_5] : memref<1x6xf32, #tpu.memory_space<vmem>>, vector<1x6xf32>
    %5 = vector.shape_cast %4 : vector<1x6xf32> to vector<1x6xf32>
    %6 = vector.broadcast %5 : vector<1x6xf32> to vector<224x6xf32>
    %7 = arith.addf %3, %6 : vector<224x6xf32>
    %8 = vector.extract_strided_slice %7 {offsets = [0, 0], sizes = [224, 2], strides = [1, 1]} : vector<224x6xf32> to vector<224x2xf32>
    %c0_6 = arith.constant 0 : index
    %c0_7 = arith.constant 0 : index
    %9 = vector.load %arg11[%c0_6, %c0_7] : memref<224x2xf32, #tpu.memory_space<vmem>>, vector<224x2xf32>
    tpu.vector_store %arg11[%c0_6, %c0_7], %8 {strides = array<i32>} : memref<224x2xf32, #tpu.memory_space<vmem>>, vector<224x2xf32>,
    %10 = vector.extract_strided_slice %7 {offsets = [0, 2], sizes = [224, 2], strides = [1, 1]} : vector<224x6xf32> to vector<224x2xf32>
    %c0_8 = arith.constant 0 : index
    %c0_9 = arith.constant 0 : index
    %11 = vector.load %arg12[%c0_8, %c0_9] : memref<224x2xf32, #tpu.memory_space<vmem>>, vector<224x2xf32>
    tpu.vector_store %arg12[%c0_8, %c0_9], %10 {strides = array<i32>} : memref<224x2xf32, #tpu.memory_space<vmem>>, vector<224x2xf32>,
    %12 = vector.extract_strided_slice %7 {offsets = [0, 4], sizes = [224, 2], strides = [1, 1]} : vector<224x6xf32> to vector<224x2xf32>
    %c0_10 = arith.constant 0 : index
    %c0_11 = arith.constant 0 : index
    %13 = vector.load %arg13[%c0_10, %c0_11] : memref<224x2xf32, #tpu.memory_space<vmem>>, vector<224x2xf32>
    tpu.vector_store %arg13[%c0_10, %c0_11], %12 {strides = array<i32>} : memref<224x2xf32, #tpu.memory_space<vmem>>, vector<224x2xf32>,
    %c0_12 = arith.constant 0 : index
    %c0_13 = arith.constant 0 : index
    %14 = vector.load %arg7[%c0_12, %c0_13] : memref<1x2xf32, #tpu.memory_space<vmem>>, vector<1x2xf32>
    %15 = vector.shape_cast %14 : vector<1x2xf32> to vector<1x2xf32>
    %16 = vector.broadcast %15 : vector<1x2xf32> to vector<8x2xf32>
    %c0_14 = arith.constant 0 : index
    %c0_15 = arith.constant 0 : index
    %17 = vector.load %arg9[%c0_14, %c0_15] : memref<1x128xf32, #tpu.memory_space<vmem>>, vector<1x128xf32>
    %18 = vector.shape_cast %17 : vector<1x128xf32> to vector<1x128xf32>
    %19 = vector.broadcast %18 : vector<1x128xf32> to vector<8x128xf32>
    %c0_16 = arith.constant 0 : index
    %c0_17 = arith.constant 0 : index
    %20 = vector.load %arg4[%c0_16, %c0_17] : memref<2x2xf32, #tpu.memory_space<vmem>>, vector<1x2xf32>
    %21 = vector.shape_cast %20 : vector<1x2xf32> to vector<1x2xf32>
    %22 = vector.broadcast %21 : vector<1x2xf32> to vector<8x2xf32>
    %c1 = arith.constant 1 : index
    %c0_18 = arith.constant 0 : index
    %23 = vector.load %arg4[%c1, %c0_18] : memref<2x2xf32, #tpu.memory_space<vmem>>, vector<1x2xf32>
    %24 = vector.shape_cast %23 : vector<1x2xf32> to vector<1x2xf32>
    %25 = vector.broadcast %24 : vector<1x2xf32> to vector<8x2xf32>
    %c0_19 = arith.constant 0 : index
    %c0_20 = arith.constant 0 : index
    %26 = vector.load %arg5[%c0_19, %c0_20] : memref<2x2xf32, #tpu.memory_space<vmem>>, vector<1x2xf32>
    %27 = vector.shape_cast %26 : vector<1x2xf32> to vector<1x2xf32>
    %28 = vector.broadcast %27 : vector<1x2xf32> to vector<8x2xf32>
    %c1_21 = arith.constant 1 : index
    %c0_22 = arith.constant 0 : index
    %29 = vector.load %arg5[%c1_21, %c0_22] : memref<2x2xf32, #tpu.memory_space<vmem>>, vector<1x2xf32>
    %30 = vector.shape_cast %29 : vector<1x2xf32> to vector<1x2xf32>
    %31 = vector.broadcast %30 : vector<1x2xf32> to vector<8x2xf32>
    %c0_23 = arith.constant 0 : index
    %c0_24 = arith.constant 0 : index
    %32 = vector.load %arg6[%c0_23, %c0_24] : memref<2x2xf32, #tpu.memory_space<vmem>>, vector<1x2xf32>
    %33 = vector.shape_cast %32 : vector<1x2xf32> to vector<1x2xf32>
    %34 = vector.broadcast %33 : vector<1x2xf32> to vector<8x2xf32>
    %c1_25 = arith.constant 1 : index
    %c0_26 = arith.constant 0 : index
    %35 = vector.load %arg6[%c1_25, %c0_26] : memref<2x2xf32, #tpu.memory_space<vmem>>, vector<1x2xf32>
    %36 = vector.shape_cast %35 : vector<1x2xf32> to vector<1x2xf32>
    %37 = vector.broadcast %36 : vector<1x2xf32> to vector<8x2xf32>
    %cst_27 = arith.constant 0.000000e+00 : f32
    %38 = vector.broadcast %cst_27 : f32 to vector<8x2xf32>
    %cst_28 = arith.constant 0.000000e+00 : f32
    %39 = vector.broadcast %cst_28 : f32 to vector<8x128xf32>
    %c0_i32 = arith.constant 0 : i32
    %c8_i32 = arith.constant 8 : i32
    %40 = arith.muli %c0_i32, %c8_i32 : i32
    %41 = tpu.assume_multiple %40, 8 : i32
    %42 = arith.index_cast %41 : i32 to index
    %c0_29 = arith.constant 0 : index
    %43 = vector.load %arg11[%42, %c0_29] : memref<224x2xf32, #tpu.memory_space<vmem>>, vector<8x2xf32>
    %44 = arith.index_cast %41 : i32 to index
    %c0_30 = arith.constant 0 : index
    %45 = vector.load %arg12[%44, %c0_30] : memref<224x2xf32, #tpu.memory_space<vmem>>, vector<8x2xf32>
    %46 = arith.index_cast %41 : i32 to index
    %c0_31 = arith.constant 0 : index
    %47 = vector.load %arg13[%46, %c0_31] : memref<224x2xf32, #tpu.memory_space<vmem>>, vector<8x2xf32>
    %48 = vector.extract_strided_slice %38 {offsets = [0, 0], sizes = [8, 1], strides = [1, 1]} : vector<8x2xf32> to vector<8x1xf32>
    %49 = vector.broadcast %48 : vector<8x1xf32> to vector<8x2xf32>
    %50 = arith.mulf %49, %22 : vector<8x2xf32>
    %51 = vector.extract_strided_slice %38 {offsets = [0, 1], sizes = [8, 1], strides = [1, 1]} : vector<8x2xf32> to vector<8x1xf32>
    %52 = vector.broadcast %51 : vector<8x1xf32> to vector<8x2xf32>
    %53 = arith.mulf %52, %25 : vector<8x2xf32>
    %54 = arith.addf %50, %53 : vector<8x2xf32>
    %55 = arith.addf %43, %54 : vector<8x2xf32>
    %56 = arith.negf %55 : vector<8x2xf32>
    %57 = math.exp %56 : vector<8x2xf32>
    %cst_32 = arith.constant 1.000000e+00 : f32
    %58 = vector.broadcast %cst_32 : f32 to vector<8x2xf32>
    %59 = arith.addf %58, %57 : vector<8x2xf32>
    %60 = arith.divf %58, %59 : vector<8x2xf32>
    %61 = vector.extract_strided_slice %38 {offsets = [0, 0], sizes = [8, 1], strides = [1, 1]} : vector<8x2xf32> to vector<8x1xf32>
    %62 = vector.broadcast %61 : vector<8x1xf32> to vector<8x2xf32>
    %63 = arith.mulf %62, %28 : vector<8x2xf32>
    %64 = vector.extract_strided_slice %38 {offsets = [0, 1], sizes = [8, 1], strides = [1, 1]} : vector<8x2xf32> to vector<8x1xf32>
    %65 = vector.broadcast %64 : vector<8x1xf32> to vector<8x2xf32>
    %66 = arith.mulf %65, %31 : vector<8x2xf32>
    %67 = arith.addf %63, %66 : vector<8x2xf32>
    %68 = arith.addf %45, %67 : vector<8x2xf32>
    %69 = arith.negf %68 : vector<8x2xf32>
    %70 = math.exp %69 : vector<8x2xf32>
    %cst_33 = arith.constant 1.000000e+00 : f32
    %71 = vector.broadcast %cst_33 : f32 to vector<8x2xf32>
    %72 = arith.addf %71, %70 : vector<8x2xf32>
    %73 = arith.divf %71, %72 : vector<8x2xf32>
    %74 = vector.extract_strided_slice %38 {offsets = [0, 0], sizes = [8, 1], strides = [1, 1]} : vector<8x2xf32> to vector<8x1xf32>
    %75 = vector.broadcast %74 : vector<8x1xf32> to vector<8x2xf32>
    %76 = arith.mulf %75, %34 : vector<8x2xf32>
    %77 = vector.extract_strided_slice %38 {offsets = [0, 1], sizes = [8, 1], strides = [1, 1]} : vector<8x2xf32> to vector<8x1xf32>
    %78 = vector.broadcast %77 : vector<8x1xf32> to vector<8x2xf32>
    %79 = arith.mulf %78, %37 : vector<8x2xf32>
    %80 = arith.addf %76, %79 : vector<8x2xf32>
    %81 = arith.addf %80, %16 : vector<8x2xf32>
    %82 = arith.mulf %60, %81 : vector<8x2xf32>
    %83 = arith.addf %47, %82 : vector<8x2xf32>
    %84 = math.tanh %83 : vector<8x2xf32>
    %cst_34 = arith.constant 1.000000e+00 : f32
    %85 = vector.broadcast %cst_34 : f32 to vector<8x2xf32>
    %86 = arith.subf %85, %73 : vector<8x2xf32>
    %87 = arith.mulf %86, %84 : vector<8x2xf32>
    %88 = arith.mulf %73, %38 : vector<8x2xf32>
    %89 = arith.addf %87, %88 : vector<8x2xf32>
    %90 = arith.index_cast %c0_i32 : i32 to index
    %c0_35 = arith.constant 0 : index
    %c0_36 = arith.constant 0 : index
    %91 = vector.load %arg8[%90, %c0_35, %c0_36] : memref<28x2x128xf32, #tpu.memory_space<vmem>>, vector<1x2x128xf32>
    %92 = vector.shape_cast %91 : vector<1x2x128xf32> to vector<2x128xf32>
    %93 = vector.extract_strided_slice %89 {offsets = [0, 0], sizes = [8, 1], strides = [1, 1]} : vector<8x2xf32> to vector<8x1xf32>
    %94 = vector.extract_strided_slice %92 {offsets = [0, 0], sizes = [1, 128], strides = [1, 1]} : vector<2x128xf32> to vector<1x128xf32>
    %95 = vector.broadcast %93 : vector<8x1xf32> to vector<8x128xf32>
    %96 = vector.broadcast %94 : vector<1x128xf32> to vector<8x128xf32>
    %97 = arith.mulf %95, %96 : vector<8x128xf32>
    %98 = arith.addf %39, %97 : vector<8x128xf32>
    %99 = vector.extract_strided_slice %89 {offsets = [0, 1], sizes = [8, 1], strides = [1, 1]} : vector<8x2xf32> to vector<8x1xf32>
    %100 = vector.extract_strided_slice %92 {offsets = [1, 0], sizes = [1, 128], strides = [1, 1]} : vector<2x128xf32> to vector<1x128xf32>
    %101 = vector.broadcast %99 : vector<8x1xf32> to vector<8x128xf32>
    %102 = vector.broadcast %100 : vector<1x128xf32> to vector<8x128xf32>
    %103 = arith.mulf %101, %102 : vector<8x128xf32>
    %104 = arith.addf %98, %103 : vector<8x128xf32>
    %c1_i32 = arith.constant 1 : i32
    %c8_i32_37 = arith.constant 8 : i32
    %105 = arith.muli %c1_i32, %c8_i32_37 : i32
    %106 = tpu.assume_multiple %105, 8 : i32
    %107 = arith.index_cast %106 : i32 to index
    %c0_38 = arith.constant 0 : index
    %108 = vector.load %arg11[%107, %c0_38] : memref<224x2xf32, #tpu.memory_space<vmem>>, vector<8x2xf32>
    %109 = arith.index_cast %106 : i32 to index
    %c0_39 = arith.constant 0 : index
    %110 = vector.load %arg12[%109, %c0_39] : memref<224x2xf32, #tpu.memory_space<vmem>>, vector<8x2xf32>
    %111 = arith.index_cast %106 : i32 to index
    %c0_40 = arith.constant 0 : index
    %112 = vector.load %arg13[%111, %c0_40] : memref<224x2xf32, #tpu.memory_space<vmem>>, vector<8x2xf32>
    %113 = vector.extract_strided_slice %89 {offsets = [0, 0], sizes = [8, 1], strides = [1, 1]} : vector<8x2xf32> to vector<8x1xf32>
    %114 = vector.broadcast %113 : vector<8x1xf32> to vector<8x2xf32>
    %115 = arith.mulf %114, %22 : vector<8x2xf32>
    %116 = vector.extract_strided_slice %89 {offsets = [0, 1], sizes = [8, 1], strides = [1, 1]} : vector<8x2xf32> to vector<8x1xf32>
    %117 = vector.broadcast %116 : vector<8x1xf32> to vector<8x2xf32>
    %118 = arith.mulf %117, %25 : vector<8x2xf32>
    %119 = arith.addf %115, %118 : vector<8x2xf32>
    %120 = arith.addf %108, %119 : vector<8x2xf32>
    %121 = arith.negf %120 : vector<8x2xf32>
    %122 = math.exp %121 : vector<8x2xf32>
    %cst_41 = arith.constant 1.000000e+00 : f32
    %123 = vector.broadcast %cst_41 : f32 to vector<8x2xf32>
    %124 = arith.addf %123, %122 : vector<8x2xf32>
    %125 = arith.divf %123, %124 : vector<8x2xf32>
    %126 = vector.extract_strided_slice %89 {offsets = [0, 0], sizes = [8, 1], strides = [1, 1]} : vector<8x2xf32> to vector<8x1xf32>
    %127 = vector.broadcast %126 : vector<8x1xf32> to vector<8x2xf32>
    %128 = arith.mulf %127, %28 : vector<8x2xf32>
    %129 = vector.extract_strided_slice %89 {offsets = [0, 1], sizes = [8, 1], strides = [1, 1]} : vector<8x2xf32> to vector<8x1xf32>
    %130 = vector.broadcast %129 : vector<8x1xf32> to vector<8x2xf32>
    %131 = arith.mulf %130, %31 : vector<8x2xf32>
    %132 = arith.addf %128, %131 : vector<8x2xf32>
    %133 = arith.addf %110, %132 : vector<8x2xf32>
    %134 = arith.negf %133 : vector<8x2xf32>
    %135 = math.exp %134 : vector<8x2xf32>
    %cst_42 = arith.constant 1.000000e+00 : f32
    %136 = vector.broadcast %cst_42 : f32 to vector<8x2xf32>
    %137 = arith.addf %136, %135 : vector<8x2xf32>
    %138 = arith.divf %136, %137 : vector<8x2xf32>
    %139 = vector.extract_strided_slice %89 {offsets = [0, 0], sizes = [8, 1], strides = [1, 1]} : vector<8x2xf32> to vector<8x1xf32>
    %140 = vector.broadcast %139 : vector<8x1xf32> to vector<8x2xf32>
    %141 = arith.mulf %140, %34 : vector<8x2xf32>
    %142 = vector.extract_strided_slice %89 {offsets = [0, 1], sizes = [8, 1], strides = [1, 1]} : vector<8x2xf32> to vector<8x1xf32>
    %143 = vector.broadcast %142 : vector<8x1xf32> to vector<8x2xf32>
    %144 = arith.mulf %143, %37 : vector<8x2xf32>
    %145 = arith.addf %141, %144 : vector<8x2xf32>
    %146 = arith.addf %145, %16 : vector<8x2xf32>
    %147 = arith.mulf %125, %146 : vector<8x2xf32>
    %148 = arith.addf %112, %147 : vector<8x2xf32>
    %149 = math.tanh %148 : vector<8x2xf32>
    %cst_43 = arith.constant 1.000000e+00 : f32
    %150 = vector.broadcast %cst_43 : f32 to vector<8x2xf32>
    %151 = arith.subf %150, %138 : vector<8x2xf32>
    %152 = arith.mulf %151, %149 : vector<8x2xf32>
    %153 = arith.mulf %138, %89 : vector<8x2xf32>
    %154 = arith.addf %152, %153 : vector<8x2xf32>
    %155 = arith.index_cast %c1_i32 : i32 to index
    %c0_44 = arith.constant 0 : index
    %c0_45 = arith.constant 0 : index
    %156 = vector.load %arg8[%155, %c0_44, %c0_45] : memref<28x2x128xf32, #tpu.memory_space<vmem>>, vector<1x2x128xf32>
    %157 = vector.shape_cast %156 : vector<1x2x128xf32> to vector<2x128xf32>
    %158 = vector.extract_strided_slice %154 {offsets = [0, 0], sizes = [8, 1], strides = [1, 1]} : vector<8x2xf32> to vector<8x1xf32>
    %159 = vector.extract_strided_slice %157 {offsets = [0, 0], sizes = [1, 128], strides = [1, 1]} : vector<2x128xf32> to vector<1x128xf32>
    %160 = vector.broadcast %158 : vector<8x1xf32> to vector<8x128xf32>
    %161 = vector.broadcast %159 : vector<1x128xf32> to vector<8x128xf32>
    %162 = arith.mulf %160, %161 : vector<8x128xf32>
    %163 = arith.addf %104, %162 : vector<8x128xf32>
    %164 = vector.extract_strided_slice %154 {offsets = [0, 1], sizes = [8, 1], strides = [1, 1]} : vector<8x2xf32> to vector<8x1xf32>
    %165 = vector.extract_strided_slice %157 {offsets = [1, 0], sizes = [1, 128], strides = [1, 1]} : vector<2x128xf32> to vector<1x128xf32>
    %166 = vector.broadcast %164 : vector<8x1xf32> to vector<8x128xf32>
    %167 = vector.broadcast %165 : vector<1x128xf32> to vector<8x128xf32>
    %168 = arith.mulf %166, %167 : vector<8x128xf32>
    %169 = arith.addf %163, %168 : vector<8x128xf32>
    %c2_i32 = arith.constant 2 : i32
    %c8_i32_46 = arith.constant 8 : i32
    %170 = arith.muli %c2_i32, %c8_i32_46 : i32
    %171 = tpu.assume_multiple %170, 8 : i32
    %172 = arith.index_cast %171 : i32 to index
    %c0_47 = arith.constant 0 : index
    %173 = vector.load %arg11[%172, %c0_47] : memref<224x2xf32, #tpu.memory_space<vmem>>, vector<8x2xf32>
    %174 = arith.index_cast %171 : i32 to index
    %c0_48 = arith.constant 0 : index
    %175 = vector.load %arg12[%174, %c0_48] : memref<224x2xf32, #tpu.memory_space<vmem>>, vector<8x2xf32>
    %176 = arith.index_cast %171 : i32 to index
    %c0_49 = arith.constant 0 : index
    %177 = vector.load %arg13[%176, %c0_49] : memref<224x2xf32, #tpu.memory_space<vmem>>, vector<8x2xf32>
    %178 = vector.extract_strided_slice %154 {offsets = [0, 0], sizes = [8, 1], strides = [1, 1]} : vector<8x2xf32> to vector<8x1xf32>
    %179 = vector.broadcast %178 : vector<8x1xf32> to vector<8x2xf32>
    %180 = arith.mulf %179, %22 : vector<8x2xf32>
    %181 = vector.extract_strided_slice %154 {offsets = [0, 1], sizes = [8, 1], strides = [1, 1]} : vector<8x2xf32> to vector<8x1xf32>
    %182 = vector.broadcast %181 : vector<8x1xf32> to vector<8x2xf32>
    %183 = arith.mulf %182, %25 : vector<8x2xf32>
    %184 = arith.addf %180, %183 : vector<8x2xf32>
    %185 = arith.addf %173, %184 : vector<8x2xf32>
    %186 = arith.negf %185 : vector<8x2xf32>
    %187 = math.exp %186 : vector<8x2xf32>
    %cst_50 = arith.constant 1.000000e+00 : f32
    %188 = vector.broadcast %cst_50 : f32 to vector<8x2xf32>
    %189 = arith.addf %188, %187 : vector<8x2xf32>
    %190 = arith.divf %188, %189 : vector<8x2xf32>
    %191 = vector.extract_strided_slice %154 {offsets = [0, 0], sizes = [8, 1], strides = [1, 1]} : vector<8x2xf32> to vector<8x1xf32>
    %192 = vector.broadcast %191 : vector<8x1xf32> to vector<8x2xf32>
    %193 = arith.mulf %192, %28 : vector<8x2xf32>
    %194 = vector.extract_strided_slice %154 {offsets = [0, 1], sizes = [8, 1], strides = [1, 1]} : vector<8x2xf32> to vector<8x1xf32>
    %195 = vector.broadcast %194 : vector<8x1xf32> to vector<8x2xf32>
    %196 = arith.mulf %195, %31 : vector<8x2xf32>
    %197 = arith.addf %193, %196 : vector<8x2xf32>
    %198 = arith.addf %175, %197 : vector<8x2xf32>
    %199 = arith.negf %198 : vector<8x2xf32>
    %200 = math.exp %199 : vector<8x2xf32>
    %cst_51 = arith.constant 1.000000e+00 : f32
    %201 = vector.broadcast %cst_51 : f32 to vector<8x2xf32>
    %202 = arith.addf %201, %200 : vector<8x2xf32>
    %203 = arith.divf %201, %202 : vector<8x2xf32>
    %204 = vector.extract_strided_slice %154 {offsets = [0, 0], sizes = [8, 1], strides = [1, 1]} : vector<8x2xf32> to vector<8x1xf32>
    %205 = vector.broadcast %204 : vector<8x1xf32> to vector<8x2xf32>
    %206 = arith.mulf %205, %34 : vector<8x2xf32>
    %207 = vector.extract_strided_slice %154 {offsets = [0, 1], sizes = [8, 1], strides = [1, 1]} : vector<8x2xf32> to vector<8x1xf32>
    %208 = vector.broadcast %207 : vector<8x1xf32> to vector<8x2xf32>
    %209 = arith.mulf %208, %37 : vector<8x2xf32>
    %210 = arith.addf %206, %209 : vector<8x2xf32>
    %211 = arith.addf %210, %16 : vector<8x2xf32>
    %212 = arith.mulf %190, %211 : vector<8x2xf32>
    %213 = arith.addf %177, %212 : vector<8x2xf32>
    %214 = math.tanh %213 : vector<8x2xf32>
    %cst_52 = arith.constant 1.000000e+00 : f32
    %215 = vector.broadcast %cst_52 : f32 to vector<8x2xf32>
    %216 = arith.subf %215, %203 : vector<8x2xf32>
    %217 = arith.mulf %216, %214 : vector<8x2xf32>
    %218 = arith.mulf %203, %154 : vector<8x2xf32>
    %219 = arith.addf %217, %218 : vector<8x2xf32>
    %220 = arith.index_cast %c2_i32 : i32 to index
    %c0_53 = arith.constant 0 : index
    %c0_54 = arith.constant 0 : index
    %221 = vector.load %arg8[%220, %c0_53, %c0_54] : memref<28x2x128xf32, #tpu.memory_space<vmem>>, vector<1x2x128xf32>
    %222 = vector.shape_cast %221 : vector<1x2x128xf32> to vector<2x128xf32>
    %223 = vector.extract_strided_slice %219 {offsets = [0, 0], sizes = [8, 1], strides = [1, 1]} : vector<8x2xf32> to vector<8x1xf32>
    %224 = vector.extract_strided_slice %222 {offsets = [0, 0], sizes = [1, 128], strides = [1, 1]} : vector<2x128xf32> to vector<1x128xf32>
    %225 = vector.broadcast %223 : vector<8x1xf32> to vector<8x128xf32>
    %226 = vector.broadcast %224 : vector<1x128xf32> to vector<8x128xf32>
    %227 = arith.mulf %225, %226 : vector<8x128xf32>
    %228 = arith.addf %169, %227 : vector<8x128xf32>
    %229 = vector.extract_strided_slice %219 {offsets = [0, 1], sizes = [8, 1], strides = [1, 1]} : vector<8x2xf32> to vector<8x1xf32>
    %230 = vector.extract_strided_slice %222 {offsets = [1, 0], sizes = [1, 128], strides = [1, 1]} : vector<2x128xf32> to vector<1x128xf32>
    %231 = vector.broadcast %229 : vector<8x1xf32> to vector<8x128xf32>
    %232 = vector.broadcast %230 : vector<1x128xf32> to vector<8x128xf32>
    %233 = arith.mulf %231, %232 : vector<8x128xf32>
    %234 = arith.addf %228, %233 : vector<8x128xf32>
    %c3_i32 = arith.constant 3 : i32
    %c8_i32_55 = arith.constant 8 : i32
    %235 = arith.muli %c3_i32, %c8_i32_55 : i32
    %236 = tpu.assume_multiple %235, 8 : i32
    %237 = arith.index_cast %236 : i32 to index
    %c0_56 = arith.constant 0 : index
    %238 = vector.load %arg11[%237, %c0_56] : memref<224x2xf32, #tpu.memory_space<vmem>>, vector<8x2xf32>
    %239 = arith.index_cast %236 : i32 to index
    %c0_57 = arith.constant 0 : index
    %240 = vector.load %arg12[%239, %c0_57] : memref<224x2xf32, #tpu.memory_space<vmem>>, vector<8x2xf32>
    %241 = arith.index_cast %236 : i32 to index
    %c0_58 = arith.constant 0 : index
    %242 = vector.load %arg13[%241, %c0_58] : memref<224x2xf32, #tpu.memory_space<vmem>>, vector<8x2xf32>
    %243 = vector.extract_strided_slice %219 {offsets = [0, 0], sizes = [8, 1], strides = [1, 1]} : vector<8x2xf32> to vector<8x1xf32>
    %244 = vector.broadcast %243 : vector<8x1xf32> to vector<8x2xf32>
    %245 = arith.mulf %244, %22 : vector<8x2xf32>
    %246 = vector.extract_strided_slice %219 {offsets = [0, 1], sizes = [8, 1], strides = [1, 1]} : vector<8x2xf32> to vector<8x1xf32>
    %247 = vector.broadcast %246 : vector<8x1xf32> to vector<8x2xf32>
    %248 = arith.mulf %247, %25 : vector<8x2xf32>
    %249 = arith.addf %245, %248 : vector<8x2xf32>
    %250 = arith.addf %238, %249 : vector<8x2xf32>
    %251 = arith.negf %250 : vector<8x2xf32>
    %252 = math.exp %251 : vector<8x2xf32>
    %cst_59 = arith.constant 1.000000e+00 : f32
    %253 = vector.broadcast %cst_59 : f32 to vector<8x2xf32>
    %254 = arith.addf %253, %252 : vector<8x2xf32>
    %255 = arith.divf %253, %254 : vector<8x2xf32>
    %256 = vector.extract_strided_slice %219 {offsets = [0, 0], sizes = [8, 1], strides = [1, 1]} : vector<8x2xf32> to vector<8x1xf32>
    %257 = vector.broadcast %256 : vector<8x1xf32> to vector<8x2xf32>
    %258 = arith.mulf %257, %28 : vector<8x2xf32>
    %259 = vector.extract_strided_slice %219 {offsets = [0, 1], sizes = [8, 1], strides = [1, 1]} : vector<8x2xf32> to vector<8x1xf32>
    %260 = vector.broadcast %259 : vector<8x1xf32> to vector<8x2xf32>
    %261 = arith.mulf %260, %31 : vector<8x2xf32>
    %262 = arith.addf %258, %261 : vector<8x2xf32>
    %263 = arith.addf %240, %262 : vector<8x2xf32>
    %264 = arith.negf %263 : vector<8x2xf32>
    %265 = math.exp %264 : vector<8x2xf32>
    %cst_60 = arith.constant 1.000000e+00 : f32
    %266 = vector.broadcast %cst_60 : f32 to vector<8x2xf32>
    %267 = arith.addf %266, %265 : vector<8x2xf32>
    %268 = arith.divf %266, %267 : vector<8x2xf32>
    %269 = vector.extract_strided_slice %219 {offsets = [0, 0], sizes = [8, 1], strides = [1, 1]} : vector<8x2xf32> to vector<8x1xf32>
    %270 = vector.broadcast %269 : vector<8x1xf32> to vector<8x2xf32>
    %271 = arith.mulf %270, %34 : vector<8x2xf32>
    %272 = vector.extract_strided_slice %219 {offsets = [0, 1], sizes = [8, 1], strides = [1, 1]} : vector<8x2xf32> to vector<8x1xf32>
    %273 = vector.broadcast %272 : vector<8x1xf32> to vector<8x2xf32>
    %274 = arith.mulf %273, %37 : vector<8x2xf32>
    %275 = arith.addf %271, %274 : vector<8x2xf32>
    %276 = arith.addf %275, %16 : vector<8x2xf32>
    %277 = arith.mulf %255, %276 : vector<8x2xf32>
    %278 = arith.addf %242, %277 : vector<8x2xf32>
    %279 = math.tanh %278 : vector<8x2xf32>
    %cst_61 = arith.constant 1.000000e+00 : f32
    %280 = vector.broadcast %cst_61 : f32 to vector<8x2xf32>
    %281 = arith.subf %280, %268 : vector<8x2xf32>
    %282 = arith.mulf %281, %279 : vector<8x2xf32>
    %283 = arith.mulf %268, %219 : vector<8x2xf32>
    %284 = arith.addf %282, %283 : vector<8x2xf32>
    %285 = arith.index_cast %c3_i32 : i32 to index
    %c0_62 = arith.constant 0 : index
    %c0_63 = arith.constant 0 : index
    %286 = vector.load %arg8[%285, %c0_62, %c0_63] : memref<28x2x128xf32, #tpu.memory_space<vmem>>, vector<1x2x128xf32>
    %287 = vector.shape_cast %286 : vector<1x2x128xf32> to vector<2x128xf32>
    %288 = vector.extract_strided_slice %284 {offsets = [0, 0], sizes = [8, 1], strides = [1, 1]} : vector<8x2xf32> to vector<8x1xf32>
    %289 = vector.extract_strided_slice %287 {offsets = [0, 0], sizes = [1, 128], strides = [1, 1]} : vector<2x128xf32> to vector<1x128xf32>
    %290 = vector.broadcast %288 : vector<8x1xf32> to vector<8x128xf32>
    %291 = vector.broadcast %289 : vector<1x128xf32> to vector<8x128xf32>
    %292 = arith.mulf %290, %291 : vector<8x128xf32>
    %293 = arith.addf %234, %292 : vector<8x128xf32>
    %294 = vector.extract_strided_slice %284 {offsets = [0, 1], sizes = [8, 1], strides = [1, 1]} : vector<8x2xf32> to vector<8x1xf32>
    %295 = vector.extract_strided_slice %287 {offsets = [1, 0], sizes = [1, 128], strides = [1, 1]} : vector<2x128xf32> to vector<1x128xf32>
    %296 = vector.broadcast %294 : vector<8x1xf32> to vector<8x128xf32>
    %297 = vector.broadcast %295 : vector<1x128xf32> to vector<8x128xf32>
    %298 = arith.mulf %296, %297 : vector<8x128xf32>
    %299 = arith.addf %293, %298 : vector<8x128xf32>
    %c4_i32 = arith.constant 4 : i32
    %c8_i32_64 = arith.constant 8 : i32
    %300 = arith.muli %c4_i32, %c8_i32_64 : i32
    %301 = tpu.assume_multiple %300, 8 : i32
    %302 = arith.index_cast %301 : i32 to index
    %c0_65 = arith.constant 0 : index
    %303 = vector.load %arg11[%302, %c0_65] : memref<224x2xf32, #tpu.memory_space<vmem>>, vector<8x2xf32>
    %304 = arith.index_cast %301 : i32 to index
    %c0_66 = arith.constant 0 : index
    %305 = vector.load %arg12[%304, %c0_66] : memref<224x2xf32, #tpu.memory_space<vmem>>, vector<8x2xf32>
    %306 = arith.index_cast %301 : i32 to index
    %c0_67 = arith.constant 0 : index
    %307 = vector.load %arg13[%306, %c0_67] : memref<224x2xf32, #tpu.memory_space<vmem>>, vector<8x2xf32>
    %308 = vector.extract_strided_slice %284 {offsets = [0, 0], sizes = [8, 1], strides = [1, 1]} : vector<8x2xf32> to vector<8x1xf32>
    %309 = vector.broadcast %308 : vector<8x1xf32> to vector<8x2xf32>
    %310 = arith.mulf %309, %22 : vector<8x2xf32>
    %311 = vector.extract_strided_slice %284 {offsets = [0, 1], sizes = [8, 1], strides = [1, 1]} : vector<8x2xf32> to vector<8x1xf32>
    %312 = vector.broadcast %311 : vector<8x1xf32> to vector<8x2xf32>
    %313 = arith.mulf %312, %25 : vector<8x2xf32>
    %314 = arith.addf %310, %313 : vector<8x2xf32>
    %315 = arith.addf %303, %314 : vector<8x2xf32>
    %316 = arith.negf %315 : vector<8x2xf32>
    %317 = math.exp %316 : vector<8x2xf32>
    %cst_68 = arith.constant 1.000000e+00 : f32
    %318 = vector.broadcast %cst_68 : f32 to vector<8x2xf32>
    %319 = arith.addf %318, %317 : vector<8x2xf32>
    %320 = arith.divf %318, %319 : vector<8x2xf32>
    %321 = vector.extract_strided_slice %284 {offsets = [0, 0], sizes = [8, 1], strides = [1, 1]} : vector<8x2xf32> to vector<8x1xf32>
    %322 = vector.broadcast %321 : vector<8x1xf32> to vector<8x2xf32>
    %323 = arith.mulf %322, %28 : vector<8x2xf32>
    %324 = vector.extract_strided_slice %284 {offsets = [0, 1], sizes = [8, 1], strides = [1, 1]} : vector<8x2xf32> to vector<8x1xf32>
    %325 = vector.broadcast %324 : vector<8x1xf32> to vector<8x2xf32>
    %326 = arith.mulf %325, %31 : vector<8x2xf32>
    %327 = arith.addf %323, %326 : vector<8x2xf32>
    %328 = arith.addf %305, %327 : vector<8x2xf32>
    %329 = arith.negf %328 : vector<8x2xf32>
    %330 = math.exp %329 : vector<8x2xf32>
    %cst_69 = arith.constant 1.000000e+00 : f32
    %331 = vector.broadcast %cst_69 : f32 to vector<8x2xf32>
    %332 = arith.addf %331, %330 : vector<8x2xf32>
    %333 = arith.divf %331, %332 : vector<8x2xf32>
    %334 = vector.extract_strided_slice %284 {offsets = [0, 0], sizes = [8, 1], strides = [1, 1]} : vector<8x2xf32> to vector<8x1xf32>
    %335 = vector.broadcast %334 : vector<8x1xf32> to vector<8x2xf32>
    %336 = arith.mulf %335, %34 : vector<8x2xf32>
    %337 = vector.extract_strided_slice %284 {offsets = [0, 1], sizes = [8, 1], strides = [1, 1]} : vector<8x2xf32> to vector<8x1xf32>
    %338 = vector.broadcast %337 : vector<8x1xf32> to vector<8x2xf32>
    %339 = arith.mulf %338, %37 : vector<8x2xf32>
    %340 = arith.addf %336, %339 : vector<8x2xf32>
    %341 = arith.addf %340, %16 : vector<8x2xf32>
    %342 = arith.mulf %320, %341 : vector<8x2xf32>
    %343 = arith.addf %307, %342 : vector<8x2xf32>
    %344 = math.tanh %343 : vector<8x2xf32>
    %cst_70 = arith.constant 1.000000e+00 : f32
    %345 = vector.broadcast %cst_70 : f32 to vector<8x2xf32>
    %346 = arith.subf %345, %333 : vector<8x2xf32>
    %347 = arith.mulf %346, %344 : vector<8x2xf32>
    %348 = arith.mulf %333, %284 : vector<8x2xf32>
    %349 = arith.addf %347, %348 : vector<8x2xf32>
    %350 = arith.index_cast %c4_i32 : i32 to index
    %c0_71 = arith.constant 0 : index
    %c0_72 = arith.constant 0 : index
    %351 = vector.load %arg8[%350, %c0_71, %c0_72] : memref<28x2x128xf32, #tpu.memory_space<vmem>>, vector<1x2x128xf32>
    %352 = vector.shape_cast %351 : vector<1x2x128xf32> to vector<2x128xf32>
    %353 = vector.extract_strided_slice %349 {offsets = [0, 0], sizes = [8, 1], strides = [1, 1]} : vector<8x2xf32> to vector<8x1xf32>
    %354 = vector.extract_strided_slice %352 {offsets = [0, 0], sizes = [1, 128], strides = [1, 1]} : vector<2x128xf32> to vector<1x128xf32>
    %355 = vector.broadcast %353 : vector<8x1xf32> to vector<8x128xf32>
    %356 = vector.broadcast %354 : vector<1x128xf32> to vector<8x128xf32>
    %357 = arith.mulf %355, %356 : vector<8x128xf32>
    %358 = arith.addf %299, %357 : vector<8x128xf32>
    %359 = vector.extract_strided_slice %349 {offsets = [0, 1], sizes = [8, 1], strides = [1, 1]} : vector<8x2xf32> to vector<8x1xf32>
    %360 = vector.extract_strided_slice %352 {offsets = [1, 0], sizes = [1, 128], strides = [1, 1]} : vector<2x128xf32> to vector<1x128xf32>
    %361 = vector.broadcast %359 : vector<8x1xf32> to vector<8x128xf32>
    %362 = vector.broadcast %360 : vector<1x128xf32> to vector<8x128xf32>
    %363 = arith.mulf %361, %362 : vector<8x128xf32>
    %364 = arith.addf %358, %363 : vector<8x128xf32>
    %c5_i32 = arith.constant 5 : i32
    %c8_i32_73 = arith.constant 8 : i32
    %365 = arith.muli %c5_i32, %c8_i32_73 : i32
    %366 = tpu.assume_multiple %365, 8 : i32
    %367 = arith.index_cast %366 : i32 to index
    %c0_74 = arith.constant 0 : index
    %368 = vector.load %arg11[%367, %c0_74] : memref<224x2xf32, #tpu.memory_space<vmem>>, vector<8x2xf32>
    %369 = arith.index_cast %366 : i32 to index
    %c0_75 = arith.constant 0 : index
    %370 = vector.load %arg12[%369, %c0_75] : memref<224x2xf32, #tpu.memory_space<vmem>>, vector<8x2xf32>
    %371 = arith.index_cast %366 : i32 to index
    %c0_76 = arith.constant 0 : index
    %372 = vector.load %arg13[%371, %c0_76] : memref<224x2xf32, #tpu.memory_space<vmem>>, vector<8x2xf32>
    %373 = vector.extract_strided_slice %349 {offsets = [0, 0], sizes = [8, 1], strides = [1, 1]} : vector<8x2xf32> to vector<8x1xf32>
    %374 = vector.broadcast %373 : vector<8x1xf32> to vector<8x2xf32>
    %375 = arith.mulf %374, %22 : vector<8x2xf32>
    %376 = vector.extract_strided_slice %349 {offsets = [0, 1], sizes = [8, 1], strides = [1, 1]} : vector<8x2xf32> to vector<8x1xf32>
    %377 = vector.broadcast %376 : vector<8x1xf32> to vector<8x2xf32>
    %378 = arith.mulf %377, %25 : vector<8x2xf32>
    %379 = arith.addf %375, %378 : vector<8x2xf32>
    %380 = arith.addf %368, %379 : vector<8x2xf32>
    %381 = arith.negf %380 : vector<8x2xf32>
    %382 = math.exp %381 : vector<8x2xf32>
    %cst_77 = arith.constant 1.000000e+00 : f32
    %383 = vector.broadcast %cst_77 : f32 to vector<8x2xf32>
    %384 = arith.addf %383, %382 : vector<8x2xf32>
    %385 = arith.divf %383, %384 : vector<8x2xf32>
    %386 = vector.extract_strided_slice %349 {offsets = [0, 0], sizes = [8, 1], strides = [1, 1]} : vector<8x2xf32> to vector<8x1xf32>
    %387 = vector.broadcast %386 : vector<8x1xf32> to vector<8x2xf32>
    %388 = arith.mulf %387, %28 : vector<8x2xf32>
    %389 = vector.extract_strided_slice %349 {offsets = [0, 1], sizes = [8, 1], strides = [1, 1]} : vector<8x2xf32> to vector<8x1xf32>
    %390 = vector.broadcast %389 : vector<8x1xf32> to vector<8x2xf32>
    %391 = arith.mulf %390, %31 : vector<8x2xf32>
    %392 = arith.addf %388, %391 : vector<8x2xf32>
    %393 = arith.addf %370, %392 : vector<8x2xf32>
    %394 = arith.negf %393 : vector<8x2xf32>
    %395 = math.exp %394 : vector<8x2xf32>
    %cst_78 = arith.constant 1.000000e+00 : f32
    %396 = vector.broadcast %cst_78 : f32 to vector<8x2xf32>
    %397 = arith.addf %396, %395 : vector<8x2xf32>
    %398 = arith.divf %396, %397 : vector<8x2xf32>
    %399 = vector.extract_strided_slice %349 {offsets = [0, 0], sizes = [8, 1], strides = [1, 1]} : vector<8x2xf32> to vector<8x1xf32>
    %400 = vector.broadcast %399 : vector<8x1xf32> to vector<8x2xf32>
    %401 = arith.mulf %400, %34 : vector<8x2xf32>
    %402 = vector.extract_strided_slice %349 {offsets = [0, 1], sizes = [8, 1], strides = [1, 1]} : vector<8x2xf32> to vector<8x1xf32>
    %403 = vector.broadcast %402 : vector<8x1xf32> to vector<8x2xf32>
    %404 = arith.mulf %403, %37 : vector<8x2xf32>
    %405 = arith.addf %401, %404 : vector<8x2xf32>
    %406 = arith.addf %405, %16 : vector<8x2xf32>
    %407 = arith.mulf %385, %406 : vector<8x2xf32>
    %408 = arith.addf %372, %407 : vector<8x2xf32>
    %409 = math.tanh %408 : vector<8x2xf32>
    %cst_79 = arith.constant 1.000000e+00 : f32
    %410 = vector.broadcast %cst_79 : f32 to vector<8x2xf32>
    %411 = arith.subf %410, %398 : vector<8x2xf32>
    %412 = arith.mulf %411, %409 : vector<8x2xf32>
    %413 = arith.mulf %398, %349 : vector<8x2xf32>
    %414 = arith.addf %412, %413 : vector<8x2xf32>
    %415 = arith.index_cast %c5_i32 : i32 to index
    %c0_80 = arith.constant 0 : index
    %c0_81 = arith.constant 0 : index
    %416 = vector.load %arg8[%415, %c0_80, %c0_81] : memref<28x2x128xf32, #tpu.memory_space<vmem>>, vector<1x2x128xf32>
    %417 = vector.shape_cast %416 : vector<1x2x128xf32> to vector<2x128xf32>
    %418 = vector.extract_strided_slice %414 {offsets = [0, 0], sizes = [8, 1], strides = [1, 1]} : vector<8x2xf32> to vector<8x1xf32>
    %419 = vector.extract_strided_slice %417 {offsets = [0, 0], sizes = [1, 128], strides = [1, 1]} : vector<2x128xf32> to vector<1x128xf32>
    %420 = vector.broadcast %418 : vector<8x1xf32> to vector<8x128xf32>
    %421 = vector.broadcast %419 : vector<1x128xf32> to vector<8x128xf32>
    %422 = arith.mulf %420, %421 : vector<8x128xf32>
    %423 = arith.addf %364, %422 : vector<8x128xf32>
    %424 = vector.extract_strided_slice %414 {offsets = [0, 1], sizes = [8, 1], strides = [1, 1]} : vector<8x2xf32> to vector<8x1xf32>
    %425 = vector.extract_strided_slice %417 {offsets = [1, 0], sizes = [1, 128], strides = [1, 1]} : vector<2x128xf32> to vector<1x128xf32>
    %426 = vector.broadcast %424 : vector<8x1xf32> to vector<8x128xf32>
    %427 = vector.broadcast %425 : vector<1x128xf32> to vector<8x128xf32>
    %428 = arith.mulf %426, %427 : vector<8x128xf32>
    %429 = arith.addf %423, %428 : vector<8x128xf32>
    %c6_i32 = arith.constant 6 : i32
    %c8_i32_82 = arith.constant 8 : i32
    %430 = arith.muli %c6_i32, %c8_i32_82 : i32
    %431 = tpu.assume_multiple %430, 8 : i32
    %432 = arith.index_cast %431 : i32 to index
    %c0_83 = arith.constant 0 : index
    %433 = vector.load %arg11[%432, %c0_83] : memref<224x2xf32, #tpu.memory_space<vmem>>, vector<8x2xf32>
    %434 = arith.index_cast %431 : i32 to index
    %c0_84 = arith.constant 0 : index
    %435 = vector.load %arg12[%434, %c0_84] : memref<224x2xf32, #tpu.memory_space<vmem>>, vector<8x2xf32>
    %436 = arith.index_cast %431 : i32 to index
    %c0_85 = arith.constant 0 : index
    %437 = vector.load %arg13[%436, %c0_85] : memref<224x2xf32, #tpu.memory_space<vmem>>, vector<8x2xf32>
    %438 = vector.extract_strided_slice %414 {offsets = [0, 0], sizes = [8, 1], strides = [1, 1]} : vector<8x2xf32> to vector<8x1xf32>
    %439 = vector.broadcast %438 : vector<8x1xf32> to vector<8x2xf32>
    %440 = arith.mulf %439, %22 : vector<8x2xf32>
    %441 = vector.extract_strided_slice %414 {offsets = [0, 1], sizes = [8, 1], strides = [1, 1]} : vector<8x2xf32> to vector<8x1xf32>
    %442 = vector.broadcast %441 : vector<8x1xf32> to vector<8x2xf32>
    %443 = arith.mulf %442, %25 : vector<8x2xf32>
    %444 = arith.addf %440, %443 : vector<8x2xf32>
    %445 = arith.addf %433, %444 : vector<8x2xf32>
    %446 = arith.negf %445 : vector<8x2xf32>
    %447 = math.exp %446 : vector<8x2xf32>
    %cst_86 = arith.constant 1.000000e+00 : f32
    %448 = vector.broadcast %cst_86 : f32 to vector<8x2xf32>
    %449 = arith.addf %448, %447 : vector<8x2xf32>
    %450 = arith.divf %448, %449 : vector<8x2xf32>
    %451 = vector.extract_strided_slice %414 {offsets = [0, 0], sizes = [8, 1], strides = [1, 1]} : vector<8x2xf32> to vector<8x1xf32>
    %452 = vector.broadcast %451 : vector<8x1xf32> to vector<8x2xf32>
    %453 = arith.mulf %452, %28 : vector<8x2xf32>
    %454 = vector.extract_strided_slice %414 {offsets = [0, 1], sizes = [8, 1], strides = [1, 1]} : vector<8x2xf32> to vector<8x1xf32>
    %455 = vector.broadcast %454 : vector<8x1xf32> to vector<8x2xf32>
    %456 = arith.mulf %455, %31 : vector<8x2xf32>
    %457 = arith.addf %453, %456 : vector<8x2xf32>
    %458 = arith.addf %435, %457 : vector<8x2xf32>
    %459 = arith.negf %458 : vector<8x2xf32>
    %460 = math.exp %459 : vector<8x2xf32>
    %cst_87 = arith.constant 1.000000e+00 : f32
    %461 = vector.broadcast %cst_87 : f32 to vector<8x2xf32>
    %462 = arith.addf %461, %460 : vector<8x2xf32>
    %463 = arith.divf %461, %462 : vector<8x2xf32>
    %464 = vector.extract_strided_slice %414 {offsets = [0, 0], sizes = [8, 1], strides = [1, 1]} : vector<8x2xf32> to vector<8x1xf32>
    %465 = vector.broadcast %464 : vector<8x1xf32> to vector<8x2xf32>
    %466 = arith.mulf %465, %34 : vector<8x2xf32>
    %467 = vector.extract_strided_slice %414 {offsets = [0, 1], sizes = [8, 1], strides = [1, 1]} : vector<8x2xf32> to vector<8x1xf32>
    %468 = vector.broadcast %467 : vector<8x1xf32> to vector<8x2xf32>
    %469 = arith.mulf %468, %37 : vector<8x2xf32>
    %470 = arith.addf %466, %469 : vector<8x2xf32>
    %471 = arith.addf %470, %16 : vector<8x2xf32>
    %472 = arith.mulf %450, %471 : vector<8x2xf32>
    %473 = arith.addf %437, %472 : vector<8x2xf32>
    %474 = math.tanh %473 : vector<8x2xf32>
    %cst_88 = arith.constant 1.000000e+00 : f32
    %475 = vector.broadcast %cst_88 : f32 to vector<8x2xf32>
    %476 = arith.subf %475, %463 : vector<8x2xf32>
    %477 = arith.mulf %476, %474 : vector<8x2xf32>
    %478 = arith.mulf %463, %414 : vector<8x2xf32>
    %479 = arith.addf %477, %478 : vector<8x2xf32>
    %480 = arith.index_cast %c6_i32 : i32 to index
    %c0_89 = arith.constant 0 : index
    %c0_90 = arith.constant 0 : index
    %481 = vector.load %arg8[%480, %c0_89, %c0_90] : memref<28x2x128xf32, #tpu.memory_space<vmem>>, vector<1x2x128xf32>
    %482 = vector.shape_cast %481 : vector<1x2x128xf32> to vector<2x128xf32>
    %483 = vector.extract_strided_slice %479 {offsets = [0, 0], sizes = [8, 1], strides = [1, 1]} : vector<8x2xf32> to vector<8x1xf32>
    %484 = vector.extract_strided_slice %482 {offsets = [0, 0], sizes = [1, 128], strides = [1, 1]} : vector<2x128xf32> to vector<1x128xf32>
    %485 = vector.broadcast %483 : vector<8x1xf32> to vector<8x128xf32>
    %486 = vector.broadcast %484 : vector<1x128xf32> to vector<8x128xf32>
    %487 = arith.mulf %485, %486 : vector<8x128xf32>
    %488 = arith.addf %429, %487 : vector<8x128xf32>
    %489 = vector.extract_strided_slice %479 {offsets = [0, 1], sizes = [8, 1], strides = [1, 1]} : vector<8x2xf32> to vector<8x1xf32>
    %490 = vector.extract_strided_slice %482 {offsets = [1, 0], sizes = [1, 128], strides = [1, 1]} : vector<2x128xf32> to vector<1x128xf32>
    %491 = vector.broadcast %489 : vector<8x1xf32> to vector<8x128xf32>
    %492 = vector.broadcast %490 : vector<1x128xf32> to vector<8x128xf32>
    %493 = arith.mulf %491, %492 : vector<8x128xf32>
    %494 = arith.addf %488, %493 : vector<8x128xf32>
    %c7_i32 = arith.constant 7 : i32
    %c8_i32_91 = arith.constant 8 : i32
    %495 = arith.muli %c7_i32, %c8_i32_91 : i32
    %496 = tpu.assume_multiple %495, 8 : i32
    %497 = arith.index_cast %496 : i32 to index
    %c0_92 = arith.constant 0 : index
    %498 = vector.load %arg11[%497, %c0_92] : memref<224x2xf32, #tpu.memory_space<vmem>>, vector<8x2xf32>
    %499 = arith.index_cast %496 : i32 to index
    %c0_93 = arith.constant 0 : index
    %500 = vector.load %arg12[%499, %c0_93] : memref<224x2xf32, #tpu.memory_space<vmem>>, vector<8x2xf32>
    %501 = arith.index_cast %496 : i32 to index
    %c0_94 = arith.constant 0 : index
    %502 = vector.load %arg13[%501, %c0_94] : memref<224x2xf32, #tpu.memory_space<vmem>>, vector<8x2xf32>
    %503 = vector.extract_strided_slice %479 {offsets = [0, 0], sizes = [8, 1], strides = [1, 1]} : vector<8x2xf32> to vector<8x1xf32>
    %504 = vector.broadcast %503 : vector<8x1xf32> to vector<8x2xf32>
    %505 = arith.mulf %504, %22 : vector<8x2xf32>
    %506 = vector.extract_strided_slice %479 {offsets = [0, 1], sizes = [8, 1], strides = [1, 1]} : vector<8x2xf32> to vector<8x1xf32>
    %507 = vector.broadcast %506 : vector<8x1xf32> to vector<8x2xf32>
    %508 = arith.mulf %507, %25 : vector<8x2xf32>
    %509 = arith.addf %505, %508 : vector<8x2xf32>
    %510 = arith.addf %498, %509 : vector<8x2xf32>
    %511 = arith.negf %510 : vector<8x2xf32>
    %512 = math.exp %511 : vector<8x2xf32>
    %cst_95 = arith.constant 1.000000e+00 : f32
    %513 = vector.broadcast %cst_95 : f32 to vector<8x2xf32>
    %514 = arith.addf %513, %512 : vector<8x2xf32>
    %515 = arith.divf %513, %514 : vector<8x2xf32>
    %516 = vector.extract_strided_slice %479 {offsets = [0, 0], sizes = [8, 1], strides = [1, 1]} : vector<8x2xf32> to vector<8x1xf32>
    %517 = vector.broadcast %516 : vector<8x1xf32> to vector<8x2xf32>
    %518 = arith.mulf %517, %28 : vector<8x2xf32>
    %519 = vector.extract_strided_slice %479 {offsets = [0, 1], sizes = [8, 1], strides = [1, 1]} : vector<8x2xf32> to vector<8x1xf32>
    %520 = vector.broadcast %519 : vector<8x1xf32> to vector<8x2xf32>
    %521 = arith.mulf %520, %31 : vector<8x2xf32>
    %522 = arith.addf %518, %521 : vector<8x2xf32>
    %523 = arith.addf %500, %522 : vector<8x2xf32>
    %524 = arith.negf %523 : vector<8x2xf32>
    %525 = math.exp %524 : vector<8x2xf32>
    %cst_96 = arith.constant 1.000000e+00 : f32
    %526 = vector.broadcast %cst_96 : f32 to vector<8x2xf32>
    %527 = arith.addf %526, %525 : vector<8x2xf32>
    %528 = arith.divf %526, %527 : vector<8x2xf32>
    %529 = vector.extract_strided_slice %479 {offsets = [0, 0], sizes = [8, 1], strides = [1, 1]} : vector<8x2xf32> to vector<8x1xf32>
    %530 = vector.broadcast %529 : vector<8x1xf32> to vector<8x2xf32>
    %531 = arith.mulf %530, %34 : vector<8x2xf32>
    %532 = vector.extract_strided_slice %479 {offsets = [0, 1], sizes = [8, 1], strides = [1, 1]} : vector<8x2xf32> to vector<8x1xf32>
    %533 = vector.broadcast %532 : vector<8x1xf32> to vector<8x2xf32>
    %534 = arith.mulf %533, %37 : vector<8x2xf32>
    %535 = arith.addf %531, %534 : vector<8x2xf32>
    %536 = arith.addf %535, %16 : vector<8x2xf32>
    %537 = arith.mulf %515, %536 : vector<8x2xf32>
    %538 = arith.addf %502, %537 : vector<8x2xf32>
    %539 = math.tanh %538 : vector<8x2xf32>
    %cst_97 = arith.constant 1.000000e+00 : f32
    %540 = vector.broadcast %cst_97 : f32 to vector<8x2xf32>
    %541 = arith.subf %540, %528 : vector<8x2xf32>
    %542 = arith.mulf %541, %539 : vector<8x2xf32>
    %543 = arith.mulf %528, %479 : vector<8x2xf32>
    %544 = arith.addf %542, %543 : vector<8x2xf32>
    %545 = arith.index_cast %c7_i32 : i32 to index
    %c0_98 = arith.constant 0 : index
    %c0_99 = arith.constant 0 : index
    %546 = vector.load %arg8[%545, %c0_98, %c0_99] : memref<28x2x128xf32, #tpu.memory_space<vmem>>, vector<1x2x128xf32>
    %547 = vector.shape_cast %546 : vector<1x2x128xf32> to vector<2x128xf32>
    %548 = vector.extract_strided_slice %544 {offsets = [0, 0], sizes = [8, 1], strides = [1, 1]} : vector<8x2xf32> to vector<8x1xf32>
    %549 = vector.extract_strided_slice %547 {offsets = [0, 0], sizes = [1, 128], strides = [1, 1]} : vector<2x128xf32> to vector<1x128xf32>
    %550 = vector.broadcast %548 : vector<8x1xf32> to vector<8x128xf32>
    %551 = vector.broadcast %549 : vector<1x128xf32> to vector<8x128xf32>
    %552 = arith.mulf %550, %551 : vector<8x128xf32>
    %553 = arith.addf %494, %552 : vector<8x128xf32>
    %554 = vector.extract_strided_slice %544 {offsets = [0, 1], sizes = [8, 1], strides = [1, 1]} : vector<8x2xf32> to vector<8x1xf32>
    %555 = vector.extract_strided_slice %547 {offsets = [1, 0], sizes = [1, 128], strides = [1, 1]} : vector<2x128xf32> to vector<1x128xf32>
    %556 = vector.broadcast %554 : vector<8x1xf32> to vector<8x128xf32>
    %557 = vector.broadcast %555 : vector<1x128xf32> to vector<8x128xf32>
    %558 = arith.mulf %556, %557 : vector<8x128xf32>
    %559 = arith.addf %553, %558 : vector<8x128xf32>
    %c8_i32_100 = arith.constant 8 : i32
    %c8_i32_101 = arith.constant 8 : i32
    %560 = arith.muli %c8_i32_100, %c8_i32_101 : i32
    %561 = tpu.assume_multiple %560, 8 : i32
    %562 = arith.index_cast %561 : i32 to index
    %c0_102 = arith.constant 0 : index
    %563 = vector.load %arg11[%562, %c0_102] : memref<224x2xf32, #tpu.memory_space<vmem>>, vector<8x2xf32>
    %564 = arith.index_cast %561 : i32 to index
    %c0_103 = arith.constant 0 : index
    %565 = vector.load %arg12[%564, %c0_103] : memref<224x2xf32, #tpu.memory_space<vmem>>, vector<8x2xf32>
    %566 = arith.index_cast %561 : i32 to index
    %c0_104 = arith.constant 0 : index
    %567 = vector.load %arg13[%566, %c0_104] : memref<224x2xf32, #tpu.memory_space<vmem>>, vector<8x2xf32>
    %568 = vector.extract_strided_slice %544 {offsets = [0, 0], sizes = [8, 1], strides = [1, 1]} : vector<8x2xf32> to vector<8x1xf32>
    %569 = vector.broadcast %568 : vector<8x1xf32> to vector<8x2xf32>
    %570 = arith.mulf %569, %22 : vector<8x2xf32>
    %571 = vector.extract_strided_slice %544 {offsets = [0, 1], sizes = [8, 1], strides = [1, 1]} : vector<8x2xf32> to vector<8x1xf32>
    %572 = vector.broadcast %571 : vector<8x1xf32> to vector<8x2xf32>
    %573 = arith.mulf %572, %25 : vector<8x2xf32>
    %574 = arith.addf %570, %573 : vector<8x2xf32>
    %575 = arith.addf %563, %574 : vector<8x2xf32>
    %576 = arith.negf %575 : vector<8x2xf32>
    %577 = math.exp %576 : vector<8x2xf32>
    %cst_105 = arith.constant 1.000000e+00 : f32
    %578 = vector.broadcast %cst_105 : f32 to vector<8x2xf32>
    %579 = arith.addf %578, %577 : vector<8x2xf32>
    %580 = arith.divf %578, %579 : vector<8x2xf32>
    %581 = vector.extract_strided_slice %544 {offsets = [0, 0], sizes = [8, 1], strides = [1, 1]} : vector<8x2xf32> to vector<8x1xf32>
    %582 = vector.broadcast %581 : vector<8x1xf32> to vector<8x2xf32>
    %583 = arith.mulf %582, %28 : vector<8x2xf32>
    %584 = vector.extract_strided_slice %544 {offsets = [0, 1], sizes = [8, 1], strides = [1, 1]} : vector<8x2xf32> to vector<8x1xf32>
    %585 = vector.broadcast %584 : vector<8x1xf32> to vector<8x2xf32>
    %586 = arith.mulf %585, %31 : vector<8x2xf32>
    %587 = arith.addf %583, %586 : vector<8x2xf32>
    %588 = arith.addf %565, %587 : vector<8x2xf32>
    %589 = arith.negf %588 : vector<8x2xf32>
    %590 = math.exp %589 : vector<8x2xf32>
    %cst_106 = arith.constant 1.000000e+00 : f32
    %591 = vector.broadcast %cst_106 : f32 to vector<8x2xf32>
    %592 = arith.addf %591, %590 : vector<8x2xf32>
    %593 = arith.divf %591, %592 : vector<8x2xf32>
    %594 = vector.extract_strided_slice %544 {offsets = [0, 0], sizes = [8, 1], strides = [1, 1]} : vector<8x2xf32> to vector<8x1xf32>
    %595 = vector.broadcast %594 : vector<8x1xf32> to vector<8x2xf32>
    %596 = arith.mulf %595, %34 : vector<8x2xf32>
    %597 = vector.extract_strided_slice %544 {offsets = [0, 1], sizes = [8, 1], strides = [1, 1]} : vector<8x2xf32> to vector<8x1xf32>
    %598 = vector.broadcast %597 : vector<8x1xf32> to vector<8x2xf32>
    %599 = arith.mulf %598, %37 : vector<8x2xf32>
    %600 = arith.addf %596, %599 : vector<8x2xf32>
    %601 = arith.addf %600, %16 : vector<8x2xf32>
    %602 = arith.mulf %580, %601 : vector<8x2xf32>
    %603 = arith.addf %567, %602 : vector<8x2xf32>
    %604 = math.tanh %603 : vector<8x2xf32>
    %cst_107 = arith.constant 1.000000e+00 : f32
    %605 = vector.broadcast %cst_107 : f32 to vector<8x2xf32>
    %606 = arith.subf %605, %593 : vector<8x2xf32>
    %607 = arith.mulf %606, %604 : vector<8x2xf32>
    %608 = arith.mulf %593, %544 : vector<8x2xf32>
    %609 = arith.addf %607, %608 : vector<8x2xf32>
    %610 = arith.index_cast %c8_i32_100 : i32 to index
    %c0_108 = arith.constant 0 : index
    %c0_109 = arith.constant 0 : index
    %611 = vector.load %arg8[%610, %c0_108, %c0_109] : memref<28x2x128xf32, #tpu.memory_space<vmem>>, vector<1x2x128xf32>
    %612 = vector.shape_cast %611 : vector<1x2x128xf32> to vector<2x128xf32>
    %613 = vector.extract_strided_slice %609 {offsets = [0, 0], sizes = [8, 1], strides = [1, 1]} : vector<8x2xf32> to vector<8x1xf32>
    %614 = vector.extract_strided_slice %612 {offsets = [0, 0], sizes = [1, 128], strides = [1, 1]} : vector<2x128xf32> to vector<1x128xf32>
    %615 = vector.broadcast %613 : vector<8x1xf32> to vector<8x128xf32>
    %616 = vector.broadcast %614 : vector<1x128xf32> to vector<8x128xf32>
    %617 = arith.mulf %615, %616 : vector<8x128xf32>
    %618 = arith.addf %559, %617 : vector<8x128xf32>
    %619 = vector.extract_strided_slice %609 {offsets = [0, 1], sizes = [8, 1], strides = [1, 1]} : vector<8x2xf32> to vector<8x1xf32>
    %620 = vector.extract_strided_slice %612 {offsets = [1, 0], sizes = [1, 128], strides = [1, 1]} : vector<2x128xf32> to vector<1x128xf32>
    %621 = vector.broadcast %619 : vector<8x1xf32> to vector<8x128xf32>
    %622 = vector.broadcast %620 : vector<1x128xf32> to vector<8x128xf32>
    %623 = arith.mulf %621, %622 : vector<8x128xf32>
    %624 = arith.addf %618, %623 : vector<8x128xf32>
    %c9_i32 = arith.constant 9 : i32
    %c8_i32_110 = arith.constant 8 : i32
    %625 = arith.muli %c9_i32, %c8_i32_110 : i32
    %626 = tpu.assume_multiple %625, 8 : i32
    %627 = arith.index_cast %626 : i32 to index
    %c0_111 = arith.constant 0 : index
    %628 = vector.load %arg11[%627, %c0_111] : memref<224x2xf32, #tpu.memory_space<vmem>>, vector<8x2xf32>
    %629 = arith.index_cast %626 : i32 to index
    %c0_112 = arith.constant 0 : index
    %630 = vector.load %arg12[%629, %c0_112] : memref<224x2xf32, #tpu.memory_space<vmem>>, vector<8x2xf32>
    %631 = arith.index_cast %626 : i32 to index
    %c0_113 = arith.constant 0 : index
    %632 = vector.load %arg13[%631, %c0_113] : memref<224x2xf32, #tpu.memory_space<vmem>>, vector<8x2xf32>
    %633 = vector.extract_strided_slice %609 {offsets = [0, 0], sizes = [8, 1], strides = [1, 1]} : vector<8x2xf32> to vector<8x1xf32>
    %634 = vector.broadcast %633 : vector<8x1xf32> to vector<8x2xf32>
    %635 = arith.mulf %634, %22 : vector<8x2xf32>
    %636 = vector.extract_strided_slice %609 {offsets = [0, 1], sizes = [8, 1], strides = [1, 1]} : vector<8x2xf32> to vector<8x1xf32>
    %637 = vector.broadcast %636 : vector<8x1xf32> to vector<8x2xf32>
    %638 = arith.mulf %637, %25 : vector<8x2xf32>
    %639 = arith.addf %635, %638 : vector<8x2xf32>
    %640 = arith.addf %628, %639 : vector<8x2xf32>
    %641 = arith.negf %640 : vector<8x2xf32>
    %642 = math.exp %641 : vector<8x2xf32>
    %cst_114 = arith.constant 1.000000e+00 : f32
    %643 = vector.broadcast %cst_114 : f32 to vector<8x2xf32>
    %644 = arith.addf %643, %642 : vector<8x2xf32>
    %645 = arith.divf %643, %644 : vector<8x2xf32>
    %646 = vector.extract_strided_slice %609 {offsets = [0, 0], sizes = [8, 1], strides = [1, 1]} : vector<8x2xf32> to vector<8x1xf32>
    %647 = vector.broadcast %646 : vector<8x1xf32> to vector<8x2xf32>
    %648 = arith.mulf %647, %28 : vector<8x2xf32>
    %649 = vector.extract_strided_slice %609 {offsets = [0, 1], sizes = [8, 1], strides = [1, 1]} : vector<8x2xf32> to vector<8x1xf32>
    %650 = vector.broadcast %649 : vector<8x1xf32> to vector<8x2xf32>
    %651 = arith.mulf %650, %31 : vector<8x2xf32>
    %652 = arith.addf %648, %651 : vector<8x2xf32>
    %653 = arith.addf %630, %652 : vector<8x2xf32>
    %654 = arith.negf %653 : vector<8x2xf32>
    %655 = math.exp %654 : vector<8x2xf32>
    %cst_115 = arith.constant 1.000000e+00 : f32
    %656 = vector.broadcast %cst_115 : f32 to vector<8x2xf32>
    %657 = arith.addf %656, %655 : vector<8x2xf32>
    %658 = arith.divf %656, %657 : vector<8x2xf32>
    %659 = vector.extract_strided_slice %609 {offsets = [0, 0], sizes = [8, 1], strides = [1, 1]} : vector<8x2xf32> to vector<8x1xf32>
    %660 = vector.broadcast %659 : vector<8x1xf32> to vector<8x2xf32>
    %661 = arith.mulf %660, %34 : vector<8x2xf32>
    %662 = vector.extract_strided_slice %609 {offsets = [0, 1], sizes = [8, 1], strides = [1, 1]} : vector<8x2xf32> to vector<8x1xf32>
    %663 = vector.broadcast %662 : vector<8x1xf32> to vector<8x2xf32>
    %664 = arith.mulf %663, %37 : vector<8x2xf32>
    %665 = arith.addf %661, %664 : vector<8x2xf32>
    %666 = arith.addf %665, %16 : vector<8x2xf32>
    %667 = arith.mulf %645, %666 : vector<8x2xf32>
    %668 = arith.addf %632, %667 : vector<8x2xf32>
    %669 = math.tanh %668 : vector<8x2xf32>
    %cst_116 = arith.constant 1.000000e+00 : f32
    %670 = vector.broadcast %cst_116 : f32 to vector<8x2xf32>
    %671 = arith.subf %670, %658 : vector<8x2xf32>
    %672 = arith.mulf %671, %669 : vector<8x2xf32>
    %673 = arith.mulf %658, %609 : vector<8x2xf32>
    %674 = arith.addf %672, %673 : vector<8x2xf32>
    %675 = arith.index_cast %c9_i32 : i32 to index
    %c0_117 = arith.constant 0 : index
    %c0_118 = arith.constant 0 : index
    %676 = vector.load %arg8[%675, %c0_117, %c0_118] : memref<28x2x128xf32, #tpu.memory_space<vmem>>, vector<1x2x128xf32>
    %677 = vector.shape_cast %676 : vector<1x2x128xf32> to vector<2x128xf32>
    %678 = vector.extract_strided_slice %674 {offsets = [0, 0], sizes = [8, 1], strides = [1, 1]} : vector<8x2xf32> to vector<8x1xf32>
    %679 = vector.extract_strided_slice %677 {offsets = [0, 0], sizes = [1, 128], strides = [1, 1]} : vector<2x128xf32> to vector<1x128xf32>
    %680 = vector.broadcast %678 : vector<8x1xf32> to vector<8x128xf32>
    %681 = vector.broadcast %679 : vector<1x128xf32> to vector<8x128xf32>
    %682 = arith.mulf %680, %681 : vector<8x128xf32>
    %683 = arith.addf %624, %682 : vector<8x128xf32>
    %684 = vector.extract_strided_slice %674 {offsets = [0, 1], sizes = [8, 1], strides = [1, 1]} : vector<8x2xf32> to vector<8x1xf32>
    %685 = vector.extract_strided_slice %677 {offsets = [1, 0], sizes = [1, 128], strides = [1, 1]} : vector<2x128xf32> to vector<1x128xf32>
    %686 = vector.broadcast %684 : vector<8x1xf32> to vector<8x128xf32>
    %687 = vector.broadcast %685 : vector<1x128xf32> to vector<8x128xf32>
    %688 = arith.mulf %686, %687 : vector<8x128xf32>
    %689 = arith.addf %683, %688 : vector<8x128xf32>
    %c10_i32 = arith.constant 10 : i32
    %c8_i32_119 = arith.constant 8 : i32
    %690 = arith.muli %c10_i32, %c8_i32_119 : i32
    %691 = tpu.assume_multiple %690, 8 : i32
    %692 = arith.index_cast %691 : i32 to index
    %c0_120 = arith.constant 0 : index
    %693 = vector.load %arg11[%692, %c0_120] : memref<224x2xf32, #tpu.memory_space<vmem>>, vector<8x2xf32>
    %694 = arith.index_cast %691 : i32 to index
    %c0_121 = arith.constant 0 : index
    %695 = vector.load %arg12[%694, %c0_121] : memref<224x2xf32, #tpu.memory_space<vmem>>, vector<8x2xf32>
    %696 = arith.index_cast %691 : i32 to index
    %c0_122 = arith.constant 0 : index
    %697 = vector.load %arg13[%696, %c0_122] : memref<224x2xf32, #tpu.memory_space<vmem>>, vector<8x2xf32>
    %698 = vector.extract_strided_slice %674 {offsets = [0, 0], sizes = [8, 1], strides = [1, 1]} : vector<8x2xf32> to vector<8x1xf32>
    %699 = vector.broadcast %698 : vector<8x1xf32> to vector<8x2xf32>
    %700 = arith.mulf %699, %22 : vector<8x2xf32>
    %701 = vector.extract_strided_slice %674 {offsets = [0, 1], sizes = [8, 1], strides = [1, 1]} : vector<8x2xf32> to vector<8x1xf32>
    %702 = vector.broadcast %701 : vector<8x1xf32> to vector<8x2xf32>
    %703 = arith.mulf %702, %25 : vector<8x2xf32>
    %704 = arith.addf %700, %703 : vector<8x2xf32>
    %705 = arith.addf %693, %704 : vector<8x2xf32>
    %706 = arith.negf %705 : vector<8x2xf32>
    %707 = math.exp %706 : vector<8x2xf32>
    %cst_123 = arith.constant 1.000000e+00 : f32
    %708 = vector.broadcast %cst_123 : f32 to vector<8x2xf32>
    %709 = arith.addf %708, %707 : vector<8x2xf32>
    %710 = arith.divf %708, %709 : vector<8x2xf32>
    %711 = vector.extract_strided_slice %674 {offsets = [0, 0], sizes = [8, 1], strides = [1, 1]} : vector<8x2xf32> to vector<8x1xf32>
    %712 = vector.broadcast %711 : vector<8x1xf32> to vector<8x2xf32>
    %713 = arith.mulf %712, %28 : vector<8x2xf32>
    %714 = vector.extract_strided_slice %674 {offsets = [0, 1], sizes = [8, 1], strides = [1, 1]} : vector<8x2xf32> to vector<8x1xf32>
    %715 = vector.broadcast %714 : vector<8x1xf32> to vector<8x2xf32>
    %716 = arith.mulf %715, %31 : vector<8x2xf32>
    %717 = arith.addf %713, %716 : vector<8x2xf32>
    %718 = arith.addf %695, %717 : vector<8x2xf32>
    %719 = arith.negf %718 : vector<8x2xf32>
    %720 = math.exp %719 : vector<8x2xf32>
    %cst_124 = arith.constant 1.000000e+00 : f32
    %721 = vector.broadcast %cst_124 : f32 to vector<8x2xf32>
    %722 = arith.addf %721, %720 : vector<8x2xf32>
    %723 = arith.divf %721, %722 : vector<8x2xf32>
    %724 = vector.extract_strided_slice %674 {offsets = [0, 0], sizes = [8, 1], strides = [1, 1]} : vector<8x2xf32> to vector<8x1xf32>
    %725 = vector.broadcast %724 : vector<8x1xf32> to vector<8x2xf32>
    %726 = arith.mulf %725, %34 : vector<8x2xf32>
    %727 = vector.extract_strided_slice %674 {offsets = [0, 1], sizes = [8, 1], strides = [1, 1]} : vector<8x2xf32> to vector<8x1xf32>
    %728 = vector.broadcast %727 : vector<8x1xf32> to vector<8x2xf32>
    %729 = arith.mulf %728, %37 : vector<8x2xf32>
    %730 = arith.addf %726, %729 : vector<8x2xf32>
    %731 = arith.addf %730, %16 : vector<8x2xf32>
    %732 = arith.mulf %710, %731 : vector<8x2xf32>
    %733 = arith.addf %697, %732 : vector<8x2xf32>
    %734 = math.tanh %733 : vector<8x2xf32>
    %cst_125 = arith.constant 1.000000e+00 : f32
    %735 = vector.broadcast %cst_125 : f32 to vector<8x2xf32>
    %736 = arith.subf %735, %723 : vector<8x2xf32>
    %737 = arith.mulf %736, %734 : vector<8x2xf32>
    %738 = arith.mulf %723, %674 : vector<8x2xf32>
    %739 = arith.addf %737, %738 : vector<8x2xf32>
    %740 = arith.index_cast %c10_i32 : i32 to index
    %c0_126 = arith.constant 0 : index
    %c0_127 = arith.constant 0 : index
    %741 = vector.load %arg8[%740, %c0_126, %c0_127] : memref<28x2x128xf32, #tpu.memory_space<vmem>>, vector<1x2x128xf32>
    %742 = vector.shape_cast %741 : vector<1x2x128xf32> to vector<2x128xf32>
    %743 = vector.extract_strided_slice %739 {offsets = [0, 0], sizes = [8, 1], strides = [1, 1]} : vector<8x2xf32> to vector<8x1xf32>
    %744 = vector.extract_strided_slice %742 {offsets = [0, 0], sizes = [1, 128], strides = [1, 1]} : vector<2x128xf32> to vector<1x128xf32>
    %745 = vector.broadcast %743 : vector<8x1xf32> to vector<8x128xf32>
    %746 = vector.broadcast %744 : vector<1x128xf32> to vector<8x128xf32>
    %747 = arith.mulf %745, %746 : vector<8x128xf32>
    %748 = arith.addf %689, %747 : vector<8x128xf32>
    %749 = vector.extract_strided_slice %739 {offsets = [0, 1], sizes = [8, 1], strides = [1, 1]} : vector<8x2xf32> to vector<8x1xf32>
    %750 = vector.extract_strided_slice %742 {offsets = [1, 0], sizes = [1, 128], strides = [1, 1]} : vector<2x128xf32> to vector<1x128xf32>
    %751 = vector.broadcast %749 : vector<8x1xf32> to vector<8x128xf32>
    %752 = vector.broadcast %750 : vector<1x128xf32> to vector<8x128xf32>
    %753 = arith.mulf %751, %752 : vector<8x128xf32>
    %754 = arith.addf %748, %753 : vector<8x128xf32>
    %c11_i32 = arith.constant 11 : i32
    %c8_i32_128 = arith.constant 8 : i32
    %755 = arith.muli %c11_i32, %c8_i32_128 : i32
    %756 = tpu.assume_multiple %755, 8 : i32
    %757 = arith.index_cast %756 : i32 to index
    %c0_129 = arith.constant 0 : index
    %758 = vector.load %arg11[%757, %c0_129] : memref<224x2xf32, #tpu.memory_space<vmem>>, vector<8x2xf32>
    %759 = arith.index_cast %756 : i32 to index
    %c0_130 = arith.constant 0 : index
    %760 = vector.load %arg12[%759, %c0_130] : memref<224x2xf32, #tpu.memory_space<vmem>>, vector<8x2xf32>
    %761 = arith.index_cast %756 : i32 to index
    %c0_131 = arith.constant 0 : index
    %762 = vector.load %arg13[%761, %c0_131] : memref<224x2xf32, #tpu.memory_space<vmem>>, vector<8x2xf32>
    %763 = vector.extract_strided_slice %739 {offsets = [0, 0], sizes = [8, 1], strides = [1, 1]} : vector<8x2xf32> to vector<8x1xf32>
    %764 = vector.broadcast %763 : vector<8x1xf32> to vector<8x2xf32>
    %765 = arith.mulf %764, %22 : vector<8x2xf32>
    %766 = vector.extract_strided_slice %739 {offsets = [0, 1], sizes = [8, 1], strides = [1, 1]} : vector<8x2xf32> to vector<8x1xf32>
    %767 = vector.broadcast %766 : vector<8x1xf32> to vector<8x2xf32>
    %768 = arith.mulf %767, %25 : vector<8x2xf32>
    %769 = arith.addf %765, %768 : vector<8x2xf32>
    %770 = arith.addf %758, %769 : vector<8x2xf32>
    %771 = arith.negf %770 : vector<8x2xf32>
    %772 = math.exp %771 : vector<8x2xf32>
    %cst_132 = arith.constant 1.000000e+00 : f32
    %773 = vector.broadcast %cst_132 : f32 to vector<8x2xf32>
    %774 = arith.addf %773, %772 : vector<8x2xf32>
    %775 = arith.divf %773, %774 : vector<8x2xf32>
    %776 = vector.extract_strided_slice %739 {offsets = [0, 0], sizes = [8, 1], strides = [1, 1]} : vector<8x2xf32> to vector<8x1xf32>
    %777 = vector.broadcast %776 : vector<8x1xf32> to vector<8x2xf32>
    %778 = arith.mulf %777, %28 : vector<8x2xf32>
    %779 = vector.extract_strided_slice %739 {offsets = [0, 1], sizes = [8, 1], strides = [1, 1]} : vector<8x2xf32> to vector<8x1xf32>
    %780 = vector.broadcast %779 : vector<8x1xf32> to vector<8x2xf32>
    %781 = arith.mulf %780, %31 : vector<8x2xf32>
    %782 = arith.addf %778, %781 : vector<8x2xf32>
    %783 = arith.addf %760, %782 : vector<8x2xf32>
    %784 = arith.negf %783 : vector<8x2xf32>
    %785 = math.exp %784 : vector<8x2xf32>
    %cst_133 = arith.constant 1.000000e+00 : f32
    %786 = vector.broadcast %cst_133 : f32 to vector<8x2xf32>
    %787 = arith.addf %786, %785 : vector<8x2xf32>
    %788 = arith.divf %786, %787 : vector<8x2xf32>
    %789 = vector.extract_strided_slice %739 {offsets = [0, 0], sizes = [8, 1], strides = [1, 1]} : vector<8x2xf32> to vector<8x1xf32>
    %790 = vector.broadcast %789 : vector<8x1xf32> to vector<8x2xf32>
    %791 = arith.mulf %790, %34 : vector<8x2xf32>
    %792 = vector.extract_strided_slice %739 {offsets = [0, 1], sizes = [8, 1], strides = [1, 1]} : vector<8x2xf32> to vector<8x1xf32>
    %793 = vector.broadcast %792 : vector<8x1xf32> to vector<8x2xf32>
    %794 = arith.mulf %793, %37 : vector<8x2xf32>
    %795 = arith.addf %791, %794 : vector<8x2xf32>
    %796 = arith.addf %795, %16 : vector<8x2xf32>
    %797 = arith.mulf %775, %796 : vector<8x2xf32>
    %798 = arith.addf %762, %797 : vector<8x2xf32>
    %799 = math.tanh %798 : vector<8x2xf32>
    %cst_134 = arith.constant 1.000000e+00 : f32
    %800 = vector.broadcast %cst_134 : f32 to vector<8x2xf32>
    %801 = arith.subf %800, %788 : vector<8x2xf32>
    %802 = arith.mulf %801, %799 : vector<8x2xf32>
    %803 = arith.mulf %788, %739 : vector<8x2xf32>
    %804 = arith.addf %802, %803 : vector<8x2xf32>
    %805 = arith.index_cast %c11_i32 : i32 to index
    %c0_135 = arith.constant 0 : index
    %c0_136 = arith.constant 0 : index
    %806 = vector.load %arg8[%805, %c0_135, %c0_136] : memref<28x2x128xf32, #tpu.memory_space<vmem>>, vector<1x2x128xf32>
    %807 = vector.shape_cast %806 : vector<1x2x128xf32> to vector<2x128xf32>
    %808 = vector.extract_strided_slice %804 {offsets = [0, 0], sizes = [8, 1], strides = [1, 1]} : vector<8x2xf32> to vector<8x1xf32>
    %809 = vector.extract_strided_slice %807 {offsets = [0, 0], sizes = [1, 128], strides = [1, 1]} : vector<2x128xf32> to vector<1x128xf32>
    %810 = vector.broadcast %808 : vector<8x1xf32> to vector<8x128xf32>
    %811 = vector.broadcast %809 : vector<1x128xf32> to vector<8x128xf32>
    %812 = arith.mulf %810, %811 : vector<8x128xf32>
    %813 = arith.addf %754, %812 : vector<8x128xf32>
    %814 = vector.extract_strided_slice %804 {offsets = [0, 1], sizes = [8, 1], strides = [1, 1]} : vector<8x2xf32> to vector<8x1xf32>
    %815 = vector.extract_strided_slice %807 {offsets = [1, 0], sizes = [1, 128], strides = [1, 1]} : vector<2x128xf32> to vector<1x128xf32>
    %816 = vector.broadcast %814 : vector<8x1xf32> to vector<8x128xf32>
    %817 = vector.broadcast %815 : vector<1x128xf32> to vector<8x128xf32>
    %818 = arith.mulf %816, %817 : vector<8x128xf32>
    %819 = arith.addf %813, %818 : vector<8x128xf32>
    %c12_i32 = arith.constant 12 : i32
    %c8_i32_137 = arith.constant 8 : i32
    %820 = arith.muli %c12_i32, %c8_i32_137 : i32
    %821 = tpu.assume_multiple %820, 8 : i32
    %822 = arith.index_cast %821 : i32 to index
    %c0_138 = arith.constant 0 : index
    %823 = vector.load %arg11[%822, %c0_138] : memref<224x2xf32, #tpu.memory_space<vmem>>, vector<8x2xf32>
    %824 = arith.index_cast %821 : i32 to index
    %c0_139 = arith.constant 0 : index
    %825 = vector.load %arg12[%824, %c0_139] : memref<224x2xf32, #tpu.memory_space<vmem>>, vector<8x2xf32>
    %826 = arith.index_cast %821 : i32 to index
    %c0_140 = arith.constant 0 : index
    %827 = vector.load %arg13[%826, %c0_140] : memref<224x2xf32, #tpu.memory_space<vmem>>, vector<8x2xf32>
    %828 = vector.extract_strided_slice %804 {offsets = [0, 0], sizes = [8, 1], strides = [1, 1]} : vector<8x2xf32> to vector<8x1xf32>
    %829 = vector.broadcast %828 : vector<8x1xf32> to vector<8x2xf32>
    %830 = arith.mulf %829, %22 : vector<8x2xf32>
    %831 = vector.extract_strided_slice %804 {offsets = [0, 1], sizes = [8, 1], strides = [1, 1]} : vector<8x2xf32> to vector<8x1xf32>
    %832 = vector.broadcast %831 : vector<8x1xf32> to vector<8x2xf32>
    %833 = arith.mulf %832, %25 : vector<8x2xf32>
    %834 = arith.addf %830, %833 : vector<8x2xf32>
    %835 = arith.addf %823, %834 : vector<8x2xf32>
    %836 = arith.negf %835 : vector<8x2xf32>
    %837 = math.exp %836 : vector<8x2xf32>
    %cst_141 = arith.constant 1.000000e+00 : f32
    %838 = vector.broadcast %cst_141 : f32 to vector<8x2xf32>
    %839 = arith.addf %838, %837 : vector<8x2xf32>
    %840 = arith.divf %838, %839 : vector<8x2xf32>
    %841 = vector.extract_strided_slice %804 {offsets = [0, 0], sizes = [8, 1], strides = [1, 1]} : vector<8x2xf32> to vector<8x1xf32>
    %842 = vector.broadcast %841 : vector<8x1xf32> to vector<8x2xf32>
    %843 = arith.mulf %842, %28 : vector<8x2xf32>
    %844 = vector.extract_strided_slice %804 {offsets = [0, 1], sizes = [8, 1], strides = [1, 1]} : vector<8x2xf32> to vector<8x1xf32>
    %845 = vector.broadcast %844 : vector<8x1xf32> to vector<8x2xf32>
    %846 = arith.mulf %845, %31 : vector<8x2xf32>
    %847 = arith.addf %843, %846 : vector<8x2xf32>
    %848 = arith.addf %825, %847 : vector<8x2xf32>
    %849 = arith.negf %848 : vector<8x2xf32>
    %850 = math.exp %849 : vector<8x2xf32>
    %cst_142 = arith.constant 1.000000e+00 : f32
    %851 = vector.broadcast %cst_142 : f32 to vector<8x2xf32>
    %852 = arith.addf %851, %850 : vector<8x2xf32>
    %853 = arith.divf %851, %852 : vector<8x2xf32>
    %854 = vector.extract_strided_slice %804 {offsets = [0, 0], sizes = [8, 1], strides = [1, 1]} : vector<8x2xf32> to vector<8x1xf32>
    %855 = vector.broadcast %854 : vector<8x1xf32> to vector<8x2xf32>
    %856 = arith.mulf %855, %34 : vector<8x2xf32>
    %857 = vector.extract_strided_slice %804 {offsets = [0, 1], sizes = [8, 1], strides = [1, 1]} : vector<8x2xf32> to vector<8x1xf32>
    %858 = vector.broadcast %857 : vector<8x1xf32> to vector<8x2xf32>
    %859 = arith.mulf %858, %37 : vector<8x2xf32>
    %860 = arith.addf %856, %859 : vector<8x2xf32>
    %861 = arith.addf %860, %16 : vector<8x2xf32>
    %862 = arith.mulf %840, %861 : vector<8x2xf32>
    %863 = arith.addf %827, %862 : vector<8x2xf32>
    %864 = math.tanh %863 : vector<8x2xf32>
    %cst_143 = arith.constant 1.000000e+00 : f32
    %865 = vector.broadcast %cst_143 : f32 to vector<8x2xf32>
    %866 = arith.subf %865, %853 : vector<8x2xf32>
    %867 = arith.mulf %866, %864 : vector<8x2xf32>
    %868 = arith.mulf %853, %804 : vector<8x2xf32>
    %869 = arith.addf %867, %868 : vector<8x2xf32>
    %870 = arith.index_cast %c12_i32 : i32 to index
    %c0_144 = arith.constant 0 : index
    %c0_145 = arith.constant 0 : index
    %871 = vector.load %arg8[%870, %c0_144, %c0_145] : memref<28x2x128xf32, #tpu.memory_space<vmem>>, vector<1x2x128xf32>
    %872 = vector.shape_cast %871 : vector<1x2x128xf32> to vector<2x128xf32>
    %873 = vector.extract_strided_slice %869 {offsets = [0, 0], sizes = [8, 1], strides = [1, 1]} : vector<8x2xf32> to vector<8x1xf32>
    %874 = vector.extract_strided_slice %872 {offsets = [0, 0], sizes = [1, 128], strides = [1, 1]} : vector<2x128xf32> to vector<1x128xf32>
    %875 = vector.broadcast %873 : vector<8x1xf32> to vector<8x128xf32>
    %876 = vector.broadcast %874 : vector<1x128xf32> to vector<8x128xf32>
    %877 = arith.mulf %875, %876 : vector<8x128xf32>
    %878 = arith.addf %819, %877 : vector<8x128xf32>
    %879 = vector.extract_strided_slice %869 {offsets = [0, 1], sizes = [8, 1], strides = [1, 1]} : vector<8x2xf32> to vector<8x1xf32>
    %880 = vector.extract_strided_slice %872 {offsets = [1, 0], sizes = [1, 128], strides = [1, 1]} : vector<2x128xf32> to vector<1x128xf32>
    %881 = vector.broadcast %879 : vector<8x1xf32> to vector<8x128xf32>
    %882 = vector.broadcast %880 : vector<1x128xf32> to vector<8x128xf32>
    %883 = arith.mulf %881, %882 : vector<8x128xf32>
    %884 = arith.addf %878, %883 : vector<8x128xf32>
    %c13_i32 = arith.constant 13 : i32
    %c8_i32_146 = arith.constant 8 : i32
    %885 = arith.muli %c13_i32, %c8_i32_146 : i32
    %886 = tpu.assume_multiple %885, 8 : i32
    %887 = arith.index_cast %886 : i32 to index
    %c0_147 = arith.constant 0 : index
    %888 = vector.load %arg11[%887, %c0_147] : memref<224x2xf32, #tpu.memory_space<vmem>>, vector<8x2xf32>
    %889 = arith.index_cast %886 : i32 to index
    %c0_148 = arith.constant 0 : index
    %890 = vector.load %arg12[%889, %c0_148] : memref<224x2xf32, #tpu.memory_space<vmem>>, vector<8x2xf32>
    %891 = arith.index_cast %886 : i32 to index
    %c0_149 = arith.constant 0 : index
    %892 = vector.load %arg13[%891, %c0_149] : memref<224x2xf32, #tpu.memory_space<vmem>>, vector<8x2xf32>
    %893 = vector.extract_strided_slice %869 {offsets = [0, 0], sizes = [8, 1], strides = [1, 1]} : vector<8x2xf32> to vector<8x1xf32>
    %894 = vector.broadcast %893 : vector<8x1xf32> to vector<8x2xf32>
    %895 = arith.mulf %894, %22 : vector<8x2xf32>
    %896 = vector.extract_strided_slice %869 {offsets = [0, 1], sizes = [8, 1], strides = [1, 1]} : vector<8x2xf32> to vector<8x1xf32>
    %897 = vector.broadcast %896 : vector<8x1xf32> to vector<8x2xf32>
    %898 = arith.mulf %897, %25 : vector<8x2xf32>
    %899 = arith.addf %895, %898 : vector<8x2xf32>
    %900 = arith.addf %888, %899 : vector<8x2xf32>
    %901 = arith.negf %900 : vector<8x2xf32>
    %902 = math.exp %901 : vector<8x2xf32>
    %cst_150 = arith.constant 1.000000e+00 : f32
    %903 = vector.broadcast %cst_150 : f32 to vector<8x2xf32>
    %904 = arith.addf %903, %902 : vector<8x2xf32>
    %905 = arith.divf %903, %904 : vector<8x2xf32>
    %906 = vector.extract_strided_slice %869 {offsets = [0, 0], sizes = [8, 1], strides = [1, 1]} : vector<8x2xf32> to vector<8x1xf32>
    %907 = vector.broadcast %906 : vector<8x1xf32> to vector<8x2xf32>
    %908 = arith.mulf %907, %28 : vector<8x2xf32>
    %909 = vector.extract_strided_slice %869 {offsets = [0, 1], sizes = [8, 1], strides = [1, 1]} : vector<8x2xf32> to vector<8x1xf32>
    %910 = vector.broadcast %909 : vector<8x1xf32> to vector<8x2xf32>
    %911 = arith.mulf %910, %31 : vector<8x2xf32>
    %912 = arith.addf %908, %911 : vector<8x2xf32>
    %913 = arith.addf %890, %912 : vector<8x2xf32>
    %914 = arith.negf %913 : vector<8x2xf32>
    %915 = math.exp %914 : vector<8x2xf32>
    %cst_151 = arith.constant 1.000000e+00 : f32
    %916 = vector.broadcast %cst_151 : f32 to vector<8x2xf32>
    %917 = arith.addf %916, %915 : vector<8x2xf32>
    %918 = arith.divf %916, %917 : vector<8x2xf32>
    %919 = vector.extract_strided_slice %869 {offsets = [0, 0], sizes = [8, 1], strides = [1, 1]} : vector<8x2xf32> to vector<8x1xf32>
    %920 = vector.broadcast %919 : vector<8x1xf32> to vector<8x2xf32>
    %921 = arith.mulf %920, %34 : vector<8x2xf32>
    %922 = vector.extract_strided_slice %869 {offsets = [0, 1], sizes = [8, 1], strides = [1, 1]} : vector<8x2xf32> to vector<8x1xf32>
    %923 = vector.broadcast %922 : vector<8x1xf32> to vector<8x2xf32>
    %924 = arith.mulf %923, %37 : vector<8x2xf32>
    %925 = arith.addf %921, %924 : vector<8x2xf32>
    %926 = arith.addf %925, %16 : vector<8x2xf32>
    %927 = arith.mulf %905, %926 : vector<8x2xf32>
    %928 = arith.addf %892, %927 : vector<8x2xf32>
    %929 = math.tanh %928 : vector<8x2xf32>
    %cst_152 = arith.constant 1.000000e+00 : f32
    %930 = vector.broadcast %cst_152 : f32 to vector<8x2xf32>
    %931 = arith.subf %930, %918 : vector<8x2xf32>
    %932 = arith.mulf %931, %929 : vector<8x2xf32>
    %933 = arith.mulf %918, %869 : vector<8x2xf32>
    %934 = arith.addf %932, %933 : vector<8x2xf32>
    %935 = arith.index_cast %c13_i32 : i32 to index
    %c0_153 = arith.constant 0 : index
    %c0_154 = arith.constant 0 : index
    %936 = vector.load %arg8[%935, %c0_153, %c0_154] : memref<28x2x128xf32, #tpu.memory_space<vmem>>, vector<1x2x128xf32>
    %937 = vector.shape_cast %936 : vector<1x2x128xf32> to vector<2x128xf32>
    %938 = vector.extract_strided_slice %934 {offsets = [0, 0], sizes = [8, 1], strides = [1, 1]} : vector<8x2xf32> to vector<8x1xf32>
    %939 = vector.extract_strided_slice %937 {offsets = [0, 0], sizes = [1, 128], strides = [1, 1]} : vector<2x128xf32> to vector<1x128xf32>
    %940 = vector.broadcast %938 : vector<8x1xf32> to vector<8x128xf32>
    %941 = vector.broadcast %939 : vector<1x128xf32> to vector<8x128xf32>
    %942 = arith.mulf %940, %941 : vector<8x128xf32>
    %943 = arith.addf %884, %942 : vector<8x128xf32>
    %944 = vector.extract_strided_slice %934 {offsets = [0, 1], sizes = [8, 1], strides = [1, 1]} : vector<8x2xf32> to vector<8x1xf32>
    %945 = vector.extract_strided_slice %937 {offsets = [1, 0], sizes = [1, 128], strides = [1, 1]} : vector<2x128xf32> to vector<1x128xf32>
    %946 = vector.broadcast %944 : vector<8x1xf32> to vector<8x128xf32>
    %947 = vector.broadcast %945 : vector<1x128xf32> to vector<8x128xf32>
    %948 = arith.mulf %946, %947 : vector<8x128xf32>
    %949 = arith.addf %943, %948 : vector<8x128xf32>
    %c14_i32 = arith.constant 14 : i32
    %c8_i32_155 = arith.constant 8 : i32
    %950 = arith.muli %c14_i32, %c8_i32_155 : i32
    %951 = tpu.assume_multiple %950, 8 : i32
    %952 = arith.index_cast %951 : i32 to index
    %c0_156 = arith.constant 0 : index
    %953 = vector.load %arg11[%952, %c0_156] : memref<224x2xf32, #tpu.memory_space<vmem>>, vector<8x2xf32>
    %954 = arith.index_cast %951 : i32 to index
    %c0_157 = arith.constant 0 : index
    %955 = vector.load %arg12[%954, %c0_157] : memref<224x2xf32, #tpu.memory_space<vmem>>, vector<8x2xf32>
    %956 = arith.index_cast %951 : i32 to index
    %c0_158 = arith.constant 0 : index
    %957 = vector.load %arg13[%956, %c0_158] : memref<224x2xf32, #tpu.memory_space<vmem>>, vector<8x2xf32>
    %958 = vector.extract_strided_slice %934 {offsets = [0, 0], sizes = [8, 1], strides = [1, 1]} : vector<8x2xf32> to vector<8x1xf32>
    %959 = vector.broadcast %958 : vector<8x1xf32> to vector<8x2xf32>
    %960 = arith.mulf %959, %22 : vector<8x2xf32>
    %961 = vector.extract_strided_slice %934 {offsets = [0, 1], sizes = [8, 1], strides = [1, 1]} : vector<8x2xf32> to vector<8x1xf32>
    %962 = vector.broadcast %961 : vector<8x1xf32> to vector<8x2xf32>
    %963 = arith.mulf %962, %25 : vector<8x2xf32>
    %964 = arith.addf %960, %963 : vector<8x2xf32>
    %965 = arith.addf %953, %964 : vector<8x2xf32>
    %966 = arith.negf %965 : vector<8x2xf32>
    %967 = math.exp %966 : vector<8x2xf32>
    %cst_159 = arith.constant 1.000000e+00 : f32
    %968 = vector.broadcast %cst_159 : f32 to vector<8x2xf32>
    %969 = arith.addf %968, %967 : vector<8x2xf32>
    %970 = arith.divf %968, %969 : vector<8x2xf32>
    %971 = vector.extract_strided_slice %934 {offsets = [0, 0], sizes = [8, 1], strides = [1, 1]} : vector<8x2xf32> to vector<8x1xf32>
    %972 = vector.broadcast %971 : vector<8x1xf32> to vector<8x2xf32>
    %973 = arith.mulf %972, %28 : vector<8x2xf32>
    %974 = vector.extract_strided_slice %934 {offsets = [0, 1], sizes = [8, 1], strides = [1, 1]} : vector<8x2xf32> to vector<8x1xf32>
    %975 = vector.broadcast %974 : vector<8x1xf32> to vector<8x2xf32>
    %976 = arith.mulf %975, %31 : vector<8x2xf32>
    %977 = arith.addf %973, %976 : vector<8x2xf32>
    %978 = arith.addf %955, %977 : vector<8x2xf32>
    %979 = arith.negf %978 : vector<8x2xf32>
    %980 = math.exp %979 : vector<8x2xf32>
    %cst_160 = arith.constant 1.000000e+00 : f32
    %981 = vector.broadcast %cst_160 : f32 to vector<8x2xf32>
    %982 = arith.addf %981, %980 : vector<8x2xf32>
    %983 = arith.divf %981, %982 : vector<8x2xf32>
    %984 = vector.extract_strided_slice %934 {offsets = [0, 0], sizes = [8, 1], strides = [1, 1]} : vector<8x2xf32> to vector<8x1xf32>
    %985 = vector.broadcast %984 : vector<8x1xf32> to vector<8x2xf32>
    %986 = arith.mulf %985, %34 : vector<8x2xf32>
    %987 = vector.extract_strided_slice %934 {offsets = [0, 1], sizes = [8, 1], strides = [1, 1]} : vector<8x2xf32> to vector<8x1xf32>
    %988 = vector.broadcast %987 : vector<8x1xf32> to vector<8x2xf32>
    %989 = arith.mulf %988, %37 : vector<8x2xf32>
    %990 = arith.addf %986, %989 : vector<8x2xf32>
    %991 = arith.addf %990, %16 : vector<8x2xf32>
    %992 = arith.mulf %970, %991 : vector<8x2xf32>
    %993 = arith.addf %957, %992 : vector<8x2xf32>
    %994 = math.tanh %993 : vector<8x2xf32>
    %cst_161 = arith.constant 1.000000e+00 : f32
    %995 = vector.broadcast %cst_161 : f32 to vector<8x2xf32>
    %996 = arith.subf %995, %983 : vector<8x2xf32>
    %997 = arith.mulf %996, %994 : vector<8x2xf32>
    %998 = arith.mulf %983, %934 : vector<8x2xf32>
    %999 = arith.addf %997, %998 : vector<8x2xf32>
    %1000 = arith.index_cast %c14_i32 : i32 to index
    %c0_162 = arith.constant 0 : index
    %c0_163 = arith.constant 0 : index
    %1001 = vector.load %arg8[%1000, %c0_162, %c0_163] : memref<28x2x128xf32, #tpu.memory_space<vmem>>, vector<1x2x128xf32>
    %1002 = vector.shape_cast %1001 : vector<1x2x128xf32> to vector<2x128xf32>
    %1003 = vector.extract_strided_slice %999 {offsets = [0, 0], sizes = [8, 1], strides = [1, 1]} : vector<8x2xf32> to vector<8x1xf32>
    %1004 = vector.extract_strided_slice %1002 {offsets = [0, 0], sizes = [1, 128], strides = [1, 1]} : vector<2x128xf32> to vector<1x128xf32>
    %1005 = vector.broadcast %1003 : vector<8x1xf32> to vector<8x128xf32>
    %1006 = vector.broadcast %1004 : vector<1x128xf32> to vector<8x128xf32>
    %1007 = arith.mulf %1005, %1006 : vector<8x128xf32>
    %1008 = arith.addf %949, %1007 : vector<8x128xf32>
    %1009 = vector.extract_strided_slice %999 {offsets = [0, 1], sizes = [8, 1], strides = [1, 1]} : vector<8x2xf32> to vector<8x1xf32>
    %1010 = vector.extract_strided_slice %1002 {offsets = [1, 0], sizes = [1, 128], strides = [1, 1]} : vector<2x128xf32> to vector<1x128xf32>
    %1011 = vector.broadcast %1009 : vector<8x1xf32> to vector<8x128xf32>
    %1012 = vector.broadcast %1010 : vector<1x128xf32> to vector<8x128xf32>
    %1013 = arith.mulf %1011, %1012 : vector<8x128xf32>
    %1014 = arith.addf %1008, %1013 : vector<8x128xf32>
    %c15_i32 = arith.constant 15 : i32
    %c8_i32_164 = arith.constant 8 : i32
    %1015 = arith.muli %c15_i32, %c8_i32_164 : i32
    %1016 = tpu.assume_multiple %1015, 8 : i32
    %1017 = arith.index_cast %1016 : i32 to index
    %c0_165 = arith.constant 0 : index
    %1018 = vector.load %arg11[%1017, %c0_165] : memref<224x2xf32, #tpu.memory_space<vmem>>, vector<8x2xf32>
    %1019 = arith.index_cast %1016 : i32 to index
    %c0_166 = arith.constant 0 : index
    %1020 = vector.load %arg12[%1019, %c0_166] : memref<224x2xf32, #tpu.memory_space<vmem>>, vector<8x2xf32>
    %1021 = arith.index_cast %1016 : i32 to index
    %c0_167 = arith.constant 0 : index
    %1022 = vector.load %arg13[%1021, %c0_167] : memref<224x2xf32, #tpu.memory_space<vmem>>, vector<8x2xf32>
    %1023 = vector.extract_strided_slice %999 {offsets = [0, 0], sizes = [8, 1], strides = [1, 1]} : vector<8x2xf32> to vector<8x1xf32>
    %1024 = vector.broadcast %1023 : vector<8x1xf32> to vector<8x2xf32>
    %1025 = arith.mulf %1024, %22 : vector<8x2xf32>
    %1026 = vector.extract_strided_slice %999 {offsets = [0, 1], sizes = [8, 1], strides = [1, 1]} : vector<8x2xf32> to vector<8x1xf32>
    %1027 = vector.broadcast %1026 : vector<8x1xf32> to vector<8x2xf32>
    %1028 = arith.mulf %1027, %25 : vector<8x2xf32>
    %1029 = arith.addf %1025, %1028 : vector<8x2xf32>
    %1030 = arith.addf %1018, %1029 : vector<8x2xf32>
    %1031 = arith.negf %1030 : vector<8x2xf32>
    %1032 = math.exp %1031 : vector<8x2xf32>
    %cst_168 = arith.constant 1.000000e+00 : f32
    %1033 = vector.broadcast %cst_168 : f32 to vector<8x2xf32>
    %1034 = arith.addf %1033, %1032 : vector<8x2xf32>
    %1035 = arith.divf %1033, %1034 : vector<8x2xf32>
    %1036 = vector.extract_strided_slice %999 {offsets = [0, 0], sizes = [8, 1], strides = [1, 1]} : vector<8x2xf32> to vector<8x1xf32>
    %1037 = vector.broadcast %1036 : vector<8x1xf32> to vector<8x2xf32>
    %1038 = arith.mulf %1037, %28 : vector<8x2xf32>
    %1039 = vector.extract_strided_slice %999 {offsets = [0, 1], sizes = [8, 1], strides = [1, 1]} : vector<8x2xf32> to vector<8x1xf32>
    %1040 = vector.broadcast %1039 : vector<8x1xf32> to vector<8x2xf32>
    %1041 = arith.mulf %1040, %31 : vector<8x2xf32>
    %1042 = arith.addf %1038, %1041 : vector<8x2xf32>
    %1043 = arith.addf %1020, %1042 : vector<8x2xf32>
    %1044 = arith.negf %1043 : vector<8x2xf32>
    %1045 = math.exp %1044 : vector<8x2xf32>
    %cst_169 = arith.constant 1.000000e+00 : f32
    %1046 = vector.broadcast %cst_169 : f32 to vector<8x2xf32>
    %1047 = arith.addf %1046, %1045 : vector<8x2xf32>
    %1048 = arith.divf %1046, %1047 : vector<8x2xf32>
    %1049 = vector.extract_strided_slice %999 {offsets = [0, 0], sizes = [8, 1], strides = [1, 1]} : vector<8x2xf32> to vector<8x1xf32>
    %1050 = vector.broadcast %1049 : vector<8x1xf32> to vector<8x2xf32>
    %1051 = arith.mulf %1050, %34 : vector<8x2xf32>
    %1052 = vector.extract_strided_slice %999 {offsets = [0, 1], sizes = [8, 1], strides = [1, 1]} : vector<8x2xf32> to vector<8x1xf32>
    %1053 = vector.broadcast %1052 : vector<8x1xf32> to vector<8x2xf32>
    %1054 = arith.mulf %1053, %37 : vector<8x2xf32>
    %1055 = arith.addf %1051, %1054 : vector<8x2xf32>
    %1056 = arith.addf %1055, %16 : vector<8x2xf32>
    %1057 = arith.mulf %1035, %1056 : vector<8x2xf32>
    %1058 = arith.addf %1022, %1057 : vector<8x2xf32>
    %1059 = math.tanh %1058 : vector<8x2xf32>
    %cst_170 = arith.constant 1.000000e+00 : f32
    %1060 = vector.broadcast %cst_170 : f32 to vector<8x2xf32>
    %1061 = arith.subf %1060, %1048 : vector<8x2xf32>
    %1062 = arith.mulf %1061, %1059 : vector<8x2xf32>
    %1063 = arith.mulf %1048, %999 : vector<8x2xf32>
    %1064 = arith.addf %1062, %1063 : vector<8x2xf32>
    %1065 = arith.index_cast %c15_i32 : i32 to index
    %c0_171 = arith.constant 0 : index
    %c0_172 = arith.constant 0 : index
    %1066 = vector.load %arg8[%1065, %c0_171, %c0_172] : memref<28x2x128xf32, #tpu.memory_space<vmem>>, vector<1x2x128xf32>
    %1067 = vector.shape_cast %1066 : vector<1x2x128xf32> to vector<2x128xf32>
    %1068 = vector.extract_strided_slice %1064 {offsets = [0, 0], sizes = [8, 1], strides = [1, 1]} : vector<8x2xf32> to vector<8x1xf32>
    %1069 = vector.extract_strided_slice %1067 {offsets = [0, 0], sizes = [1, 128], strides = [1, 1]} : vector<2x128xf32> to vector<1x128xf32>
    %1070 = vector.broadcast %1068 : vector<8x1xf32> to vector<8x128xf32>
    %1071 = vector.broadcast %1069 : vector<1x128xf32> to vector<8x128xf32>
    %1072 = arith.mulf %1070, %1071 : vector<8x128xf32>
    %1073 = arith.addf %1014, %1072 : vector<8x128xf32>
    %1074 = vector.extract_strided_slice %1064 {offsets = [0, 1], sizes = [8, 1], strides = [1, 1]} : vector<8x2xf32> to vector<8x1xf32>
    %1075 = vector.extract_strided_slice %1067 {offsets = [1, 0], sizes = [1, 128], strides = [1, 1]} : vector<2x128xf32> to vector<1x128xf32>
    %1076 = vector.broadcast %1074 : vector<8x1xf32> to vector<8x128xf32>
    %1077 = vector.broadcast %1075 : vector<1x128xf32> to vector<8x128xf32>
    %1078 = arith.mulf %1076, %1077 : vector<8x128xf32>
    %1079 = arith.addf %1073, %1078 : vector<8x128xf32>
    %c16_i32 = arith.constant 16 : i32
    %c8_i32_173 = arith.constant 8 : i32
    %1080 = arith.muli %c16_i32, %c8_i32_173 : i32
    %1081 = tpu.assume_multiple %1080, 8 : i32
    %1082 = arith.index_cast %1081 : i32 to index
    %c0_174 = arith.constant 0 : index
    %1083 = vector.load %arg11[%1082, %c0_174] : memref<224x2xf32, #tpu.memory_space<vmem>>, vector<8x2xf32>
    %1084 = arith.index_cast %1081 : i32 to index
    %c0_175 = arith.constant 0 : index
    %1085 = vector.load %arg12[%1084, %c0_175] : memref<224x2xf32, #tpu.memory_space<vmem>>, vector<8x2xf32>
    %1086 = arith.index_cast %1081 : i32 to index
    %c0_176 = arith.constant 0 : index
    %1087 = vector.load %arg13[%1086, %c0_176] : memref<224x2xf32, #tpu.memory_space<vmem>>, vector<8x2xf32>
    %1088 = vector.extract_strided_slice %1064 {offsets = [0, 0], sizes = [8, 1], strides = [1, 1]} : vector<8x2xf32> to vector<8x1xf32>
    %1089 = vector.broadcast %1088 : vector<8x1xf32> to vector<8x2xf32>
    %1090 = arith.mulf %1089, %22 : vector<8x2xf32>
    %1091 = vector.extract_strided_slice %1064 {offsets = [0, 1], sizes = [8, 1], strides = [1, 1]} : vector<8x2xf32> to vector<8x1xf32>
    %1092 = vector.broadcast %1091 : vector<8x1xf32> to vector<8x2xf32>
    %1093 = arith.mulf %1092, %25 : vector<8x2xf32>
    %1094 = arith.addf %1090, %1093 : vector<8x2xf32>
    %1095 = arith.addf %1083, %1094 : vector<8x2xf32>
    %1096 = arith.negf %1095 : vector<8x2xf32>
    %1097 = math.exp %1096 : vector<8x2xf32>
    %cst_177 = arith.constant 1.000000e+00 : f32
    %1098 = vector.broadcast %cst_177 : f32 to vector<8x2xf32>
    %1099 = arith.addf %1098, %1097 : vector<8x2xf32>
    %1100 = arith.divf %1098, %1099 : vector<8x2xf32>
    %1101 = vector.extract_strided_slice %1064 {offsets = [0, 0], sizes = [8, 1], strides = [1, 1]} : vector<8x2xf32> to vector<8x1xf32>
    %1102 = vector.broadcast %1101 : vector<8x1xf32> to vector<8x2xf32>
    %1103 = arith.mulf %1102, %28 : vector<8x2xf32>
    %1104 = vector.extract_strided_slice %1064 {offsets = [0, 1], sizes = [8, 1], strides = [1, 1]} : vector<8x2xf32> to vector<8x1xf32>
    %1105 = vector.broadcast %1104 : vector<8x1xf32> to vector<8x2xf32>
    %1106 = arith.mulf %1105, %31 : vector<8x2xf32>
    %1107 = arith.addf %1103, %1106 : vector<8x2xf32>
    %1108 = arith.addf %1085, %1107 : vector<8x2xf32>
    %1109 = arith.negf %1108 : vector<8x2xf32>
    %1110 = math.exp %1109 : vector<8x2xf32>
    %cst_178 = arith.constant 1.000000e+00 : f32
    %1111 = vector.broadcast %cst_178 : f32 to vector<8x2xf32>
    %1112 = arith.addf %1111, %1110 : vector<8x2xf32>
    %1113 = arith.divf %1111, %1112 : vector<8x2xf32>
    %1114 = vector.extract_strided_slice %1064 {offsets = [0, 0], sizes = [8, 1], strides = [1, 1]} : vector<8x2xf32> to vector<8x1xf32>
    %1115 = vector.broadcast %1114 : vector<8x1xf32> to vector<8x2xf32>
    %1116 = arith.mulf %1115, %34 : vector<8x2xf32>
    %1117 = vector.extract_strided_slice %1064 {offsets = [0, 1], sizes = [8, 1], strides = [1, 1]} : vector<8x2xf32> to vector<8x1xf32>
    %1118 = vector.broadcast %1117 : vector<8x1xf32> to vector<8x2xf32>
    %1119 = arith.mulf %1118, %37 : vector<8x2xf32>
    %1120 = arith.addf %1116, %1119 : vector<8x2xf32>
    %1121 = arith.addf %1120, %16 : vector<8x2xf32>
    %1122 = arith.mulf %1100, %1121 : vector<8x2xf32>
    %1123 = arith.addf %1087, %1122 : vector<8x2xf32>
    %1124 = math.tanh %1123 : vector<8x2xf32>
    %cst_179 = arith.constant 1.000000e+00 : f32
    %1125 = vector.broadcast %cst_179 : f32 to vector<8x2xf32>
    %1126 = arith.subf %1125, %1113 : vector<8x2xf32>
    %1127 = arith.mulf %1126, %1124 : vector<8x2xf32>
    %1128 = arith.mulf %1113, %1064 : vector<8x2xf32>
    %1129 = arith.addf %1127, %1128 : vector<8x2xf32>
    %1130 = arith.index_cast %c16_i32 : i32 to index
    %c0_180 = arith.constant 0 : index
    %c0_181 = arith.constant 0 : index
    %1131 = vector.load %arg8[%1130, %c0_180, %c0_181] : memref<28x2x128xf32, #tpu.memory_space<vmem>>, vector<1x2x128xf32>
    %1132 = vector.shape_cast %1131 : vector<1x2x128xf32> to vector<2x128xf32>
    %1133 = vector.extract_strided_slice %1129 {offsets = [0, 0], sizes = [8, 1], strides = [1, 1]} : vector<8x2xf32> to vector<8x1xf32>
    %1134 = vector.extract_strided_slice %1132 {offsets = [0, 0], sizes = [1, 128], strides = [1, 1]} : vector<2x128xf32> to vector<1x128xf32>
    %1135 = vector.broadcast %1133 : vector<8x1xf32> to vector<8x128xf32>
    %1136 = vector.broadcast %1134 : vector<1x128xf32> to vector<8x128xf32>
    %1137 = arith.mulf %1135, %1136 : vector<8x128xf32>
    %1138 = arith.addf %1079, %1137 : vector<8x128xf32>
    %1139 = vector.extract_strided_slice %1129 {offsets = [0, 1], sizes = [8, 1], strides = [1, 1]} : vector<8x2xf32> to vector<8x1xf32>
    %1140 = vector.extract_strided_slice %1132 {offsets = [1, 0], sizes = [1, 128], strides = [1, 1]} : vector<2x128xf32> to vector<1x128xf32>
    %1141 = vector.broadcast %1139 : vector<8x1xf32> to vector<8x128xf32>
    %1142 = vector.broadcast %1140 : vector<1x128xf32> to vector<8x128xf32>
    %1143 = arith.mulf %1141, %1142 : vector<8x128xf32>
    %1144 = arith.addf %1138, %1143 : vector<8x128xf32>
    %c17_i32 = arith.constant 17 : i32
    %c8_i32_182 = arith.constant 8 : i32
    %1145 = arith.muli %c17_i32, %c8_i32_182 : i32
    %1146 = tpu.assume_multiple %1145, 8 : i32
    %1147 = arith.index_cast %1146 : i32 to index
    %c0_183 = arith.constant 0 : index
    %1148 = vector.load %arg11[%1147, %c0_183] : memref<224x2xf32, #tpu.memory_space<vmem>>, vector<8x2xf32>
    %1149 = arith.index_cast %1146 : i32 to index
    %c0_184 = arith.constant 0 : index
    %1150 = vector.load %arg12[%1149, %c0_184] : memref<224x2xf32, #tpu.memory_space<vmem>>, vector<8x2xf32>
    %1151 = arith.index_cast %1146 : i32 to index
    %c0_185 = arith.constant 0 : index
    %1152 = vector.load %arg13[%1151, %c0_185] : memref<224x2xf32, #tpu.memory_space<vmem>>, vector<8x2xf32>
    %1153 = vector.extract_strided_slice %1129 {offsets = [0, 0], sizes = [8, 1], strides = [1, 1]} : vector<8x2xf32> to vector<8x1xf32>
    %1154 = vector.broadcast %1153 : vector<8x1xf32> to vector<8x2xf32>
    %1155 = arith.mulf %1154, %22 : vector<8x2xf32>
    %1156 = vector.extract_strided_slice %1129 {offsets = [0, 1], sizes = [8, 1], strides = [1, 1]} : vector<8x2xf32> to vector<8x1xf32>
    %1157 = vector.broadcast %1156 : vector<8x1xf32> to vector<8x2xf32>
    %1158 = arith.mulf %1157, %25 : vector<8x2xf32>
    %1159 = arith.addf %1155, %1158 : vector<8x2xf32>
    %1160 = arith.addf %1148, %1159 : vector<8x2xf32>
    %1161 = arith.negf %1160 : vector<8x2xf32>
    %1162 = math.exp %1161 : vector<8x2xf32>
    %cst_186 = arith.constant 1.000000e+00 : f32
    %1163 = vector.broadcast %cst_186 : f32 to vector<8x2xf32>
    %1164 = arith.addf %1163, %1162 : vector<8x2xf32>
    %1165 = arith.divf %1163, %1164 : vector<8x2xf32>
    %1166 = vector.extract_strided_slice %1129 {offsets = [0, 0], sizes = [8, 1], strides = [1, 1]} : vector<8x2xf32> to vector<8x1xf32>
    %1167 = vector.broadcast %1166 : vector<8x1xf32> to vector<8x2xf32>
    %1168 = arith.mulf %1167, %28 : vector<8x2xf32>
    %1169 = vector.extract_strided_slice %1129 {offsets = [0, 1], sizes = [8, 1], strides = [1, 1]} : vector<8x2xf32> to vector<8x1xf32>
    %1170 = vector.broadcast %1169 : vector<8x1xf32> to vector<8x2xf32>
    %1171 = arith.mulf %1170, %31 : vector<8x2xf32>
    %1172 = arith.addf %1168, %1171 : vector<8x2xf32>
    %1173 = arith.addf %1150, %1172 : vector<8x2xf32>
    %1174 = arith.negf %1173 : vector<8x2xf32>
    %1175 = math.exp %1174 : vector<8x2xf32>
    %cst_187 = arith.constant 1.000000e+00 : f32
    %1176 = vector.broadcast %cst_187 : f32 to vector<8x2xf32>
    %1177 = arith.addf %1176, %1175 : vector<8x2xf32>
    %1178 = arith.divf %1176, %1177 : vector<8x2xf32>
    %1179 = vector.extract_strided_slice %1129 {offsets = [0, 0], sizes = [8, 1], strides = [1, 1]} : vector<8x2xf32> to vector<8x1xf32>
    %1180 = vector.broadcast %1179 : vector<8x1xf32> to vector<8x2xf32>
    %1181 = arith.mulf %1180, %34 : vector<8x2xf32>
    %1182 = vector.extract_strided_slice %1129 {offsets = [0, 1], sizes = [8, 1], strides = [1, 1]} : vector<8x2xf32> to vector<8x1xf32>
    %1183 = vector.broadcast %1182 : vector<8x1xf32> to vector<8x2xf32>
    %1184 = arith.mulf %1183, %37 : vector<8x2xf32>
    %1185 = arith.addf %1181, %1184 : vector<8x2xf32>
    %1186 = arith.addf %1185, %16 : vector<8x2xf32>
    %1187 = arith.mulf %1165, %1186 : vector<8x2xf32>
    %1188 = arith.addf %1152, %1187 : vector<8x2xf32>
    %1189 = math.tanh %1188 : vector<8x2xf32>
    %cst_188 = arith.constant 1.000000e+00 : f32
    %1190 = vector.broadcast %cst_188 : f32 to vector<8x2xf32>
    %1191 = arith.subf %1190, %1178 : vector<8x2xf32>
    %1192 = arith.mulf %1191, %1189 : vector<8x2xf32>
    %1193 = arith.mulf %1178, %1129 : vector<8x2xf32>
    %1194 = arith.addf %1192, %1193 : vector<8x2xf32>
    %1195 = arith.index_cast %c17_i32 : i32 to index
    %c0_189 = arith.constant 0 : index
    %c0_190 = arith.constant 0 : index
    %1196 = vector.load %arg8[%1195, %c0_189, %c0_190] : memref<28x2x128xf32, #tpu.memory_space<vmem>>, vector<1x2x128xf32>
    %1197 = vector.shape_cast %1196 : vector<1x2x128xf32> to vector<2x128xf32>
    %1198 = vector.extract_strided_slice %1194 {offsets = [0, 0], sizes = [8, 1], strides = [1, 1]} : vector<8x2xf32> to vector<8x1xf32>
    %1199 = vector.extract_strided_slice %1197 {offsets = [0, 0], sizes = [1, 128], strides = [1, 1]} : vector<2x128xf32> to vector<1x128xf32>
    %1200 = vector.broadcast %1198 : vector<8x1xf32> to vector<8x128xf32>
    %1201 = vector.broadcast %1199 : vector<1x128xf32> to vector<8x128xf32>
    %1202 = arith.mulf %1200, %1201 : vector<8x128xf32>
    %1203 = arith.addf %1144, %1202 : vector<8x128xf32>
    %1204 = vector.extract_strided_slice %1194 {offsets = [0, 1], sizes = [8, 1], strides = [1, 1]} : vector<8x2xf32> to vector<8x1xf32>
    %1205 = vector.extract_strided_slice %1197 {offsets = [1, 0], sizes = [1, 128], strides = [1, 1]} : vector<2x128xf32> to vector<1x128xf32>
    %1206 = vector.broadcast %1204 : vector<8x1xf32> to vector<8x128xf32>
    %1207 = vector.broadcast %1205 : vector<1x128xf32> to vector<8x128xf32>
    %1208 = arith.mulf %1206, %1207 : vector<8x128xf32>
    %1209 = arith.addf %1203, %1208 : vector<8x128xf32>
    %c18_i32 = arith.constant 18 : i32
    %c8_i32_191 = arith.constant 8 : i32
    %1210 = arith.muli %c18_i32, %c8_i32_191 : i32
    %1211 = tpu.assume_multiple %1210, 8 : i32
    %1212 = arith.index_cast %1211 : i32 to index
    %c0_192 = arith.constant 0 : index
    %1213 = vector.load %arg11[%1212, %c0_192] : memref<224x2xf32, #tpu.memory_space<vmem>>, vector<8x2xf32>
    %1214 = arith.index_cast %1211 : i32 to index
    %c0_193 = arith.constant 0 : index
    %1215 = vector.load %arg12[%1214, %c0_193] : memref<224x2xf32, #tpu.memory_space<vmem>>, vector<8x2xf32>
    %1216 = arith.index_cast %1211 : i32 to index
    %c0_194 = arith.constant 0 : index
    %1217 = vector.load %arg13[%1216, %c0_194] : memref<224x2xf32, #tpu.memory_space<vmem>>, vector<8x2xf32>
    %1218 = vector.extract_strided_slice %1194 {offsets = [0, 0], sizes = [8, 1], strides = [1, 1]} : vector<8x2xf32> to vector<8x1xf32>
    %1219 = vector.broadcast %1218 : vector<8x1xf32> to vector<8x2xf32>
    %1220 = arith.mulf %1219, %22 : vector<8x2xf32>
    %1221 = vector.extract_strided_slice %1194 {offsets = [0, 1], sizes = [8, 1], strides = [1, 1]} : vector<8x2xf32> to vector<8x1xf32>
    %1222 = vector.broadcast %1221 : vector<8x1xf32> to vector<8x2xf32>
    %1223 = arith.mulf %1222, %25 : vector<8x2xf32>
    %1224 = arith.addf %1220, %1223 : vector<8x2xf32>
    %1225 = arith.addf %1213, %1224 : vector<8x2xf32>
    %1226 = arith.negf %1225 : vector<8x2xf32>
    %1227 = math.exp %1226 : vector<8x2xf32>
    %cst_195 = arith.constant 1.000000e+00 : f32
    %1228 = vector.broadcast %cst_195 : f32 to vector<8x2xf32>
    %1229 = arith.addf %1228, %1227 : vector<8x2xf32>
    %1230 = arith.divf %1228, %1229 : vector<8x2xf32>
    %1231 = vector.extract_strided_slice %1194 {offsets = [0, 0], sizes = [8, 1], strides = [1, 1]} : vector<8x2xf32> to vector<8x1xf32>
    %1232 = vector.broadcast %1231 : vector<8x1xf32> to vector<8x2xf32>
    %1233 = arith.mulf %1232, %28 : vector<8x2xf32>
    %1234 = vector.extract_strided_slice %1194 {offsets = [0, 1], sizes = [8, 1], strides = [1, 1]} : vector<8x2xf32> to vector<8x1xf32>
    %1235 = vector.broadcast %1234 : vector<8x1xf32> to vector<8x2xf32>
    %1236 = arith.mulf %1235, %31 : vector<8x2xf32>
    %1237 = arith.addf %1233, %1236 : vector<8x2xf32>
    %1238 = arith.addf %1215, %1237 : vector<8x2xf32>
    %1239 = arith.negf %1238 : vector<8x2xf32>
    %1240 = math.exp %1239 : vector<8x2xf32>
    %cst_196 = arith.constant 1.000000e+00 : f32
    %1241 = vector.broadcast %cst_196 : f32 to vector<8x2xf32>
    %1242 = arith.addf %1241, %1240 : vector<8x2xf32>
    %1243 = arith.divf %1241, %1242 : vector<8x2xf32>
    %1244 = vector.extract_strided_slice %1194 {offsets = [0, 0], sizes = [8, 1], strides = [1, 1]} : vector<8x2xf32> to vector<8x1xf32>
    %1245 = vector.broadcast %1244 : vector<8x1xf32> to vector<8x2xf32>
    %1246 = arith.mulf %1245, %34 : vector<8x2xf32>
    %1247 = vector.extract_strided_slice %1194 {offsets = [0, 1], sizes = [8, 1], strides = [1, 1]} : vector<8x2xf32> to vector<8x1xf32>
    %1248 = vector.broadcast %1247 : vector<8x1xf32> to vector<8x2xf32>
    %1249 = arith.mulf %1248, %37 : vector<8x2xf32>
    %1250 = arith.addf %1246, %1249 : vector<8x2xf32>
    %1251 = arith.addf %1250, %16 : vector<8x2xf32>
    %1252 = arith.mulf %1230, %1251 : vector<8x2xf32>
    %1253 = arith.addf %1217, %1252 : vector<8x2xf32>
    %1254 = math.tanh %1253 : vector<8x2xf32>
    %cst_197 = arith.constant 1.000000e+00 : f32
    %1255 = vector.broadcast %cst_197 : f32 to vector<8x2xf32>
    %1256 = arith.subf %1255, %1243 : vector<8x2xf32>
    %1257 = arith.mulf %1256, %1254 : vector<8x2xf32>
    %1258 = arith.mulf %1243, %1194 : vector<8x2xf32>
    %1259 = arith.addf %1257, %1258 : vector<8x2xf32>
    %1260 = arith.index_cast %c18_i32 : i32 to index
    %c0_198 = arith.constant 0 : index
    %c0_199 = arith.constant 0 : index
    %1261 = vector.load %arg8[%1260, %c0_198, %c0_199] : memref<28x2x128xf32, #tpu.memory_space<vmem>>, vector<1x2x128xf32>
    %1262 = vector.shape_cast %1261 : vector<1x2x128xf32> to vector<2x128xf32>
    %1263 = vector.extract_strided_slice %1259 {offsets = [0, 0], sizes = [8, 1], strides = [1, 1]} : vector<8x2xf32> to vector<8x1xf32>
    %1264 = vector.extract_strided_slice %1262 {offsets = [0, 0], sizes = [1, 128], strides = [1, 1]} : vector<2x128xf32> to vector<1x128xf32>
    %1265 = vector.broadcast %1263 : vector<8x1xf32> to vector<8x128xf32>
    %1266 = vector.broadcast %1264 : vector<1x128xf32> to vector<8x128xf32>
    %1267 = arith.mulf %1265, %1266 : vector<8x128xf32>
    %1268 = arith.addf %1209, %1267 : vector<8x128xf32>
    %1269 = vector.extract_strided_slice %1259 {offsets = [0, 1], sizes = [8, 1], strides = [1, 1]} : vector<8x2xf32> to vector<8x1xf32>
    %1270 = vector.extract_strided_slice %1262 {offsets = [1, 0], sizes = [1, 128], strides = [1, 1]} : vector<2x128xf32> to vector<1x128xf32>
    %1271 = vector.broadcast %1269 : vector<8x1xf32> to vector<8x128xf32>
    %1272 = vector.broadcast %1270 : vector<1x128xf32> to vector<8x128xf32>
    %1273 = arith.mulf %1271, %1272 : vector<8x128xf32>
    %1274 = arith.addf %1268, %1273 : vector<8x128xf32>
    %c19_i32 = arith.constant 19 : i32
    %c8_i32_200 = arith.constant 8 : i32
    %1275 = arith.muli %c19_i32, %c8_i32_200 : i32
    %1276 = tpu.assume_multiple %1275, 8 : i32
    %1277 = arith.index_cast %1276 : i32 to index
    %c0_201 = arith.constant 0 : index
    %1278 = vector.load %arg11[%1277, %c0_201] : memref<224x2xf32, #tpu.memory_space<vmem>>, vector<8x2xf32>
    %1279 = arith.index_cast %1276 : i32 to index
    %c0_202 = arith.constant 0 : index
    %1280 = vector.load %arg12[%1279, %c0_202] : memref<224x2xf32, #tpu.memory_space<vmem>>, vector<8x2xf32>
    %1281 = arith.index_cast %1276 : i32 to index
    %c0_203 = arith.constant 0 : index
    %1282 = vector.load %arg13[%1281, %c0_203] : memref<224x2xf32, #tpu.memory_space<vmem>>, vector<8x2xf32>
    %1283 = vector.extract_strided_slice %1259 {offsets = [0, 0], sizes = [8, 1], strides = [1, 1]} : vector<8x2xf32> to vector<8x1xf32>
    %1284 = vector.broadcast %1283 : vector<8x1xf32> to vector<8x2xf32>
    %1285 = arith.mulf %1284, %22 : vector<8x2xf32>
    %1286 = vector.extract_strided_slice %1259 {offsets = [0, 1], sizes = [8, 1], strides = [1, 1]} : vector<8x2xf32> to vector<8x1xf32>
    %1287 = vector.broadcast %1286 : vector<8x1xf32> to vector<8x2xf32>
    %1288 = arith.mulf %1287, %25 : vector<8x2xf32>
    %1289 = arith.addf %1285, %1288 : vector<8x2xf32>
    %1290 = arith.addf %1278, %1289 : vector<8x2xf32>
    %1291 = arith.negf %1290 : vector<8x2xf32>
    %1292 = math.exp %1291 : vector<8x2xf32>
    %cst_204 = arith.constant 1.000000e+00 : f32
    %1293 = vector.broadcast %cst_204 : f32 to vector<8x2xf32>
    %1294 = arith.addf %1293, %1292 : vector<8x2xf32>
    %1295 = arith.divf %1293, %1294 : vector<8x2xf32>
    %1296 = vector.extract_strided_slice %1259 {offsets = [0, 0], sizes = [8, 1], strides = [1, 1]} : vector<8x2xf32> to vector<8x1xf32>
    %1297 = vector.broadcast %1296 : vector<8x1xf32> to vector<8x2xf32>
    %1298 = arith.mulf %1297, %28 : vector<8x2xf32>
    %1299 = vector.extract_strided_slice %1259 {offsets = [0, 1], sizes = [8, 1], strides = [1, 1]} : vector<8x2xf32> to vector<8x1xf32>
    %1300 = vector.broadcast %1299 : vector<8x1xf32> to vector<8x2xf32>
    %1301 = arith.mulf %1300, %31 : vector<8x2xf32>
    %1302 = arith.addf %1298, %1301 : vector<8x2xf32>
    %1303 = arith.addf %1280, %1302 : vector<8x2xf32>
    %1304 = arith.negf %1303 : vector<8x2xf32>
    %1305 = math.exp %1304 : vector<8x2xf32>
    %cst_205 = arith.constant 1.000000e+00 : f32
    %1306 = vector.broadcast %cst_205 : f32 to vector<8x2xf32>
    %1307 = arith.addf %1306, %1305 : vector<8x2xf32>
    %1308 = arith.divf %1306, %1307 : vector<8x2xf32>
    %1309 = vector.extract_strided_slice %1259 {offsets = [0, 0], sizes = [8, 1], strides = [1, 1]} : vector<8x2xf32> to vector<8x1xf32>
    %1310 = vector.broadcast %1309 : vector<8x1xf32> to vector<8x2xf32>
    %1311 = arith.mulf %1310, %34 : vector<8x2xf32>
    %1312 = vector.extract_strided_slice %1259 {offsets = [0, 1], sizes = [8, 1], strides = [1, 1]} : vector<8x2xf32> to vector<8x1xf32>
    %1313 = vector.broadcast %1312 : vector<8x1xf32> to vector<8x2xf32>
    %1314 = arith.mulf %1313, %37 : vector<8x2xf32>
    %1315 = arith.addf %1311, %1314 : vector<8x2xf32>
    %1316 = arith.addf %1315, %16 : vector<8x2xf32>
    %1317 = arith.mulf %1295, %1316 : vector<8x2xf32>
    %1318 = arith.addf %1282, %1317 : vector<8x2xf32>
    %1319 = math.tanh %1318 : vector<8x2xf32>
    %cst_206 = arith.constant 1.000000e+00 : f32
    %1320 = vector.broadcast %cst_206 : f32 to vector<8x2xf32>
    %1321 = arith.subf %1320, %1308 : vector<8x2xf32>
    %1322 = arith.mulf %1321, %1319 : vector<8x2xf32>
    %1323 = arith.mulf %1308, %1259 : vector<8x2xf32>
    %1324 = arith.addf %1322, %1323 : vector<8x2xf32>
    %1325 = arith.index_cast %c19_i32 : i32 to index
    %c0_207 = arith.constant 0 : index
    %c0_208 = arith.constant 0 : index
    %1326 = vector.load %arg8[%1325, %c0_207, %c0_208] : memref<28x2x128xf32, #tpu.memory_space<vmem>>, vector<1x2x128xf32>
    %1327 = vector.shape_cast %1326 : vector<1x2x128xf32> to vector<2x128xf32>
    %1328 = vector.extract_strided_slice %1324 {offsets = [0, 0], sizes = [8, 1], strides = [1, 1]} : vector<8x2xf32> to vector<8x1xf32>
    %1329 = vector.extract_strided_slice %1327 {offsets = [0, 0], sizes = [1, 128], strides = [1, 1]} : vector<2x128xf32> to vector<1x128xf32>
    %1330 = vector.broadcast %1328 : vector<8x1xf32> to vector<8x128xf32>
    %1331 = vector.broadcast %1329 : vector<1x128xf32> to vector<8x128xf32>
    %1332 = arith.mulf %1330, %1331 : vector<8x128xf32>
    %1333 = arith.addf %1274, %1332 : vector<8x128xf32>
    %1334 = vector.extract_strided_slice %1324 {offsets = [0, 1], sizes = [8, 1], strides = [1, 1]} : vector<8x2xf32> to vector<8x1xf32>
    %1335 = vector.extract_strided_slice %1327 {offsets = [1, 0], sizes = [1, 128], strides = [1, 1]} : vector<2x128xf32> to vector<1x128xf32>
    %1336 = vector.broadcast %1334 : vector<8x1xf32> to vector<8x128xf32>
    %1337 = vector.broadcast %1335 : vector<1x128xf32> to vector<8x128xf32>
    %1338 = arith.mulf %1336, %1337 : vector<8x128xf32>
    %1339 = arith.addf %1333, %1338 : vector<8x128xf32>
    %c20_i32 = arith.constant 20 : i32
    %c8_i32_209 = arith.constant 8 : i32
    %1340 = arith.muli %c20_i32, %c8_i32_209 : i32
    %1341 = tpu.assume_multiple %1340, 8 : i32
    %1342 = arith.index_cast %1341 : i32 to index
    %c0_210 = arith.constant 0 : index
    %1343 = vector.load %arg11[%1342, %c0_210] : memref<224x2xf32, #tpu.memory_space<vmem>>, vector<8x2xf32>
    %1344 = arith.index_cast %1341 : i32 to index
    %c0_211 = arith.constant 0 : index
    %1345 = vector.load %arg12[%1344, %c0_211] : memref<224x2xf32, #tpu.memory_space<vmem>>, vector<8x2xf32>
    %1346 = arith.index_cast %1341 : i32 to index
    %c0_212 = arith.constant 0 : index
    %1347 = vector.load %arg13[%1346, %c0_212] : memref<224x2xf32, #tpu.memory_space<vmem>>, vector<8x2xf32>
    %1348 = vector.extract_strided_slice %1324 {offsets = [0, 0], sizes = [8, 1], strides = [1, 1]} : vector<8x2xf32> to vector<8x1xf32>
    %1349 = vector.broadcast %1348 : vector<8x1xf32> to vector<8x2xf32>
    %1350 = arith.mulf %1349, %22 : vector<8x2xf32>
    %1351 = vector.extract_strided_slice %1324 {offsets = [0, 1], sizes = [8, 1], strides = [1, 1]} : vector<8x2xf32> to vector<8x1xf32>
    %1352 = vector.broadcast %1351 : vector<8x1xf32> to vector<8x2xf32>
    %1353 = arith.mulf %1352, %25 : vector<8x2xf32>
    %1354 = arith.addf %1350, %1353 : vector<8x2xf32>
    %1355 = arith.addf %1343, %1354 : vector<8x2xf32>
    %1356 = arith.negf %1355 : vector<8x2xf32>
    %1357 = math.exp %1356 : vector<8x2xf32>
    %cst_213 = arith.constant 1.000000e+00 : f32
    %1358 = vector.broadcast %cst_213 : f32 to vector<8x2xf32>
    %1359 = arith.addf %1358, %1357 : vector<8x2xf32>
    %1360 = arith.divf %1358, %1359 : vector<8x2xf32>
    %1361 = vector.extract_strided_slice %1324 {offsets = [0, 0], sizes = [8, 1], strides = [1, 1]} : vector<8x2xf32> to vector<8x1xf32>
    %1362 = vector.broadcast %1361 : vector<8x1xf32> to vector<8x2xf32>
    %1363 = arith.mulf %1362, %28 : vector<8x2xf32>
    %1364 = vector.extract_strided_slice %1324 {offsets = [0, 1], sizes = [8, 1], strides = [1, 1]} : vector<8x2xf32> to vector<8x1xf32>
    %1365 = vector.broadcast %1364 : vector<8x1xf32> to vector<8x2xf32>
    %1366 = arith.mulf %1365, %31 : vector<8x2xf32>
    %1367 = arith.addf %1363, %1366 : vector<8x2xf32>
    %1368 = arith.addf %1345, %1367 : vector<8x2xf32>
    %1369 = arith.negf %1368 : vector<8x2xf32>
    %1370 = math.exp %1369 : vector<8x2xf32>
    %cst_214 = arith.constant 1.000000e+00 : f32
    %1371 = vector.broadcast %cst_214 : f32 to vector<8x2xf32>
    %1372 = arith.addf %1371, %1370 : vector<8x2xf32>
    %1373 = arith.divf %1371, %1372 : vector<8x2xf32>
    %1374 = vector.extract_strided_slice %1324 {offsets = [0, 0], sizes = [8, 1], strides = [1, 1]} : vector<8x2xf32> to vector<8x1xf32>
    %1375 = vector.broadcast %1374 : vector<8x1xf32> to vector<8x2xf32>
    %1376 = arith.mulf %1375, %34 : vector<8x2xf32>
    %1377 = vector.extract_strided_slice %1324 {offsets = [0, 1], sizes = [8, 1], strides = [1, 1]} : vector<8x2xf32> to vector<8x1xf32>
    %1378 = vector.broadcast %1377 : vector<8x1xf32> to vector<8x2xf32>
    %1379 = arith.mulf %1378, %37 : vector<8x2xf32>
    %1380 = arith.addf %1376, %1379 : vector<8x2xf32>
    %1381 = arith.addf %1380, %16 : vector<8x2xf32>
    %1382 = arith.mulf %1360, %1381 : vector<8x2xf32>
    %1383 = arith.addf %1347, %1382 : vector<8x2xf32>
    %1384 = math.tanh %1383 : vector<8x2xf32>
    %cst_215 = arith.constant 1.000000e+00 : f32
    %1385 = vector.broadcast %cst_215 : f32 to vector<8x2xf32>
    %1386 = arith.subf %1385, %1373 : vector<8x2xf32>
    %1387 = arith.mulf %1386, %1384 : vector<8x2xf32>
    %1388 = arith.mulf %1373, %1324 : vector<8x2xf32>
    %1389 = arith.addf %1387, %1388 : vector<8x2xf32>
    %1390 = arith.index_cast %c20_i32 : i32 to index
    %c0_216 = arith.constant 0 : index
    %c0_217 = arith.constant 0 : index
    %1391 = vector.load %arg8[%1390, %c0_216, %c0_217] : memref<28x2x128xf32, #tpu.memory_space<vmem>>, vector<1x2x128xf32>
    %1392 = vector.shape_cast %1391 : vector<1x2x128xf32> to vector<2x128xf32>
    %1393 = vector.extract_strided_slice %1389 {offsets = [0, 0], sizes = [8, 1], strides = [1, 1]} : vector<8x2xf32> to vector<8x1xf32>
    %1394 = vector.extract_strided_slice %1392 {offsets = [0, 0], sizes = [1, 128], strides = [1, 1]} : vector<2x128xf32> to vector<1x128xf32>
    %1395 = vector.broadcast %1393 : vector<8x1xf32> to vector<8x128xf32>
    %1396 = vector.broadcast %1394 : vector<1x128xf32> to vector<8x128xf32>
    %1397 = arith.mulf %1395, %1396 : vector<8x128xf32>
    %1398 = arith.addf %1339, %1397 : vector<8x128xf32>
    %1399 = vector.extract_strided_slice %1389 {offsets = [0, 1], sizes = [8, 1], strides = [1, 1]} : vector<8x2xf32> to vector<8x1xf32>
    %1400 = vector.extract_strided_slice %1392 {offsets = [1, 0], sizes = [1, 128], strides = [1, 1]} : vector<2x128xf32> to vector<1x128xf32>
    %1401 = vector.broadcast %1399 : vector<8x1xf32> to vector<8x128xf32>
    %1402 = vector.broadcast %1400 : vector<1x128xf32> to vector<8x128xf32>
    %1403 = arith.mulf %1401, %1402 : vector<8x128xf32>
    %1404 = arith.addf %1398, %1403 : vector<8x128xf32>
    %c21_i32 = arith.constant 21 : i32
    %c8_i32_218 = arith.constant 8 : i32
    %1405 = arith.muli %c21_i32, %c8_i32_218 : i32
    %1406 = tpu.assume_multiple %1405, 8 : i32
    %1407 = arith.index_cast %1406 : i32 to index
    %c0_219 = arith.constant 0 : index
    %1408 = vector.load %arg11[%1407, %c0_219] : memref<224x2xf32, #tpu.memory_space<vmem>>, vector<8x2xf32>
    %1409 = arith.index_cast %1406 : i32 to index
    %c0_220 = arith.constant 0 : index
    %1410 = vector.load %arg12[%1409, %c0_220] : memref<224x2xf32, #tpu.memory_space<vmem>>, vector<8x2xf32>
    %1411 = arith.index_cast %1406 : i32 to index
    %c0_221 = arith.constant 0 : index
    %1412 = vector.load %arg13[%1411, %c0_221] : memref<224x2xf32, #tpu.memory_space<vmem>>, vector<8x2xf32>
    %1413 = vector.extract_strided_slice %1389 {offsets = [0, 0], sizes = [8, 1], strides = [1, 1]} : vector<8x2xf32> to vector<8x1xf32>
    %1414 = vector.broadcast %1413 : vector<8x1xf32> to vector<8x2xf32>
    %1415 = arith.mulf %1414, %22 : vector<8x2xf32>
    %1416 = vector.extract_strided_slice %1389 {offsets = [0, 1], sizes = [8, 1], strides = [1, 1]} : vector<8x2xf32> to vector<8x1xf32>
    %1417 = vector.broadcast %1416 : vector<8x1xf32> to vector<8x2xf32>
    %1418 = arith.mulf %1417, %25 : vector<8x2xf32>
    %1419 = arith.addf %1415, %1418 : vector<8x2xf32>
    %1420 = arith.addf %1408, %1419 : vector<8x2xf32>
    %1421 = arith.negf %1420 : vector<8x2xf32>
    %1422 = math.exp %1421 : vector<8x2xf32>
    %cst_222 = arith.constant 1.000000e+00 : f32
    %1423 = vector.broadcast %cst_222 : f32 to vector<8x2xf32>
    %1424 = arith.addf %1423, %1422 : vector<8x2xf32>
    %1425 = arith.divf %1423, %1424 : vector<8x2xf32>
    %1426 = vector.extract_strided_slice %1389 {offsets = [0, 0], sizes = [8, 1], strides = [1, 1]} : vector<8x2xf32> to vector<8x1xf32>
    %1427 = vector.broadcast %1426 : vector<8x1xf32> to vector<8x2xf32>
    %1428 = arith.mulf %1427, %28 : vector<8x2xf32>
    %1429 = vector.extract_strided_slice %1389 {offsets = [0, 1], sizes = [8, 1], strides = [1, 1]} : vector<8x2xf32> to vector<8x1xf32>
    %1430 = vector.broadcast %1429 : vector<8x1xf32> to vector<8x2xf32>
    %1431 = arith.mulf %1430, %31 : vector<8x2xf32>
    %1432 = arith.addf %1428, %1431 : vector<8x2xf32>
    %1433 = arith.addf %1410, %1432 : vector<8x2xf32>
    %1434 = arith.negf %1433 : vector<8x2xf32>
    %1435 = math.exp %1434 : vector<8x2xf32>
    %cst_223 = arith.constant 1.000000e+00 : f32
    %1436 = vector.broadcast %cst_223 : f32 to vector<8x2xf32>
    %1437 = arith.addf %1436, %1435 : vector<8x2xf32>
    %1438 = arith.divf %1436, %1437 : vector<8x2xf32>
    %1439 = vector.extract_strided_slice %1389 {offsets = [0, 0], sizes = [8, 1], strides = [1, 1]} : vector<8x2xf32> to vector<8x1xf32>
    %1440 = vector.broadcast %1439 : vector<8x1xf32> to vector<8x2xf32>
    %1441 = arith.mulf %1440, %34 : vector<8x2xf32>
    %1442 = vector.extract_strided_slice %1389 {offsets = [0, 1], sizes = [8, 1], strides = [1, 1]} : vector<8x2xf32> to vector<8x1xf32>
    %1443 = vector.broadcast %1442 : vector<8x1xf32> to vector<8x2xf32>
    %1444 = arith.mulf %1443, %37 : vector<8x2xf32>
    %1445 = arith.addf %1441, %1444 : vector<8x2xf32>
    %1446 = arith.addf %1445, %16 : vector<8x2xf32>
    %1447 = arith.mulf %1425, %1446 : vector<8x2xf32>
    %1448 = arith.addf %1412, %1447 : vector<8x2xf32>
    %1449 = math.tanh %1448 : vector<8x2xf32>
    %cst_224 = arith.constant 1.000000e+00 : f32
    %1450 = vector.broadcast %cst_224 : f32 to vector<8x2xf32>
    %1451 = arith.subf %1450, %1438 : vector<8x2xf32>
    %1452 = arith.mulf %1451, %1449 : vector<8x2xf32>
    %1453 = arith.mulf %1438, %1389 : vector<8x2xf32>
    %1454 = arith.addf %1452, %1453 : vector<8x2xf32>
    %1455 = arith.index_cast %c21_i32 : i32 to index
    %c0_225 = arith.constant 0 : index
    %c0_226 = arith.constant 0 : index
    %1456 = vector.load %arg8[%1455, %c0_225, %c0_226] : memref<28x2x128xf32, #tpu.memory_space<vmem>>, vector<1x2x128xf32>
    %1457 = vector.shape_cast %1456 : vector<1x2x128xf32> to vector<2x128xf32>
    %1458 = vector.extract_strided_slice %1454 {offsets = [0, 0], sizes = [8, 1], strides = [1, 1]} : vector<8x2xf32> to vector<8x1xf32>
    %1459 = vector.extract_strided_slice %1457 {offsets = [0, 0], sizes = [1, 128], strides = [1, 1]} : vector<2x128xf32> to vector<1x128xf32>
    %1460 = vector.broadcast %1458 : vector<8x1xf32> to vector<8x128xf32>
    %1461 = vector.broadcast %1459 : vector<1x128xf32> to vector<8x128xf32>
    %1462 = arith.mulf %1460, %1461 : vector<8x128xf32>
    %1463 = arith.addf %1404, %1462 : vector<8x128xf32>
    %1464 = vector.extract_strided_slice %1454 {offsets = [0, 1], sizes = [8, 1], strides = [1, 1]} : vector<8x2xf32> to vector<8x1xf32>
    %1465 = vector.extract_strided_slice %1457 {offsets = [1, 0], sizes = [1, 128], strides = [1, 1]} : vector<2x128xf32> to vector<1x128xf32>
    %1466 = vector.broadcast %1464 : vector<8x1xf32> to vector<8x128xf32>
    %1467 = vector.broadcast %1465 : vector<1x128xf32> to vector<8x128xf32>
    %1468 = arith.mulf %1466, %1467 : vector<8x128xf32>
    %1469 = arith.addf %1463, %1468 : vector<8x128xf32>
    %c22_i32 = arith.constant 22 : i32
    %c8_i32_227 = arith.constant 8 : i32
    %1470 = arith.muli %c22_i32, %c8_i32_227 : i32
    %1471 = tpu.assume_multiple %1470, 8 : i32
    %1472 = arith.index_cast %1471 : i32 to index
    %c0_228 = arith.constant 0 : index
    %1473 = vector.load %arg11[%1472, %c0_228] : memref<224x2xf32, #tpu.memory_space<vmem>>, vector<8x2xf32>
    %1474 = arith.index_cast %1471 : i32 to index
    %c0_229 = arith.constant 0 : index
    %1475 = vector.load %arg12[%1474, %c0_229] : memref<224x2xf32, #tpu.memory_space<vmem>>, vector<8x2xf32>
    %1476 = arith.index_cast %1471 : i32 to index
    %c0_230 = arith.constant 0 : index
    %1477 = vector.load %arg13[%1476, %c0_230] : memref<224x2xf32, #tpu.memory_space<vmem>>, vector<8x2xf32>
    %1478 = vector.extract_strided_slice %1454 {offsets = [0, 0], sizes = [8, 1], strides = [1, 1]} : vector<8x2xf32> to vector<8x1xf32>
    %1479 = vector.broadcast %1478 : vector<8x1xf32> to vector<8x2xf32>
    %1480 = arith.mulf %1479, %22 : vector<8x2xf32>
    %1481 = vector.extract_strided_slice %1454 {offsets = [0, 1], sizes = [8, 1], strides = [1, 1]} : vector<8x2xf32> to vector<8x1xf32>
    %1482 = vector.broadcast %1481 : vector<8x1xf32> to vector<8x2xf32>
    %1483 = arith.mulf %1482, %25 : vector<8x2xf32>
    %1484 = arith.addf %1480, %1483 : vector<8x2xf32>
    %1485 = arith.addf %1473, %1484 : vector<8x2xf32>
    %1486 = arith.negf %1485 : vector<8x2xf32>
    %1487 = math.exp %1486 : vector<8x2xf32>
    %cst_231 = arith.constant 1.000000e+00 : f32
    %1488 = vector.broadcast %cst_231 : f32 to vector<8x2xf32>
    %1489 = arith.addf %1488, %1487 : vector<8x2xf32>
    %1490 = arith.divf %1488, %1489 : vector<8x2xf32>
    %1491 = vector.extract_strided_slice %1454 {offsets = [0, 0], sizes = [8, 1], strides = [1, 1]} : vector<8x2xf32> to vector<8x1xf32>
    %1492 = vector.broadcast %1491 : vector<8x1xf32> to vector<8x2xf32>
    %1493 = arith.mulf %1492, %28 : vector<8x2xf32>
    %1494 = vector.extract_strided_slice %1454 {offsets = [0, 1], sizes = [8, 1], strides = [1, 1]} : vector<8x2xf32> to vector<8x1xf32>
    %1495 = vector.broadcast %1494 : vector<8x1xf32> to vector<8x2xf32>
    %1496 = arith.mulf %1495, %31 : vector<8x2xf32>
    %1497 = arith.addf %1493, %1496 : vector<8x2xf32>
    %1498 = arith.addf %1475, %1497 : vector<8x2xf32>
    %1499 = arith.negf %1498 : vector<8x2xf32>
    %1500 = math.exp %1499 : vector<8x2xf32>
    %cst_232 = arith.constant 1.000000e+00 : f32
    %1501 = vector.broadcast %cst_232 : f32 to vector<8x2xf32>
    %1502 = arith.addf %1501, %1500 : vector<8x2xf32>
    %1503 = arith.divf %1501, %1502 : vector<8x2xf32>
    %1504 = vector.extract_strided_slice %1454 {offsets = [0, 0], sizes = [8, 1], strides = [1, 1]} : vector<8x2xf32> to vector<8x1xf32>
    %1505 = vector.broadcast %1504 : vector<8x1xf32> to vector<8x2xf32>
    %1506 = arith.mulf %1505, %34 : vector<8x2xf32>
    %1507 = vector.extract_strided_slice %1454 {offsets = [0, 1], sizes = [8, 1], strides = [1, 1]} : vector<8x2xf32> to vector<8x1xf32>
    %1508 = vector.broadcast %1507 : vector<8x1xf32> to vector<8x2xf32>
    %1509 = arith.mulf %1508, %37 : vector<8x2xf32>
    %1510 = arith.addf %1506, %1509 : vector<8x2xf32>
    %1511 = arith.addf %1510, %16 : vector<8x2xf32>
    %1512 = arith.mulf %1490, %1511 : vector<8x2xf32>
    %1513 = arith.addf %1477, %1512 : vector<8x2xf32>
    %1514 = math.tanh %1513 : vector<8x2xf32>
    %cst_233 = arith.constant 1.000000e+00 : f32
    %1515 = vector.broadcast %cst_233 : f32 to vector<8x2xf32>
    %1516 = arith.subf %1515, %1503 : vector<8x2xf32>
    %1517 = arith.mulf %1516, %1514 : vector<8x2xf32>
    %1518 = arith.mulf %1503, %1454 : vector<8x2xf32>
    %1519 = arith.addf %1517, %1518 : vector<8x2xf32>
    %1520 = arith.index_cast %c22_i32 : i32 to index
    %c0_234 = arith.constant 0 : index
    %c0_235 = arith.constant 0 : index
    %1521 = vector.load %arg8[%1520, %c0_234, %c0_235] : memref<28x2x128xf32, #tpu.memory_space<vmem>>, vector<1x2x128xf32>
    %1522 = vector.shape_cast %1521 : vector<1x2x128xf32> to vector<2x128xf32>
    %1523 = vector.extract_strided_slice %1519 {offsets = [0, 0], sizes = [8, 1], strides = [1, 1]} : vector<8x2xf32> to vector<8x1xf32>
    %1524 = vector.extract_strided_slice %1522 {offsets = [0, 0], sizes = [1, 128], strides = [1, 1]} : vector<2x128xf32> to vector<1x128xf32>
    %1525 = vector.broadcast %1523 : vector<8x1xf32> to vector<8x128xf32>
    %1526 = vector.broadcast %1524 : vector<1x128xf32> to vector<8x128xf32>
    %1527 = arith.mulf %1525, %1526 : vector<8x128xf32>
    %1528 = arith.addf %1469, %1527 : vector<8x128xf32>
    %1529 = vector.extract_strided_slice %1519 {offsets = [0, 1], sizes = [8, 1], strides = [1, 1]} : vector<8x2xf32> to vector<8x1xf32>
    %1530 = vector.extract_strided_slice %1522 {offsets = [1, 0], sizes = [1, 128], strides = [1, 1]} : vector<2x128xf32> to vector<1x128xf32>
    %1531 = vector.broadcast %1529 : vector<8x1xf32> to vector<8x128xf32>
    %1532 = vector.broadcast %1530 : vector<1x128xf32> to vector<8x128xf32>
    %1533 = arith.mulf %1531, %1532 : vector<8x128xf32>
    %1534 = arith.addf %1528, %1533 : vector<8x128xf32>
    %c23_i32 = arith.constant 23 : i32
    %c8_i32_236 = arith.constant 8 : i32
    %1535 = arith.muli %c23_i32, %c8_i32_236 : i32
    %1536 = tpu.assume_multiple %1535, 8 : i32
    %1537 = arith.index_cast %1536 : i32 to index
    %c0_237 = arith.constant 0 : index
    %1538 = vector.load %arg11[%1537, %c0_237] : memref<224x2xf32, #tpu.memory_space<vmem>>, vector<8x2xf32>
    %1539 = arith.index_cast %1536 : i32 to index
    %c0_238 = arith.constant 0 : index
    %1540 = vector.load %arg12[%1539, %c0_238] : memref<224x2xf32, #tpu.memory_space<vmem>>, vector<8x2xf32>
    %1541 = arith.index_cast %1536 : i32 to index
    %c0_239 = arith.constant 0 : index
    %1542 = vector.load %arg13[%1541, %c0_239] : memref<224x2xf32, #tpu.memory_space<vmem>>, vector<8x2xf32>
    %1543 = vector.extract_strided_slice %1519 {offsets = [0, 0], sizes = [8, 1], strides = [1, 1]} : vector<8x2xf32> to vector<8x1xf32>
    %1544 = vector.broadcast %1543 : vector<8x1xf32> to vector<8x2xf32>
    %1545 = arith.mulf %1544, %22 : vector<8x2xf32>
    %1546 = vector.extract_strided_slice %1519 {offsets = [0, 1], sizes = [8, 1], strides = [1, 1]} : vector<8x2xf32> to vector<8x1xf32>
    %1547 = vector.broadcast %1546 : vector<8x1xf32> to vector<8x2xf32>
    %1548 = arith.mulf %1547, %25 : vector<8x2xf32>
    %1549 = arith.addf %1545, %1548 : vector<8x2xf32>
    %1550 = arith.addf %1538, %1549 : vector<8x2xf32>
    %1551 = arith.negf %1550 : vector<8x2xf32>
    %1552 = math.exp %1551 : vector<8x2xf32>
    %cst_240 = arith.constant 1.000000e+00 : f32
    %1553 = vector.broadcast %cst_240 : f32 to vector<8x2xf32>
    %1554 = arith.addf %1553, %1552 : vector<8x2xf32>
    %1555 = arith.divf %1553, %1554 : vector<8x2xf32>
    %1556 = vector.extract_strided_slice %1519 {offsets = [0, 0], sizes = [8, 1], strides = [1, 1]} : vector<8x2xf32> to vector<8x1xf32>
    %1557 = vector.broadcast %1556 : vector<8x1xf32> to vector<8x2xf32>
    %1558 = arith.mulf %1557, %28 : vector<8x2xf32>
    %1559 = vector.extract_strided_slice %1519 {offsets = [0, 1], sizes = [8, 1], strides = [1, 1]} : vector<8x2xf32> to vector<8x1xf32>
    %1560 = vector.broadcast %1559 : vector<8x1xf32> to vector<8x2xf32>
    %1561 = arith.mulf %1560, %31 : vector<8x2xf32>
    %1562 = arith.addf %1558, %1561 : vector<8x2xf32>
    %1563 = arith.addf %1540, %1562 : vector<8x2xf32>
    %1564 = arith.negf %1563 : vector<8x2xf32>
    %1565 = math.exp %1564 : vector<8x2xf32>
    %cst_241 = arith.constant 1.000000e+00 : f32
    %1566 = vector.broadcast %cst_241 : f32 to vector<8x2xf32>
    %1567 = arith.addf %1566, %1565 : vector<8x2xf32>
    %1568 = arith.divf %1566, %1567 : vector<8x2xf32>
    %1569 = vector.extract_strided_slice %1519 {offsets = [0, 0], sizes = [8, 1], strides = [1, 1]} : vector<8x2xf32> to vector<8x1xf32>
    %1570 = vector.broadcast %1569 : vector<8x1xf32> to vector<8x2xf32>
    %1571 = arith.mulf %1570, %34 : vector<8x2xf32>
    %1572 = vector.extract_strided_slice %1519 {offsets = [0, 1], sizes = [8, 1], strides = [1, 1]} : vector<8x2xf32> to vector<8x1xf32>
    %1573 = vector.broadcast %1572 : vector<8x1xf32> to vector<8x2xf32>
    %1574 = arith.mulf %1573, %37 : vector<8x2xf32>
    %1575 = arith.addf %1571, %1574 : vector<8x2xf32>
    %1576 = arith.addf %1575, %16 : vector<8x2xf32>
    %1577 = arith.mulf %1555, %1576 : vector<8x2xf32>
    %1578 = arith.addf %1542, %1577 : vector<8x2xf32>
    %1579 = math.tanh %1578 : vector<8x2xf32>
    %cst_242 = arith.constant 1.000000e+00 : f32
    %1580 = vector.broadcast %cst_242 : f32 to vector<8x2xf32>
    %1581 = arith.subf %1580, %1568 : vector<8x2xf32>
    %1582 = arith.mulf %1581, %1579 : vector<8x2xf32>
    %1583 = arith.mulf %1568, %1519 : vector<8x2xf32>
    %1584 = arith.addf %1582, %1583 : vector<8x2xf32>
    %1585 = arith.index_cast %c23_i32 : i32 to index
    %c0_243 = arith.constant 0 : index
    %c0_244 = arith.constant 0 : index
    %1586 = vector.load %arg8[%1585, %c0_243, %c0_244] : memref<28x2x128xf32, #tpu.memory_space<vmem>>, vector<1x2x128xf32>
    %1587 = vector.shape_cast %1586 : vector<1x2x128xf32> to vector<2x128xf32>
    %1588 = vector.extract_strided_slice %1584 {offsets = [0, 0], sizes = [8, 1], strides = [1, 1]} : vector<8x2xf32> to vector<8x1xf32>
    %1589 = vector.extract_strided_slice %1587 {offsets = [0, 0], sizes = [1, 128], strides = [1, 1]} : vector<2x128xf32> to vector<1x128xf32>
    %1590 = vector.broadcast %1588 : vector<8x1xf32> to vector<8x128xf32>
    %1591 = vector.broadcast %1589 : vector<1x128xf32> to vector<8x128xf32>
    %1592 = arith.mulf %1590, %1591 : vector<8x128xf32>
    %1593 = arith.addf %1534, %1592 : vector<8x128xf32>
    %1594 = vector.extract_strided_slice %1584 {offsets = [0, 1], sizes = [8, 1], strides = [1, 1]} : vector<8x2xf32> to vector<8x1xf32>
    %1595 = vector.extract_strided_slice %1587 {offsets = [1, 0], sizes = [1, 128], strides = [1, 1]} : vector<2x128xf32> to vector<1x128xf32>
    %1596 = vector.broadcast %1594 : vector<8x1xf32> to vector<8x128xf32>
    %1597 = vector.broadcast %1595 : vector<1x128xf32> to vector<8x128xf32>
    %1598 = arith.mulf %1596, %1597 : vector<8x128xf32>
    %1599 = arith.addf %1593, %1598 : vector<8x128xf32>
    %c24_i32 = arith.constant 24 : i32
    %c8_i32_245 = arith.constant 8 : i32
    %1600 = arith.muli %c24_i32, %c8_i32_245 : i32
    %1601 = tpu.assume_multiple %1600, 8 : i32
    %1602 = arith.index_cast %1601 : i32 to index
    %c0_246 = arith.constant 0 : index
    %1603 = vector.load %arg11[%1602, %c0_246] : memref<224x2xf32, #tpu.memory_space<vmem>>, vector<8x2xf32>
    %1604 = arith.index_cast %1601 : i32 to index
    %c0_247 = arith.constant 0 : index
    %1605 = vector.load %arg12[%1604, %c0_247] : memref<224x2xf32, #tpu.memory_space<vmem>>, vector<8x2xf32>
    %1606 = arith.index_cast %1601 : i32 to index
    %c0_248 = arith.constant 0 : index
    %1607 = vector.load %arg13[%1606, %c0_248] : memref<224x2xf32, #tpu.memory_space<vmem>>, vector<8x2xf32>
    %1608 = vector.extract_strided_slice %1584 {offsets = [0, 0], sizes = [8, 1], strides = [1, 1]} : vector<8x2xf32> to vector<8x1xf32>
    %1609 = vector.broadcast %1608 : vector<8x1xf32> to vector<8x2xf32>
    %1610 = arith.mulf %1609, %22 : vector<8x2xf32>
    %1611 = vector.extract_strided_slice %1584 {offsets = [0, 1], sizes = [8, 1], strides = [1, 1]} : vector<8x2xf32> to vector<8x1xf32>
    %1612 = vector.broadcast %1611 : vector<8x1xf32> to vector<8x2xf32>
    %1613 = arith.mulf %1612, %25 : vector<8x2xf32>
    %1614 = arith.addf %1610, %1613 : vector<8x2xf32>
    %1615 = arith.addf %1603, %1614 : vector<8x2xf32>
    %1616 = arith.negf %1615 : vector<8x2xf32>
    %1617 = math.exp %1616 : vector<8x2xf32>
    %cst_249 = arith.constant 1.000000e+00 : f32
    %1618 = vector.broadcast %cst_249 : f32 to vector<8x2xf32>
    %1619 = arith.addf %1618, %1617 : vector<8x2xf32>
    %1620 = arith.divf %1618, %1619 : vector<8x2xf32>
    %1621 = vector.extract_strided_slice %1584 {offsets = [0, 0], sizes = [8, 1], strides = [1, 1]} : vector<8x2xf32> to vector<8x1xf32>
    %1622 = vector.broadcast %1621 : vector<8x1xf32> to vector<8x2xf32>
    %1623 = arith.mulf %1622, %28 : vector<8x2xf32>
    %1624 = vector.extract_strided_slice %1584 {offsets = [0, 1], sizes = [8, 1], strides = [1, 1]} : vector<8x2xf32> to vector<8x1xf32>
    %1625 = vector.broadcast %1624 : vector<8x1xf32> to vector<8x2xf32>
    %1626 = arith.mulf %1625, %31 : vector<8x2xf32>
    %1627 = arith.addf %1623, %1626 : vector<8x2xf32>
    %1628 = arith.addf %1605, %1627 : vector<8x2xf32>
    %1629 = arith.negf %1628 : vector<8x2xf32>
    %1630 = math.exp %1629 : vector<8x2xf32>
    %cst_250 = arith.constant 1.000000e+00 : f32
    %1631 = vector.broadcast %cst_250 : f32 to vector<8x2xf32>
    %1632 = arith.addf %1631, %1630 : vector<8x2xf32>
    %1633 = arith.divf %1631, %1632 : vector<8x2xf32>
    %1634 = vector.extract_strided_slice %1584 {offsets = [0, 0], sizes = [8, 1], strides = [1, 1]} : vector<8x2xf32> to vector<8x1xf32>
    %1635 = vector.broadcast %1634 : vector<8x1xf32> to vector<8x2xf32>
    %1636 = arith.mulf %1635, %34 : vector<8x2xf32>
    %1637 = vector.extract_strided_slice %1584 {offsets = [0, 1], sizes = [8, 1], strides = [1, 1]} : vector<8x2xf32> to vector<8x1xf32>
    %1638 = vector.broadcast %1637 : vector<8x1xf32> to vector<8x2xf32>
    %1639 = arith.mulf %1638, %37 : vector<8x2xf32>
    %1640 = arith.addf %1636, %1639 : vector<8x2xf32>
    %1641 = arith.addf %1640, %16 : vector<8x2xf32>
    %1642 = arith.mulf %1620, %1641 : vector<8x2xf32>
    %1643 = arith.addf %1607, %1642 : vector<8x2xf32>
    %1644 = math.tanh %1643 : vector<8x2xf32>
    %cst_251 = arith.constant 1.000000e+00 : f32
    %1645 = vector.broadcast %cst_251 : f32 to vector<8x2xf32>
    %1646 = arith.subf %1645, %1633 : vector<8x2xf32>
    %1647 = arith.mulf %1646, %1644 : vector<8x2xf32>
    %1648 = arith.mulf %1633, %1584 : vector<8x2xf32>
    %1649 = arith.addf %1647, %1648 : vector<8x2xf32>
    %1650 = arith.index_cast %c24_i32 : i32 to index
    %c0_252 = arith.constant 0 : index
    %c0_253 = arith.constant 0 : index
    %1651 = vector.load %arg8[%1650, %c0_252, %c0_253] : memref<28x2x128xf32, #tpu.memory_space<vmem>>, vector<1x2x128xf32>
    %1652 = vector.shape_cast %1651 : vector<1x2x128xf32> to vector<2x128xf32>
    %1653 = vector.extract_strided_slice %1649 {offsets = [0, 0], sizes = [8, 1], strides = [1, 1]} : vector<8x2xf32> to vector<8x1xf32>
    %1654 = vector.extract_strided_slice %1652 {offsets = [0, 0], sizes = [1, 128], strides = [1, 1]} : vector<2x128xf32> to vector<1x128xf32>
    %1655 = vector.broadcast %1653 : vector<8x1xf32> to vector<8x128xf32>
    %1656 = vector.broadcast %1654 : vector<1x128xf32> to vector<8x128xf32>
    %1657 = arith.mulf %1655, %1656 : vector<8x128xf32>
    %1658 = arith.addf %1599, %1657 : vector<8x128xf32>
    %1659 = vector.extract_strided_slice %1649 {offsets = [0, 1], sizes = [8, 1], strides = [1, 1]} : vector<8x2xf32> to vector<8x1xf32>
    %1660 = vector.extract_strided_slice %1652 {offsets = [1, 0], sizes = [1, 128], strides = [1, 1]} : vector<2x128xf32> to vector<1x128xf32>
    %1661 = vector.broadcast %1659 : vector<8x1xf32> to vector<8x128xf32>
    %1662 = vector.broadcast %1660 : vector<1x128xf32> to vector<8x128xf32>
    %1663 = arith.mulf %1661, %1662 : vector<8x128xf32>
    %1664 = arith.addf %1658, %1663 : vector<8x128xf32>
    %c25_i32 = arith.constant 25 : i32
    %c8_i32_254 = arith.constant 8 : i32
    %1665 = arith.muli %c25_i32, %c8_i32_254 : i32
    %1666 = tpu.assume_multiple %1665, 8 : i32
    %1667 = arith.index_cast %1666 : i32 to index
    %c0_255 = arith.constant 0 : index
    %1668 = vector.load %arg11[%1667, %c0_255] : memref<224x2xf32, #tpu.memory_space<vmem>>, vector<8x2xf32>
    %1669 = arith.index_cast %1666 : i32 to index
    %c0_256 = arith.constant 0 : index
    %1670 = vector.load %arg12[%1669, %c0_256] : memref<224x2xf32, #tpu.memory_space<vmem>>, vector<8x2xf32>
    %1671 = arith.index_cast %1666 : i32 to index
    %c0_257 = arith.constant 0 : index
    %1672 = vector.load %arg13[%1671, %c0_257] : memref<224x2xf32, #tpu.memory_space<vmem>>, vector<8x2xf32>
    %1673 = vector.extract_strided_slice %1649 {offsets = [0, 0], sizes = [8, 1], strides = [1, 1]} : vector<8x2xf32> to vector<8x1xf32>
    %1674 = vector.broadcast %1673 : vector<8x1xf32> to vector<8x2xf32>
    %1675 = arith.mulf %1674, %22 : vector<8x2xf32>
    %1676 = vector.extract_strided_slice %1649 {offsets = [0, 1], sizes = [8, 1], strides = [1, 1]} : vector<8x2xf32> to vector<8x1xf32>
    %1677 = vector.broadcast %1676 : vector<8x1xf32> to vector<8x2xf32>
    %1678 = arith.mulf %1677, %25 : vector<8x2xf32>
    %1679 = arith.addf %1675, %1678 : vector<8x2xf32>
    %1680 = arith.addf %1668, %1679 : vector<8x2xf32>
    %1681 = arith.negf %1680 : vector<8x2xf32>
    %1682 = math.exp %1681 : vector<8x2xf32>
    %cst_258 = arith.constant 1.000000e+00 : f32
    %1683 = vector.broadcast %cst_258 : f32 to vector<8x2xf32>
    %1684 = arith.addf %1683, %1682 : vector<8x2xf32>
    %1685 = arith.divf %1683, %1684 : vector<8x2xf32>
    %1686 = vector.extract_strided_slice %1649 {offsets = [0, 0], sizes = [8, 1], strides = [1, 1]} : vector<8x2xf32> to vector<8x1xf32>
    %1687 = vector.broadcast %1686 : vector<8x1xf32> to vector<8x2xf32>
    %1688 = arith.mulf %1687, %28 : vector<8x2xf32>
    %1689 = vector.extract_strided_slice %1649 {offsets = [0, 1], sizes = [8, 1], strides = [1, 1]} : vector<8x2xf32> to vector<8x1xf32>
    %1690 = vector.broadcast %1689 : vector<8x1xf32> to vector<8x2xf32>
    %1691 = arith.mulf %1690, %31 : vector<8x2xf32>
    %1692 = arith.addf %1688, %1691 : vector<8x2xf32>
    %1693 = arith.addf %1670, %1692 : vector<8x2xf32>
    %1694 = arith.negf %1693 : vector<8x2xf32>
    %1695 = math.exp %1694 : vector<8x2xf32>
    %cst_259 = arith.constant 1.000000e+00 : f32
    %1696 = vector.broadcast %cst_259 : f32 to vector<8x2xf32>
    %1697 = arith.addf %1696, %1695 : vector<8x2xf32>
    %1698 = arith.divf %1696, %1697 : vector<8x2xf32>
    %1699 = vector.extract_strided_slice %1649 {offsets = [0, 0], sizes = [8, 1], strides = [1, 1]} : vector<8x2xf32> to vector<8x1xf32>
    %1700 = vector.broadcast %1699 : vector<8x1xf32> to vector<8x2xf32>
    %1701 = arith.mulf %1700, %34 : vector<8x2xf32>
    %1702 = vector.extract_strided_slice %1649 {offsets = [0, 1], sizes = [8, 1], strides = [1, 1]} : vector<8x2xf32> to vector<8x1xf32>
    %1703 = vector.broadcast %1702 : vector<8x1xf32> to vector<8x2xf32>
    %1704 = arith.mulf %1703, %37 : vector<8x2xf32>
    %1705 = arith.addf %1701, %1704 : vector<8x2xf32>
    %1706 = arith.addf %1705, %16 : vector<8x2xf32>
    %1707 = arith.mulf %1685, %1706 : vector<8x2xf32>
    %1708 = arith.addf %1672, %1707 : vector<8x2xf32>
    %1709 = math.tanh %1708 : vector<8x2xf32>
    %cst_260 = arith.constant 1.000000e+00 : f32
    %1710 = vector.broadcast %cst_260 : f32 to vector<8x2xf32>
    %1711 = arith.subf %1710, %1698 : vector<8x2xf32>
    %1712 = arith.mulf %1711, %1709 : vector<8x2xf32>
    %1713 = arith.mulf %1698, %1649 : vector<8x2xf32>
    %1714 = arith.addf %1712, %1713 : vector<8x2xf32>
    %1715 = arith.index_cast %c25_i32 : i32 to index
    %c0_261 = arith.constant 0 : index
    %c0_262 = arith.constant 0 : index
    %1716 = vector.load %arg8[%1715, %c0_261, %c0_262] : memref<28x2x128xf32, #tpu.memory_space<vmem>>, vector<1x2x128xf32>
    %1717 = vector.shape_cast %1716 : vector<1x2x128xf32> to vector<2x128xf32>
    %1718 = vector.extract_strided_slice %1714 {offsets = [0, 0], sizes = [8, 1], strides = [1, 1]} : vector<8x2xf32> to vector<8x1xf32>
    %1719 = vector.extract_strided_slice %1717 {offsets = [0, 0], sizes = [1, 128], strides = [1, 1]} : vector<2x128xf32> to vector<1x128xf32>
    %1720 = vector.broadcast %1718 : vector<8x1xf32> to vector<8x128xf32>
    %1721 = vector.broadcast %1719 : vector<1x128xf32> to vector<8x128xf32>
    %1722 = arith.mulf %1720, %1721 : vector<8x128xf32>
    %1723 = arith.addf %1664, %1722 : vector<8x128xf32>
    %1724 = vector.extract_strided_slice %1714 {offsets = [0, 1], sizes = [8, 1], strides = [1, 1]} : vector<8x2xf32> to vector<8x1xf32>
    %1725 = vector.extract_strided_slice %1717 {offsets = [1, 0], sizes = [1, 128], strides = [1, 1]} : vector<2x128xf32> to vector<1x128xf32>
    %1726 = vector.broadcast %1724 : vector<8x1xf32> to vector<8x128xf32>
    %1727 = vector.broadcast %1725 : vector<1x128xf32> to vector<8x128xf32>
    %1728 = arith.mulf %1726, %1727 : vector<8x128xf32>
    %1729 = arith.addf %1723, %1728 : vector<8x128xf32>
    %c26_i32 = arith.constant 26 : i32
    %c8_i32_263 = arith.constant 8 : i32
    %1730 = arith.muli %c26_i32, %c8_i32_263 : i32
    %1731 = tpu.assume_multiple %1730, 8 : i32
    %1732 = arith.index_cast %1731 : i32 to index
    %c0_264 = arith.constant 0 : index
    %1733 = vector.load %arg11[%1732, %c0_264] : memref<224x2xf32, #tpu.memory_space<vmem>>, vector<8x2xf32>
    %1734 = arith.index_cast %1731 : i32 to index
    %c0_265 = arith.constant 0 : index
    %1735 = vector.load %arg12[%1734, %c0_265] : memref<224x2xf32, #tpu.memory_space<vmem>>, vector<8x2xf32>
    %1736 = arith.index_cast %1731 : i32 to index
    %c0_266 = arith.constant 0 : index
    %1737 = vector.load %arg13[%1736, %c0_266] : memref<224x2xf32, #tpu.memory_space<vmem>>, vector<8x2xf32>
    %1738 = vector.extract_strided_slice %1714 {offsets = [0, 0], sizes = [8, 1], strides = [1, 1]} : vector<8x2xf32> to vector<8x1xf32>
    %1739 = vector.broadcast %1738 : vector<8x1xf32> to vector<8x2xf32>
    %1740 = arith.mulf %1739, %22 : vector<8x2xf32>
    %1741 = vector.extract_strided_slice %1714 {offsets = [0, 1], sizes = [8, 1], strides = [1, 1]} : vector<8x2xf32> to vector<8x1xf32>
    %1742 = vector.broadcast %1741 : vector<8x1xf32> to vector<8x2xf32>
    %1743 = arith.mulf %1742, %25 : vector<8x2xf32>
    %1744 = arith.addf %1740, %1743 : vector<8x2xf32>
    %1745 = arith.addf %1733, %1744 : vector<8x2xf32>
    %1746 = arith.negf %1745 : vector<8x2xf32>
    %1747 = math.exp %1746 : vector<8x2xf32>
    %cst_267 = arith.constant 1.000000e+00 : f32
    %1748 = vector.broadcast %cst_267 : f32 to vector<8x2xf32>
    %1749 = arith.addf %1748, %1747 : vector<8x2xf32>
    %1750 = arith.divf %1748, %1749 : vector<8x2xf32>
    %1751 = vector.extract_strided_slice %1714 {offsets = [0, 0], sizes = [8, 1], strides = [1, 1]} : vector<8x2xf32> to vector<8x1xf32>
    %1752 = vector.broadcast %1751 : vector<8x1xf32> to vector<8x2xf32>
    %1753 = arith.mulf %1752, %28 : vector<8x2xf32>
    %1754 = vector.extract_strided_slice %1714 {offsets = [0, 1], sizes = [8, 1], strides = [1, 1]} : vector<8x2xf32> to vector<8x1xf32>
    %1755 = vector.broadcast %1754 : vector<8x1xf32> to vector<8x2xf32>
    %1756 = arith.mulf %1755, %31 : vector<8x2xf32>
    %1757 = arith.addf %1753, %1756 : vector<8x2xf32>
    %1758 = arith.addf %1735, %1757 : vector<8x2xf32>
    %1759 = arith.negf %1758 : vector<8x2xf32>
    %1760 = math.exp %1759 : vector<8x2xf32>
    %cst_268 = arith.constant 1.000000e+00 : f32
    %1761 = vector.broadcast %cst_268 : f32 to vector<8x2xf32>
    %1762 = arith.addf %1761, %1760 : vector<8x2xf32>
    %1763 = arith.divf %1761, %1762 : vector<8x2xf32>
    %1764 = vector.extract_strided_slice %1714 {offsets = [0, 0], sizes = [8, 1], strides = [1, 1]} : vector<8x2xf32> to vector<8x1xf32>
    %1765 = vector.broadcast %1764 : vector<8x1xf32> to vector<8x2xf32>
    %1766 = arith.mulf %1765, %34 : vector<8x2xf32>
    %1767 = vector.extract_strided_slice %1714 {offsets = [0, 1], sizes = [8, 1], strides = [1, 1]} : vector<8x2xf32> to vector<8x1xf32>
    %1768 = vector.broadcast %1767 : vector<8x1xf32> to vector<8x2xf32>
    %1769 = arith.mulf %1768, %37 : vector<8x2xf32>
    %1770 = arith.addf %1766, %1769 : vector<8x2xf32>
    %1771 = arith.addf %1770, %16 : vector<8x2xf32>
    %1772 = arith.mulf %1750, %1771 : vector<8x2xf32>
    %1773 = arith.addf %1737, %1772 : vector<8x2xf32>
    %1774 = math.tanh %1773 : vector<8x2xf32>
    %cst_269 = arith.constant 1.000000e+00 : f32
    %1775 = vector.broadcast %cst_269 : f32 to vector<8x2xf32>
    %1776 = arith.subf %1775, %1763 : vector<8x2xf32>
    %1777 = arith.mulf %1776, %1774 : vector<8x2xf32>
    %1778 = arith.mulf %1763, %1714 : vector<8x2xf32>
    %1779 = arith.addf %1777, %1778 : vector<8x2xf32>
    %1780 = arith.index_cast %c26_i32 : i32 to index
    %c0_270 = arith.constant 0 : index
    %c0_271 = arith.constant 0 : index
    %1781 = vector.load %arg8[%1780, %c0_270, %c0_271] : memref<28x2x128xf32, #tpu.memory_space<vmem>>, vector<1x2x128xf32>
    %1782 = vector.shape_cast %1781 : vector<1x2x128xf32> to vector<2x128xf32>
    %1783 = vector.extract_strided_slice %1779 {offsets = [0, 0], sizes = [8, 1], strides = [1, 1]} : vector<8x2xf32> to vector<8x1xf32>
    %1784 = vector.extract_strided_slice %1782 {offsets = [0, 0], sizes = [1, 128], strides = [1, 1]} : vector<2x128xf32> to vector<1x128xf32>
    %1785 = vector.broadcast %1783 : vector<8x1xf32> to vector<8x128xf32>
    %1786 = vector.broadcast %1784 : vector<1x128xf32> to vector<8x128xf32>
    %1787 = arith.mulf %1785, %1786 : vector<8x128xf32>
    %1788 = arith.addf %1729, %1787 : vector<8x128xf32>
    %1789 = vector.extract_strided_slice %1779 {offsets = [0, 1], sizes = [8, 1], strides = [1, 1]} : vector<8x2xf32> to vector<8x1xf32>
    %1790 = vector.extract_strided_slice %1782 {offsets = [1, 0], sizes = [1, 128], strides = [1, 1]} : vector<2x128xf32> to vector<1x128xf32>
    %1791 = vector.broadcast %1789 : vector<8x1xf32> to vector<8x128xf32>
    %1792 = vector.broadcast %1790 : vector<1x128xf32> to vector<8x128xf32>
    %1793 = arith.mulf %1791, %1792 : vector<8x128xf32>
    %1794 = arith.addf %1788, %1793 : vector<8x128xf32>
    %c27_i32 = arith.constant 27 : i32
    %c8_i32_272 = arith.constant 8 : i32
    %1795 = arith.muli %c27_i32, %c8_i32_272 : i32
    %1796 = tpu.assume_multiple %1795, 8 : i32
    %1797 = arith.index_cast %1796 : i32 to index
    %c0_273 = arith.constant 0 : index
    %1798 = vector.load %arg11[%1797, %c0_273] : memref<224x2xf32, #tpu.memory_space<vmem>>, vector<8x2xf32>
    %1799 = arith.index_cast %1796 : i32 to index
    %c0_274 = arith.constant 0 : index
    %1800 = vector.load %arg12[%1799, %c0_274] : memref<224x2xf32, #tpu.memory_space<vmem>>, vector<8x2xf32>
    %1801 = arith.index_cast %1796 : i32 to index
    %c0_275 = arith.constant 0 : index
    %1802 = vector.load %arg13[%1801, %c0_275] : memref<224x2xf32, #tpu.memory_space<vmem>>, vector<8x2xf32>
    %1803 = vector.extract_strided_slice %1779 {offsets = [0, 0], sizes = [8, 1], strides = [1, 1]} : vector<8x2xf32> to vector<8x1xf32>
    %1804 = vector.broadcast %1803 : vector<8x1xf32> to vector<8x2xf32>
    %1805 = arith.mulf %1804, %22 : vector<8x2xf32>
    %1806 = vector.extract_strided_slice %1779 {offsets = [0, 1], sizes = [8, 1], strides = [1, 1]} : vector<8x2xf32> to vector<8x1xf32>
    %1807 = vector.broadcast %1806 : vector<8x1xf32> to vector<8x2xf32>
    %1808 = arith.mulf %1807, %25 : vector<8x2xf32>
    %1809 = arith.addf %1805, %1808 : vector<8x2xf32>
    %1810 = arith.addf %1798, %1809 : vector<8x2xf32>
    %1811 = arith.negf %1810 : vector<8x2xf32>
    %1812 = math.exp %1811 : vector<8x2xf32>
    %cst_276 = arith.constant 1.000000e+00 : f32
    %1813 = vector.broadcast %cst_276 : f32 to vector<8x2xf32>
    %1814 = arith.addf %1813, %1812 : vector<8x2xf32>
    %1815 = arith.divf %1813, %1814 : vector<8x2xf32>
    %1816 = vector.extract_strided_slice %1779 {offsets = [0, 0], sizes = [8, 1], strides = [1, 1]} : vector<8x2xf32> to vector<8x1xf32>
    %1817 = vector.broadcast %1816 : vector<8x1xf32> to vector<8x2xf32>
    %1818 = arith.mulf %1817, %28 : vector<8x2xf32>
    %1819 = vector.extract_strided_slice %1779 {offsets = [0, 1], sizes = [8, 1], strides = [1, 1]} : vector<8x2xf32> to vector<8x1xf32>
    %1820 = vector.broadcast %1819 : vector<8x1xf32> to vector<8x2xf32>
    %1821 = arith.mulf %1820, %31 : vector<8x2xf32>
    %1822 = arith.addf %1818, %1821 : vector<8x2xf32>
    %1823 = arith.addf %1800, %1822 : vector<8x2xf32>
    %1824 = arith.negf %1823 : vector<8x2xf32>
    %1825 = math.exp %1824 : vector<8x2xf32>
    %cst_277 = arith.constant 1.000000e+00 : f32
    %1826 = vector.broadcast %cst_277 : f32 to vector<8x2xf32>
    %1827 = arith.addf %1826, %1825 : vector<8x2xf32>
    %1828 = arith.divf %1826, %1827 : vector<8x2xf32>
    %1829 = vector.extract_strided_slice %1779 {offsets = [0, 0], sizes = [8, 1], strides = [1, 1]} : vector<8x2xf32> to vector<8x1xf32>
    %1830 = vector.broadcast %1829 : vector<8x1xf32> to vector<8x2xf32>
    %1831 = arith.mulf %1830, %34 : vector<8x2xf32>
    %1832 = vector.extract_strided_slice %1779 {offsets = [0, 1], sizes = [8, 1], strides = [1, 1]} : vector<8x2xf32> to vector<8x1xf32>
    %1833 = vector.broadcast %1832 : vector<8x1xf32> to vector<8x2xf32>
    %1834 = arith.mulf %1833, %37 : vector<8x2xf32>
    %1835 = arith.addf %1831, %1834 : vector<8x2xf32>
    %1836 = arith.addf %1835, %16 : vector<8x2xf32>
    %1837 = arith.mulf %1815, %1836 : vector<8x2xf32>
    %1838 = arith.addf %1802, %1837 : vector<8x2xf32>
    %1839 = math.tanh %1838 : vector<8x2xf32>
    %cst_278 = arith.constant 1.000000e+00 : f32
    %1840 = vector.broadcast %cst_278 : f32 to vector<8x2xf32>
    %1841 = arith.subf %1840, %1828 : vector<8x2xf32>
    %1842 = arith.mulf %1841, %1839 : vector<8x2xf32>
    %1843 = arith.mulf %1828, %1779 : vector<8x2xf32>
    %1844 = arith.addf %1842, %1843 : vector<8x2xf32>
    %1845 = arith.index_cast %c27_i32 : i32 to index
    %c0_279 = arith.constant 0 : index
    %c0_280 = arith.constant 0 : index
    %1846 = vector.load %arg8[%1845, %c0_279, %c0_280] : memref<28x2x128xf32, #tpu.memory_space<vmem>>, vector<1x2x128xf32>
    %1847 = vector.shape_cast %1846 : vector<1x2x128xf32> to vector<2x128xf32>
    %1848 = vector.extract_strided_slice %1844 {offsets = [0, 0], sizes = [8, 1], strides = [1, 1]} : vector<8x2xf32> to vector<8x1xf32>
    %1849 = vector.extract_strided_slice %1847 {offsets = [0, 0], sizes = [1, 128], strides = [1, 1]} : vector<2x128xf32> to vector<1x128xf32>
    %1850 = vector.broadcast %1848 : vector<8x1xf32> to vector<8x128xf32>
    %1851 = vector.broadcast %1849 : vector<1x128xf32> to vector<8x128xf32>
    %1852 = arith.mulf %1850, %1851 : vector<8x128xf32>
    %1853 = arith.addf %1794, %1852 : vector<8x128xf32>
    %1854 = vector.extract_strided_slice %1844 {offsets = [0, 1], sizes = [8, 1], strides = [1, 1]} : vector<8x2xf32> to vector<8x1xf32>
    %1855 = vector.extract_strided_slice %1847 {offsets = [1, 0], sizes = [1, 128], strides = [1, 1]} : vector<2x128xf32> to vector<1x128xf32>
    %1856 = vector.broadcast %1854 : vector<8x1xf32> to vector<8x128xf32>
    %1857 = vector.broadcast %1855 : vector<1x128xf32> to vector<8x128xf32>
    %1858 = arith.mulf %1856, %1857 : vector<8x128xf32>
    %1859 = arith.addf %1853, %1858 : vector<8x128xf32>
    %c28_i32 = arith.constant 28 : i32
    %1860 = arith.addf %1859, %19 : vector<8x128xf32>
    %c0_281 = arith.constant 0 : index
    %c0_282 = arith.constant 0 : index
    %1861 = vector.load %arg10[%c0_281, %c0_282] : memref<8x128xf32, #tpu.memory_space<vmem>>, vector<8x128xf32>
    tpu.vector_store %arg10[%c0_281, %c0_282], %1860 {strides = array<i32>} : memref<8x128xf32, #tpu.memory_space<vmem>>, vector<8x128xf32>,
    return
  }
  func.func @transform_0(%arg0: i32) -> (i32, i32, i32) {
    %c0_i32 = arith.constant 0 : i32
    %c0_i32_0 = arith.constant 0 : i32
    %c0_i32_1 = arith.constant 0 : i32
    return %c0_i32, %arg0, %c0_i32_0 : i32, i32, i32
  }
  func.func @transform_1(%arg0: i32) -> (i32, i32) {
    %c0_i32 = arith.constant 0 : i32
    %c0_i32_0 = arith.constant 0 : i32
    %c0_i32_1 = arith.constant 0 : i32
    return %c0_i32, %c0_i32_0 : i32, i32
  }
  func.func @transform_2(%arg0: i32) -> (i32, i32) {
    %c0_i32 = arith.constant 0 : i32
    %c0_i32_0 = arith.constant 0 : i32
    %c0_i32_1 = arith.constant 0 : i32
    return %c0_i32, %c0_i32_0 : i32, i32
  }
  func.func @transform_3(%arg0: i32) -> (i32, i32) {
    %c0_i32 = arith.constant 0 : i32
    %c0_i32_0 = arith.constant 0 : i32
    %c0_i32_1 = arith.constant 0 : i32
    return %c0_i32, %c0_i32_0 : i32, i32
  }
  func.func @transform_4(%arg0: i32) -> (i32, i32) {
    %c0_i32 = arith.constant 0 : i32
    %c0_i32_0 = arith.constant 0 : i32
    %c0_i32_1 = arith.constant 0 : i32
    return %c0_i32, %c0_i32_0 : i32, i32
  }
  func.func @transform_5(%arg0: i32) -> (i32, i32) {
    %c0_i32 = arith.constant 0 : i32
    %c0_i32_0 = arith.constant 0 : i32
    %c0_i32_1 = arith.constant 0 : i32
    return %c0_i32, %c0_i32_0 : i32, i32
  }
  func.func @transform_6(%arg0: i32) -> (i32, i32) {
    %c0_i32 = arith.constant 0 : i32
    %c0_i32_0 = arith.constant 0 : i32
    %c0_i32_1 = arith.constant 0 : i32
    return %c0_i32, %c0_i32_0 : i32, i32
  }
  func.func @transform_7(%arg0: i32) -> (i32, i32, i32) {
    %c0_i32 = arith.constant 0 : i32
    %c0_i32_0 = arith.constant 0 : i32
    %c0_i32_1 = arith.constant 0 : i32
    %c0_i32_2 = arith.constant 0 : i32
    return %c0_i32, %c0_i32_0, %c0_i32_1 : i32, i32, i32
  }
  func.func @transform_8(%arg0: i32) -> (i32, i32) {
    %c0_i32 = arith.constant 0 : i32
    %c0_i32_0 = arith.constant 0 : i32
    %c0_i32_1 = arith.constant 0 : i32
    return %c0_i32, %c0_i32_0 : i32, i32
  }
  func.func @transform_9(%arg0: i32) -> (i32, i32) {
    %c0_i32 = arith.constant 0 : i32
    %c0_i32_0 = arith.constant 0 : i32
    return %arg0, %c0_i32 : i32, i32
  }
}

</mosaic_0001>

<llo_original>
// kernel: tpu_custom_call.1
$region0: #{tpu_custom_call.1}
  #allocation0 [shape = 'u32[]', space=smem, size = 0x4, offset = 0x4, fixed_abs, tag = 'smem constant byte address 0x4 - core index']
  #allocation1 [shape = 'u32[144,128]{1,0:T(1,128)}', space=vmem, size = 0x12000, scoped, tag = 'internal scratch']
  #allocation2 [shape = 'f32[224,2]{1,0:T(8,128)}', space=vmem, size = 0x1c000, scoped, tag = 'scratch operand']
  #allocation3 [shape = 'f32[224,2]{1,0:T(8,128)}', space=vmem, size = 0x1c000, scoped, tag = 'scratch operand']
  #allocation4 [shape = 'f32[224,2]{1,0:T(8,128)}', space=vmem, size = 0x1c000, scoped, tag = 'scratch operand']
  %s0 = inlined_call_operand.hbm [shape: f32[28,8,28], index: 0, kind: input, shape index: {}]
  %s1 = inlined_call_operand.vmem [shape: f32[28,6], index: 1, kind: input, shape index: {}]
  %s2 = inlined_call_operand.vmem [shape: f32[1,6], index: 2, kind: input, shape index: {}]
  %s3 = inlined_call_operand.vmem [shape: f32[2,2], index: 3, kind: input, shape index: {}]
  %s4 = inlined_call_operand.vmem [shape: f32[2,2], index: 4, kind: input, shape index: {}]
  %s5 = inlined_call_operand.vmem [shape: f32[2,2], index: 5, kind: input, shape index: {}]
  %s6 = inlined_call_operand.vmem [shape: f32[1,2], index: 6, kind: input, shape index: {}]
  %s7 = inlined_call_operand.vmem [shape: f32[28,2,128], index: 7, kind: input, shape index: {}]
  %s8 = inlined_call_operand.vmem [shape: f32[1,128], index: 8, kind: input, shape index: {}]
  %s9 = inlined_call_operand.hbm [shape: f32[8,128], index: 9, kind: output, shape index: {}]
  %s10 = sld [smem:[#allocation0]]
  $region50: #{tpu_custom_call.1} parent=0
    _
  %s12 = ssub.s32 1, %s10
  %s13 = scalar_select 0, %s12, %s10
  $region1: #{tpu_custom_call.1} parent=0
    #allocation5 [shape = 'u8[114688]{0}', space=vmem, size = 0x1c000, scoped, tag = 'input window, operand 0, single buffered']
    #allocation6 [shape = 's32[1]{0}', space=sflag, size = 0x4, scoped, tag = 'scoped memory for tpu_custom_call.1']
    #allocation7 [shape = 's32[1]{0}', space=sflag, size = 0x4, scoped, tag = 'scoped memory for tpu_custom_call.1']
    #allocation8 [shape = 'u8[4096]{0}', space=vmem, size = 0x1000, scoped, tag = 'output window, operand 0, single buffered']
    %14 = vsyncpa [#allocation6], 0
    %15 = vsyncpa [#allocation7], 0
    // Predicated region
    $region2: #{tpu_custom_call.1} parent=1 // pred_check
      _
    $region3: #{tpu_custom_call.1} parent=1 // pred_check_branch
      %17 = sbr.rel (0) target = $region5
    $region4: #{tpu_custom_call.1} parent=1 // pred_region
      %s19 = ssub.s32 3584, 3584
      %20 = vsyncadd [#allocation6], %s19
      %s21 = sshll.u32 [#allocation5], 4
      %s22 = int_to_ptr.vmem [resolvable:$true] %s21
      %27 = dma.hbm_to_vmem [thread:$0]  %s0, 3584, %s22, [#allocation6], 128, 128, 8
    $region5: #{tpu_custom_call.1} parent=1 // pred_fallthru
      _
    // Predicated region
    $region6: #{tpu_custom_call.1} parent=1 // pred_check
      _
    $region7: #{tpu_custom_call.1} parent=1 // pred_check_branch
      %29 = sbr.rel (0) target = $region9
    $region8: #{tpu_custom_call.1} parent=1 // pred_region
      _
    $region9: #{tpu_custom_call.1} parent=1 // pred_fallthru
      _
    // Predicated region
    $region10: #{tpu_custom_call.1} parent=1 // pred_check
      _
    $region11: #{tpu_custom_call.1} parent=1 // pred_check_branch
      %31 = sbr.rel (0) target = $region13
    $region12: #{tpu_custom_call.1} parent=1 // pred_region
      _
    $region13: #{tpu_custom_call.1} parent=1 // pred_fallthru
      _
    // Predicated region
    $region14: #{tpu_custom_call.1} parent=1 // pred_check
      _
    $region15: #{tpu_custom_call.1} parent=1 // pred_check_branch
      %33 = sbr.rel (0) target = $region17
    $region16: #{tpu_custom_call.1} parent=1 // pred_region
      _
    $region17: #{tpu_custom_call.1} parent=1 // pred_fallthru
      _
    // Predicated region
    $region18: #{tpu_custom_call.1} parent=1 // pred_check
      _
    $region19: #{tpu_custom_call.1} parent=1 // pred_check_branch
      %35 = sbr.rel (0) target = $region21
    $region20: #{tpu_custom_call.1} parent=1 // pred_region
      _
    $region21: #{tpu_custom_call.1} parent=1 // pred_fallthru
      _
    // Predicated region
    $region22: #{tpu_custom_call.1} parent=1 // pred_check
      _
    $region23: #{tpu_custom_call.1} parent=1 // pred_check_branch
      %37 = sbr.rel (0) target = $region25
    $region24: #{tpu_custom_call.1} parent=1 // pred_region
      _
    $region25: #{tpu_custom_call.1} parent=1 // pred_fallthru
      _
    // Predicated region
    $region26: #{tpu_custom_call.1} parent=1 // pred_check
      _
    $region27: #{tpu_custom_call.1} parent=1 // pred_check_branch
      %39 = sbr.rel (0) target = $region29
    $region28: #{tpu_custom_call.1} parent=1 // pred_region
      _
    $region29: #{tpu_custom_call.1} parent=1 // pred_fallthru
      _
    // Predicated region
    $region30: #{tpu_custom_call.1} parent=1 // pred_check
      _
    $region31: #{tpu_custom_call.1} parent=1 // pred_check_branch
      %41 = sbr.rel (0) target = $region33
    $region32: #{tpu_custom_call.1} parent=1 // pred_region
      _
    $region33: #{tpu_custom_call.1} parent=1 // pred_fallthru
      _
    // Predicated region
    $region34: #{tpu_custom_call.1} parent=1 // pred_check
      _
    $region35: #{tpu_custom_call.1} parent=1 // pred_check_branch
      %43 = sbr.rel (0) target = $region37
    $region36: #{tpu_custom_call.1} parent=1 // pred_region
      _
    $region37: #{tpu_custom_call.1} parent=1 // pred_fallthru
      _
    // Predicated region
    $region38: #{tpu_custom_call.1} parent=1 // pred_check
      _
    $region39: #{tpu_custom_call.1} parent=1 // pred_check_branch
      %45 = sbr.rel (0) target = $region41
    $region40: #{tpu_custom_call.1} parent=1 // pred_region
      %46 = dma.done [#allocation6], 3584
    $region41: #{tpu_custom_call.1} parent=1 // pred_fallthru
      _
    %v47 = vld [vmem:[#allocation5] sm:$0xff]
    %v48 = vld [vmem:[#allocation5 + $0x8] sm:$0xff]
    %v49 = vld [vmem:[#allocation5 + $0x10] sm:$0xff]
    %v50 = vld [vmem:[#allocation5 + $0x18] sm:$0xff]
    %v51 = vld [vmem:[#allocation5 + $0x20] sm:$0xff]
    %v52 = vld [vmem:[#allocation5 + $0x28] sm:$0xff]
    %v53 = vld [vmem:[#allocation5 + $0x30] sm:$0xff]
    %v54 = vld [vmem:[#allocation5 + $0x38] sm:$0xff]
    %v55 = vld [vmem:[#allocation5 + $0x40] sm:$0xff]
    %v56 = vld [vmem:[#allocation5 + $0x48] sm:$0xff]
    %v57 = vld [vmem:[#allocation5 + $0x50] sm:$0xff]
    %v58 = vld [vmem:[#allocation5 + $0x58] sm:$0xff]
    %v59 = vld [vmem:[#allocation5 + $0x60] sm:$0xff]
    %v60 = vld [vmem:[#allocation5 + $0x68] sm:$0xff]
    %v61 = vld [vmem:[#allocation5 + $0x70] sm:$0xff]
    %v62 = vld [vmem:[#allocation5 + $0x78] sm:$0xff]
    %v63 = vld [vmem:[#allocation5 + $0x80] sm:$0xff]
    %v64 = vld [vmem:[#allocation5 + $0x88] sm:$0xff]
    %v65 = vld [vmem:[#allocation5 + $0x90] sm:$0xff]
    %v66 = vld [vmem:[#allocation5 + $0x98] sm:$0xff]
    %v67 = vld [vmem:[#allocation5 + $0xa0] sm:$0xff]
    %v68 = vld [vmem:[#allocation5 + $0xa8] sm:$0xff]
    %v69 = vld [vmem:[#allocation5 + $0xb0] sm:$0xff]
    %v70 = vld [vmem:[#allocation5 + $0xb8] sm:$0xff]
    %v71 = vld [vmem:[#allocation5 + $0xc0] sm:$0xff]
    %v72 = vld [vmem:[#allocation5 + $0xc8] sm:$0xff]
    %v73 = vld [vmem:[#allocation5 + $0xd0] sm:$0xff]
    %v74 = vld [vmem:[#allocation5 + $0xd8] sm:$0xff]
    %v75 = vld [vmem:[%s1] sm:$0xff]
    %v76 = vld [vmem:[%s1 + $0x8] sm:$0xff]
    %v77 = vld [vmem:[%s1 + $0x10] sm:$0xff]
    %v78 = vld [vmem:[%s1 + $0x18] sm:$0xf]
    %v79 = vld [vmem:[%s2] sm:$0x1]
    %v81 = vlaneseq
    %v82 = vshrl.u32 %v81, 7
    %v83 = vsub.s32 0, %v82
    %v84 = vrot.slane %v79, %v83
    %vm86 = vcmask 228352
    %v88 = vsel %vm86, %v47, 0
    %v91 = vsel %vm86, %v48, 0
    %v94 = vsel %vm86, %v49, 0
    %v97 = vsel %vm86, %v50, 0
    %v100 = vsel %vm86, %v51, 0
    %v103 = vsel %vm86, %v52, 0
    %v106 = vsel %vm86, %v53, 0
    %v109 = vsel %vm86, %v54, 0
    %v112 = vsel %vm86, %v55, 0
    %v115 = vsel %vm86, %v56, 0
    %v118 = vsel %vm86, %v57, 0
    %v121 = vsel %vm86, %v58, 0
    %v124 = vsel %vm86, %v59, 0
    %v127 = vsel %vm86, %v60, 0
    %v130 = vsel %vm86, %v61, 0
    %v133 = vsel %vm86, %v62, 0
    %v136 = vsel %vm86, %v63, 0
    %v139 = vsel %vm86, %v64, 0
    %v142 = vsel %vm86, %v65, 0
    %v145 = vsel %vm86, %v66, 0
    %v148 = vsel %vm86, %v67, 0
    %v151 = vsel %vm86, %v68, 0
    %v154 = vsel %vm86, %v69, 0
    %v157 = vsel %vm86, %v70, 0
    %v160 = vsel %vm86, %v71, 0
    %v163 = vsel %vm86, %v72, 0
    %v166 = vsel %vm86, %v73, 0
    %v169 = vsel %vm86, %v74, 0
    %vm171 = vcmask 1043456
    %v173 = vsel %vm171, %v78, 0
    %175 = vmatprep.subr.mxu0 0.0
    %176 = vmatpush1.msra.mxu0 %v75
    %177 = vmatprep.subr.mxu0 0.0
    %178 = vmatpush1.msra.mxu0 %v76
    %179 = vmatprep.subr.mxu0 0.0
    %180 = vmatpush1.msra.mxu0 %v77
    %181 = vmatprep.subr.mxu0 0.0
    %182 = vmatpush1.msra.mxu0 %v173
    %183 = vmatprep.subr.mxu0 0.0
    %184 = vmatpush1.msra.mxu0 0.0
    %185 = vmatprep.subr.mxu0 0.0
    %186 = vmatpush1.msra.mxu0 0.0
    %187 = vmatprep.subr.mxu0 0.0
    %188 = vmatpush1.msra.mxu0 0.0
    %189 = vmatprep.subr.mxu0 0.0
    %190 = vmatpush1.msra.mxu0 0.0
    %191 = vmatprep.subr.mxu0 0.0
    %192 = vmatpush1.msra.mxu0 0.0
    %193 = vmatprep.subr.mxu0 0.0
    %194 = vmatpush1.msra.mxu0 0.0
    %195 = vmatprep.subr.mxu0 0.0
    %196 = vmatpush1.msra.mxu0 0.0
    %197 = vmatprep.subr.mxu0 0.0
    %198 = vmatpush1.msra.mxu0 0.0
    %199 = vmatprep.subr.mxu0 0.0
    %200 = vmatpush1.msra.mxu0 0.0
    %201 = vmatprep.subr.mxu0 0.0
    %202 = vmatpush1.msra.mxu0 0.0
    %203 = vmatprep.subr.mxu0 0.0
    %204 = vmatpush1.msra.mxu0 0.0
    %205 = vmatprep.subr.mxu0 0.0
    %206 = vmatpush1.msra.mxu0 0.0
    %207 = vmatprep.subr.mxu0 0.0
    %208 = vmatpush1.msra.mxu0 0.0
    %209 = vmatprep.subr.mxu0 0.0
    %210 = vmatpush1.msra.mxu0 0.0
    %211 = vmatprep.subr.mxu0 0.0
    %212 = vmatpush1.msra.mxu0 0.0
    %213 = vmatprep.subr.mxu0 0.0
    %214 = vmatpush1.msra.mxu0 0.0
    %215 = vmatprep.subr.mxu0 0.0
    %216 = vmatpush1.msra.mxu0 0.0
    %217 = vmatprep.subr.mxu0 0.0
    %218 = vmatpush1.msra.mxu0 0.0
    %219 = vmatprep.subr.mxu0 0.0
    %220 = vmatpush1.msra.mxu0 0.0
    %221 = vmatprep.subr.mxu0 0.0
    %222 = vmatpush1.msra.mxu0 0.0
    %223 = vmatprep.subr.mxu0 0.0
    %224 = vmatpush1.msra.mxu0 0.0
    %225 = vmatprep.subr.mxu0 0.0
    %226 = vmatpush1.msra.mxu0 0.0
    %227 = vmatprep.subr.mxu0 0.0
    %228 = vmatpush1.msra.mxu0 0.0
    %229 = vmatprep.subr.mxu0 0.0
    %230 = vmatpush1.msra.mxu0 0.0
    %231 = vmatprep.subr.mxu0 0.0
    %232 = vmatpush1.msra.mxu0 0.0
    %233 = vmatprep.subr.mxu0 0.0
    %234 = vmatpush1.msra.mxu0 0.0
    %235 = vmatprep.subr.mxu0 0.0
    %236 = vmatpush1.msra.mxu0 0.0
    %237 = vmatprep.subr.mxu0 0.0
    %238 = vmatpush1.msra.mxu0 0.0
    %239 = vmatprep.mubr.f32.mxu0 0.0
    %240 = vmatmul.mubr.f32.gmra.mrb[0].mxu0 %v88
    %v241 = vpop.f32.mrb[0].mxu0
    %v242 = vadd.f32 %v84, %v241
    %v243 = vpop.f32.mrb[0].mxu0
    %244 = vmatprep.mubr.f32.mxu0 0.0
    %245 = vmatmul.mubr.f32.gmra.mrb[0].mxu0 %v91
    %v246 = vpop.f32.mrb[0].mxu0
    %v247 = vadd.f32 %v84, %v246
    %v248 = vpop.f32.mrb[0].mxu0
    %249 = vmatprep.mubr.f32.mxu0 0.0
    %250 = vmatmul.mubr.f32.gmra.mrb[0].mxu0 %v94
    %v251 = vpop.f32.mrb[0].mxu0
    %v252 = vadd.f32 %v84, %v251
    %v253 = vpop.f32.mrb[0].mxu0
    %254 = vmatprep.mubr.f32.mxu0 0.0
    %255 = vmatmul.mubr.f32.gmra.mrb[0].mxu0 %v97
    %v256 = vpop.f32.mrb[0].mxu0
    %v257 = vadd.f32 %v84, %v256
    %v258 = vpop.f32.mrb[0].mxu0
    %259 = vmatprep.mubr.f32.mxu0 0.0
    %260 = vmatmul.mubr.f32.gmra.mrb[0].mxu0 %v100
    %v261 = vpop.f32.mrb[0].mxu0
    %v262 = vadd.f32 %v84, %v261
    %v263 = vpop.f32.mrb[0].mxu0
    %264 = vmatprep.mubr.f32.mxu0 0.0
    %265 = vmatmul.mubr.f32.gmra.mrb[0].mxu0 %v103
    %v266 = vpop.f32.mrb[0].mxu0
    %v267 = vadd.f32 %v84, %v266
    %v268 = vpop.f32.mrb[0].mxu0
    %269 = vmatprep.mubr.f32.mxu0 0.0
    %270 = vmatmul.mubr.f32.gmra.mrb[0].mxu0 %v106
    %v271 = vpop.f32.mrb[0].mxu0
    %v272 = vadd.f32 %v84, %v271
    %v273 = vpop.f32.mrb[0].mxu0
    %274 = vmatprep.mubr.f32.mxu0 0.0
    %275 = vmatmul.mubr.f32.gmra.mrb[0].mxu0 %v109
    %v276 = vpop.f32.mrb[0].mxu0
    %v277 = vadd.f32 %v84, %v276
    %v278 = vpop.f32.mrb[0].mxu0
    %279 = vmatprep.mubr.f32.mxu0 0.0
    %280 = vmatmul.mubr.f32.gmra.mrb[0].mxu0 %v112
    %v281 = vpop.f32.mrb[0].mxu0
    %v282 = vadd.f32 %v84, %v281
    %v283 = vpop.f32.mrb[0].mxu0
    %284 = vmatprep.mubr.f32.mxu0 0.0
    %285 = vmatmul.mubr.f32.gmra.mrb[0].mxu0 %v115
    %v286 = vpop.f32.mrb[0].mxu0
    %v287 = vadd.f32 %v84, %v286
    %v288 = vpop.f32.mrb[0].mxu0
    %289 = vmatprep.mubr.f32.mxu0 0.0
    %290 = vmatmul.mubr.f32.gmra.mrb[0].mxu0 %v118
    %v291 = vpop.f32.mrb[0].mxu0
    %v292 = vadd.f32 %v84, %v291
    %v293 = vpop.f32.mrb[0].mxu0
    %294 = vmatprep.mubr.f32.mxu0 0.0
    %295 = vmatmul.mubr.f32.gmra.mrb[0].mxu0 %v121
    %v296 = vpop.f32.mrb[0].mxu0
    %v297 = vadd.f32 %v84, %v296
    %v298 = vpop.f32.mrb[0].mxu0
    %299 = vmatprep.mubr.f32.mxu0 0.0
    %300 = vmatmul.mubr.f32.gmra.mrb[0].mxu0 %v124
    %v301 = vpop.f32.mrb[0].mxu0
    %v302 = vadd.f32 %v84, %v301
    %v303 = vpop.f32.mrb[0].mxu0
    %304 = vmatprep.mubr.f32.mxu0 0.0
    %305 = vmatmul.mubr.f32.gmra.mrb[0].mxu0 %v127
    %v306 = vpop.f32.mrb[0].mxu0
    %v307 = vadd.f32 %v84, %v306
    %v308 = vpop.f32.mrb[0].mxu0
    %309 = vmatprep.mubr.f32.mxu0 0.0
    %310 = vmatmul.mubr.f32.gmra.mrb[0].mxu0 %v130
    %v311 = vpop.f32.mrb[0].mxu0
    %v312 = vadd.f32 %v84, %v311
    %v313 = vpop.f32.mrb[0].mxu0
    %314 = vmatprep.mubr.f32.mxu0 0.0
    %315 = vmatmul.mubr.f32.gmra.mrb[0].mxu0 %v133
    %v316 = vpop.f32.mrb[0].mxu0
    %v317 = vadd.f32 %v84, %v316
    %v318 = vpop.f32.mrb[0].mxu0
    %319 = vmatprep.mubr.f32.mxu0 0.0
    %320 = vmatmul.mubr.f32.gmra.mrb[0].mxu0 %v136
    %v321 = vpop.f32.mrb[0].mxu0
    %v322 = vadd.f32 %v84, %v321
    %v323 = vpop.f32.mrb[0].mxu0
    %324 = vmatprep.mubr.f32.mxu0 0.0
    %325 = vmatmul.mubr.f32.gmra.mrb[0].mxu0 %v139
    %v326 = vpop.f32.mrb[0].mxu0
    %v327 = vadd.f32 %v84, %v326
    %v328 = vpop.f32.mrb[0].mxu0
    %329 = vmatprep.mubr.f32.mxu0 0.0
    %330 = vmatmul.mubr.f32.gmra.mrb[0].mxu0 %v142
    %v331 = vpop.f32.mrb[0].mxu0
    %v332 = vadd.f32 %v84, %v331
    %v333 = vpop.f32.mrb[0].mxu0
    %334 = vmatprep.mubr.f32.mxu0 0.0
    %335 = vmatmul.mubr.f32.gmra.mrb[0].mxu0 %v145
    %v336 = vpop.f32.mrb[0].mxu0
    %v337 = vadd.f32 %v84, %v336
    %v338 = vpop.f32.mrb[0].mxu0
    %339 = vmatprep.mubr.f32.mxu0 0.0
    %340 = vmatmul.mubr.f32.gmra.mrb[0].mxu0 %v148
    %v341 = vpop.f32.mrb[0].mxu0
    %v342 = vadd.f32 %v84, %v341
    %v343 = vpop.f32.mrb[0].mxu0
    %344 = vmatprep.mubr.f32.mxu0 0.0
    %345 = vmatmul.mubr.f32.gmra.mrb[0].mxu0 %v151
    %v346 = vpop.f32.mrb[0].mxu0
    %v347 = vadd.f32 %v84, %v346
    %v348 = vpop.f32.mrb[0].mxu0
    %349 = vmatprep.mubr.f32.mxu0 0.0
    %350 = vmatmul.mubr.f32.gmra.mrb[0].mxu0 %v154
    %v351 = vpop.f32.mrb[0].mxu0
    %v352 = vadd.f32 %v84, %v351
    %v353 = vpop.f32.mrb[0].mxu0
    %354 = vmatprep.mubr.f32.mxu0 0.0
    %355 = vmatmul.mubr.f32.gmra.mrb[0].mxu0 %v157
    %v356 = vpop.f32.mrb[0].mxu0
    %v357 = vadd.f32 %v84, %v356
    %v358 = vpop.f32.mrb[0].mxu0
    %359 = vmatprep.mubr.f32.mxu0 0.0
    %360 = vmatmul.mubr.f32.gmra.mrb[0].mxu0 %v160
    %v361 = vpop.f32.mrb[0].mxu0
    %v362 = vadd.f32 %v84, %v361
    %v363 = vpop.f32.mrb[0].mxu0
    %364 = vmatprep.mubr.f32.mxu0 0.0
    %365 = vmatmul.mubr.f32.gmra.mrb[0].mxu0 %v163
    %v366 = vpop.f32.mrb[0].mxu0
    %v367 = vadd.f32 %v84, %v366
    %v368 = vpop.f32.mrb[0].mxu0
    %369 = vmatprep.mubr.f32.mxu0 0.0
    %370 = vmatmul.mubr.f32.gmra.mrb[0].mxu0 %v166
    %v371 = vpop.f32.mrb[0].mxu0
    %v372 = vadd.f32 %v84, %v371
    %v373 = vpop.f32.mrb[0].mxu0
    %374 = vmatprep.mubr.f32.mxu0 0.0
    %375 = vmatmul.mubr.f32.gmra.mrb[0].mxu0 %v169
    %v376 = vpop.f32.mrb[0].mxu0
    %v377 = vadd.f32 %v84, %v376
    %v378 = vpop.f32.mrb[0].mxu0
    %379 = vdwg.mxu0
    %vm380 = vcmask 15360
    %381 = vst.msk [vmem:[#allocation2] sm:$0xff] %vm380, %v242
    %382 = vst.msk [vmem:[#allocation2 + $0x8] sm:$0xff] %vm380, %v247
    %383 = vst.msk [vmem:[#allocation2 + $0x10] sm:$0xff] %vm380, %v252
    %384 = vst.msk [vmem:[#allocation2 + $0x18] sm:$0xff] %vm380, %v257
    %385 = vst.msk [vmem:[#allocation2 + $0x20] sm:$0xff] %vm380, %v262
    %386 = vst.msk [vmem:[#allocation2 + $0x28] sm:$0xff] %vm380, %v267
    %387 = vst.msk [vmem:[#allocation2 + $0x30] sm:$0xff] %vm380, %v272
    %388 = vst.msk [vmem:[#allocation2 + $0x38] sm:$0xff] %vm380, %v277
    %389 = vst.msk [vmem:[#allocation2 + $0x40] sm:$0xff] %vm380, %v282
    %390 = vst.msk [vmem:[#allocation2 + $0x48] sm:$0xff] %vm380, %v287
    %391 = vst.msk [vmem:[#allocation2 + $0x50] sm:$0xff] %vm380, %v292
    %392 = vst.msk [vmem:[#allocation2 + $0x58] sm:$0xff] %vm380, %v297
    %393 = vst.msk [vmem:[#allocation2 + $0x60] sm:$0xff] %vm380, %v302
    %394 = vst.msk [vmem:[#allocation2 + $0x68] sm:$0xff] %vm380, %v307
    %395 = vst.msk [vmem:[#allocation2 + $0x70] sm:$0xff] %vm380, %v312
    %396 = vst.msk [vmem:[#allocation2 + $0x78] sm:$0xff] %vm380, %v317
    %397 = vst.msk [vmem:[#allocation2 + $0x80] sm:$0xff] %vm380, %v322
    %398 = vst.msk [vmem:[#allocation2 + $0x88] sm:$0xff] %vm380, %v327
    %399 = vst.msk [vmem:[#allocation2 + $0x90] sm:$0xff] %vm380, %v332
    %400 = vst.msk [vmem:[#allocation2 + $0x98] sm:$0xff] %vm380, %v337
    %401 = vst.msk [vmem:[#allocation2 + $0xa0] sm:$0xff] %vm380, %v342
    %402 = vst.msk [vmem:[#allocation2 + $0xa8] sm:$0xff] %vm380, %v347
    %403 = vst.msk [vmem:[#allocation2 + $0xb0] sm:$0xff] %vm380, %v352
    %404 = vst.msk [vmem:[#allocation2 + $0xb8] sm:$0xff] %vm380, %v357
    %405 = vst.msk [vmem:[#allocation2 + $0xc0] sm:$0xff] %vm380, %v362
    %406 = vst.msk [vmem:[#allocation2 + $0xc8] sm:$0xff] %vm380, %v367
    %407 = vst.msk [vmem:[#allocation2 + $0xd0] sm:$0xff] %vm380, %v372
    %408 = vst.msk [vmem:[#allocation2 + $0xd8] sm:$0xff] %vm380, %v377
    %437 = vrot.lane.b32.xlu0 %v242, 126
    %v438 = vpop.permute.xlu0 %437
    %439 = vrot.lane.b32.xlu0 %v247, 126
    %v440 = vpop.permute.xlu0 %439
    %441 = vrot.lane.b32.xlu0 %v252, 126
    %v442 = vpop.permute.xlu0 %441
    %443 = vrot.lane.b32.xlu0 %v257, 126
    %v444 = vpop.permute.xlu0 %443
    %445 = vrot.lane.b32.xlu0 %v262, 126
    %v446 = vpop.permute.xlu0 %445
    %447 = vrot.lane.b32.xlu0 %v267, 126
    %v448 = vpop.permute.xlu0 %447
    %449 = vrot.lane.b32.xlu0 %v272, 126
    %v450 = vpop.permute.xlu0 %449
    %451 = vrot.lane.b32.xlu0 %v277, 126
    %v452 = vpop.permute.xlu0 %451
    %453 = vrot.lane.b32.xlu0 %v282, 126
    %v454 = vpop.permute.xlu0 %453
    %455 = vrot.lane.b32.xlu0 %v287, 126
    %v456 = vpop.permute.xlu0 %455
    %457 = vrot.lane.b32.xlu0 %v292, 126
    %v458 = vpop.permute.xlu0 %457
    %459 = vrot.lane.b32.xlu0 %v297, 126
    %v460 = vpop.permute.xlu0 %459
    %461 = vrot.lane.b32.xlu0 %v302, 126
    %v462 = vpop.permute.xlu0 %461
    %463 = vrot.lane.b32.xlu0 %v307, 126
    %v464 = vpop.permute.xlu0 %463
    %465 = vrot.lane.b32.xlu0 %v312, 126
    %v466 = vpop.permute.xlu0 %465
    %467 = vrot.lane.b32.xlu0 %v317, 126
    %v468 = vpop.permute.xlu0 %467
    %469 = vrot.lane.b32.xlu0 %v322, 126
    %v470 = vpop.permute.xlu0 %469
    %471 = vrot.lane.b32.xlu0 %v327, 126
    %v472 = vpop.permute.xlu0 %471
    %473 = vrot.lane.b32.xlu0 %v332, 126
    %v474 = vpop.permute.xlu0 %473
    %475 = vrot.lane.b32.xlu0 %v337, 126
    %v476 = vpop.permute.xlu0 %475
    %477 = vrot.lane.b32.xlu0 %v342, 126
    %v478 = vpop.permute.xlu0 %477
    %479 = vrot.lane.b32.xlu0 %v347, 126
    %v480 = vpop.permute.xlu0 %479
    %481 = vrot.lane.b32.xlu0 %v352, 126
    %v482 = vpop.permute.xlu0 %481
    %483 = vrot.lane.b32.xlu0 %v357, 126
    %v484 = vpop.permute.xlu0 %483
    %485 = vrot.lane.b32.xlu0 %v362, 126
    %v486 = vpop.permute.xlu0 %485
    %487 = vrot.lane.b32.xlu0 %v367, 126
    %v488 = vpop.permute.xlu0 %487
    %489 = vrot.lane.b32.xlu0 %v372, 126
    %v490 = vpop.permute.xlu0 %489
    %491 = vrot.lane.b32.xlu0 %v377, 126
    %v492 = vpop.permute.xlu0 %491
    %521 = vst.msk [vmem:[#allocation3] sm:$0xff] %vm380, %v438
    %522 = vst.msk [vmem:[#allocation3 + $0x8] sm:$0xff] %vm380, %v440
    %523 = vst.msk [vmem:[#allocation3 + $0x10] sm:$0xff] %vm380, %v442
    %524 = vst.msk [vmem:[#allocation3 + $0x18] sm:$0xff] %vm380, %v444
    %525 = vst.msk [vmem:[#allocation3 + $0x20] sm:$0xff] %vm380, %v446
    %526 = vst.msk [vmem:[#allocation3 + $0x28] sm:$0xff] %vm380, %v448
    %527 = vst.msk [vmem:[#allocation3 + $0x30] sm:$0xff] %vm380, %v450
    %528 = vst.msk [vmem:[#allocation3 + $0x38] sm:$0xff] %vm380, %v452
    %529 = vst.msk [vmem:[#allocation3 + $0x40] sm:$0xff] %vm380, %v454
    %530 = vst.msk [vmem:[#allocation3 + $0x48] sm:$0xff] %vm380, %v456
    %531 = vst.msk [vmem:[#allocation3 + $0x50] sm:$0xff] %vm380, %v458
    %532 = vst.msk [vmem:[#allocation3 + $0x58] sm:$0xff] %vm380, %v460
    %533 = vst.msk [vmem:[#allocation3 + $0x60] sm:$0xff] %vm380, %v462
    %534 = vst.msk [vmem:[#allocation3 + $0x68] sm:$0xff] %vm380, %v464
    %535 = vst.msk [vmem:[#allocation3 + $0x70] sm:$0xff] %vm380, %v466
    %536 = vst.msk [vmem:[#allocation3 + $0x78] sm:$0xff] %vm380, %v468
    %537 = vst.msk [vmem:[#allocation3 + $0x80] sm:$0xff] %vm380, %v470
    %538 = vst.msk [vmem:[#allocation3 + $0x88] sm:$0xff] %vm380, %v472
    %539 = vst.msk [vmem:[#allocation3 + $0x90] sm:$0xff] %vm380, %v474
    %540 = vst.msk [vmem:[#allocation3 + $0x98] sm:$0xff] %vm380, %v476
    %541 = vst.msk [vmem:[#allocation3 + $0xa0] sm:$0xff] %vm380, %v478
    %542 = vst.msk [vmem:[#allocation3 + $0xa8] sm:$0xff] %vm380, %v480
    %543 = vst.msk [vmem:[#allocation3 + $0xb0] sm:$0xff] %vm380, %v482
    %544 = vst.msk [vmem:[#allocation3 + $0xb8] sm:$0xff] %vm380, %v484
    %545 = vst.msk [vmem:[#allocation3 + $0xc0] sm:$0xff] %vm380, %v486
    %546 = vst.msk [vmem:[#allocation3 + $0xc8] sm:$0xff] %vm380, %v488
    %547 = vst.msk [vmem:[#allocation3 + $0xd0] sm:$0xff] %vm380, %v490
    %548 = vst.msk [vmem:[#allocation3 + $0xd8] sm:$0xff] %vm380, %v492
    %549 = vrot.lane.b32.xlu0 %v242, 124
    %v550 = vpop.permute.xlu0 %549
    %551 = vrot.lane.b32.xlu0 %v247, 124
    %v552 = vpop.permute.xlu0 %551
    %553 = vrot.lane.b32.xlu0 %v252, 124
    %v554 = vpop.permute.xlu0 %553
    %555 = vrot.lane.b32.xlu0 %v257, 124
    %v556 = vpop.permute.xlu0 %555
    %557 = vrot.lane.b32.xlu0 %v262, 124
    %v558 = vpop.permute.xlu0 %557
    %559 = vrot.lane.b32.xlu0 %v267, 124
    %v560 = vpop.permute.xlu0 %559
    %561 = vrot.lane.b32.xlu0 %v272, 124
    %v562 = vpop.permute.xlu0 %561
    %563 = vrot.lane.b32.xlu0 %v277, 124
    %v564 = vpop.permute.xlu0 %563
    %565 = vrot.lane.b32.xlu0 %v282, 124
    %v566 = vpop.permute.xlu0 %565
    %567 = vrot.lane.b32.xlu0 %v287, 124
    %v568 = vpop.permute.xlu0 %567
    %569 = vrot.lane.b32.xlu0 %v292, 124
    %v570 = vpop.permute.xlu0 %569
    %571 = vrot.lane.b32.xlu0 %v297, 124
    %v572 = vpop.permute.xlu0 %571
    %573 = vrot.lane.b32.xlu0 %v302, 124
    %v574 = vpop.permute.xlu0 %573
    %575 = vrot.lane.b32.xlu0 %v307, 124
    %v576 = vpop.permute.xlu0 %575
    %577 = vrot.lane.b32.xlu0 %v312, 124
    %v578 = vpop.permute.xlu0 %577
    %579 = vrot.lane.b32.xlu0 %v317, 124
    %v580 = vpop.permute.xlu0 %579
    %581 = vrot.lane.b32.xlu0 %v322, 124
    %v582 = vpop.permute.xlu0 %581
    %583 = vrot.lane.b32.xlu0 %v327, 124
    %v584 = vpop.permute.xlu0 %583
    %585 = vrot.lane.b32.xlu0 %v332, 124
    %v586 = vpop.permute.xlu0 %585
    %587 = vrot.lane.b32.xlu0 %v337, 124
    %v588 = vpop.permute.xlu0 %587
    %589 = vrot.lane.b32.xlu0 %v342, 124
    %v590 = vpop.permute.xlu0 %589
    %591 = vrot.lane.b32.xlu0 %v347, 124
    %v592 = vpop.permute.xlu0 %591
    %593 = vrot.lane.b32.xlu0 %v352, 124
    %v594 = vpop.permute.xlu0 %593
    %595 = vrot.lane.b32.xlu0 %v357, 124
    %v596 = vpop.permute.xlu0 %595
    %597 = vrot.lane.b32.xlu0 %v362, 124
    %v598 = vpop.permute.xlu0 %597
    %599 = vrot.lane.b32.xlu0 %v367, 124
    %v600 = vpop.permute.xlu0 %599
    %601 = vrot.lane.b32.xlu0 %v372, 124
    %v602 = vpop.permute.xlu0 %601
    %603 = vrot.lane.b32.xlu0 %v377, 124
    %v604 = vpop.permute.xlu0 %603
    %633 = vst.msk [vmem:[#allocation4] sm:$0xff] %vm380, %v550
    %634 = vst.msk [vmem:[#allocation4 + $0x8] sm:$0xff] %vm380, %v552
    %635 = vst.msk [vmem:[#allocation4 + $0x10] sm:$0xff] %vm380, %v554
    %636 = vst.msk [vmem:[#allocation4 + $0x18] sm:$0xff] %vm380, %v556
    %637 = vst.msk [vmem:[#allocation4 + $0x20] sm:$0xff] %vm380, %v558
    %638 = vst.msk [vmem:[#allocation4 + $0x28] sm:$0xff] %vm380, %v560
    %639 = vst.msk [vmem:[#allocation4 + $0x30] sm:$0xff] %vm380, %v562
    %640 = vst.msk [vmem:[#allocation4 + $0x38] sm:$0xff] %vm380, %v564
    %641 = vst.msk [vmem:[#allocation4 + $0x40] sm:$0xff] %vm380, %v566
    %642 = vst.msk [vmem:[#allocation4 + $0x48] sm:$0xff] %vm380, %v568
    %643 = vst.msk [vmem:[#allocation4 + $0x50] sm:$0xff] %vm380, %v570
    %644 = vst.msk [vmem:[#allocation4 + $0x58] sm:$0xff] %vm380, %v572
    %645 = vst.msk [vmem:[#allocation4 + $0x60] sm:$0xff] %vm380, %v574
    %646 = vst.msk [vmem:[#allocation4 + $0x68] sm:$0xff] %vm380, %v576
    %647 = vst.msk [vmem:[#allocation4 + $0x70] sm:$0xff] %vm380, %v578
    %648 = vst.msk [vmem:[#allocation4 + $0x78] sm:$0xff] %vm380, %v580
    %649 = vst.msk [vmem:[#allocation4 + $0x80] sm:$0xff] %vm380, %v582
    %650 = vst.msk [vmem:[#allocation4 + $0x88] sm:$0xff] %vm380, %v584
    %651 = vst.msk [vmem:[#allocation4 + $0x90] sm:$0xff] %vm380, %v586
    %652 = vst.msk [vmem:[#allocation4 + $0x98] sm:$0xff] %vm380, %v588
    %653 = vst.msk [vmem:[#allocation4 + $0xa0] sm:$0xff] %vm380, %v590
    %654 = vst.msk [vmem:[#allocation4 + $0xa8] sm:$0xff] %vm380, %v592
    %655 = vst.msk [vmem:[#allocation4 + $0xb0] sm:$0xff] %vm380, %v594
    %656 = vst.msk [vmem:[#allocation4 + $0xb8] sm:$0xff] %vm380, %v596
    %657 = vst.msk [vmem:[#allocation4 + $0xc0] sm:$0xff] %vm380, %v598
    %658 = vst.msk [vmem:[#allocation4 + $0xc8] sm:$0xff] %vm380, %v600
    %659 = vst.msk [vmem:[#allocation4 + $0xd0] sm:$0xff] %vm380, %v602
    %660 = vst.msk [vmem:[#allocation4 + $0xd8] sm:$0xff] %vm380, %v604
    %v661 = vld [vmem:[%s6] sm:$0x1]
    %v663 = vlaneseq
    %v664 = vshrl.u32 %v663, 7
    %v665 = vsub.s32 0, %v664
    %v666 = vrot.slane %v661, %v665
    %v668 = vld [vmem:[%s8] sm:$0x1]
    %v670 = vlaneseq
    %v671 = vshrl.u32 %v670, 7
    %v672 = vsub.s32 0, %v671
    %v673 = vrot.slane %v668, %v672
    %v675 = vld [vmem:[%s3] sm:$0x1]
    %v676 = vlaneseq
    %v677 = vshrl.u32 %v676, 7
    %v678 = vsub.s32 0, %v677
    %v679 = vrot.slane %v675, %v678
    %v680 = vld [vmem:[%s3 + $0x1] sm:$0x1]
    %v681 = vlaneseq
    %v682 = vshrl.u32 %v681, 7
    %v683 = vsub.s32 0, %v682
    %v684 = vrot.slane %v680, %v683
    %v685 = vld [vmem:[%s4] sm:$0x1]
    %v686 = vlaneseq
    %v687 = vshrl.u32 %v686, 7
    %v688 = vsub.s32 0, %v687
    %v689 = vrot.slane %v685, %v688
    %v690 = vld [vmem:[%s4 + $0x1] sm:$0x1]
    %v691 = vlaneseq
    %v692 = vshrl.u32 %v691, 7
    %v693 = vsub.s32 0, %v692
    %v694 = vrot.slane %v690, %v693
    %v695 = vld [vmem:[%s5] sm:$0x1]
    %v696 = vlaneseq
    %v697 = vshrl.u32 %v696, 7
    %v698 = vsub.s32 0, %v697
    %v699 = vrot.slane %v695, %v698
    %v700 = vld [vmem:[%s5 + $0x1] sm:$0x1]
    %v701 = vlaneseq
    %v702 = vshrl.u32 %v701, 7
    %v703 = vsub.s32 0, %v702
    %v704 = vrot.slane %v700, %v703
    %v705 = vld [vmem:[#allocation2] sm:$0xff]
    %v706 = vld [vmem:[#allocation3] sm:$0xff]
    %v707 = vld [vmem:[#allocation4] sm:$0xff]
    %v708 = vmul.f32 %v679, 0.0
    %v709 = vmul.f32 %v684, 0.0
    %v710 = vadd.f32 %v708, %v709
    %v711 = vadd.f32 %v705, %v710
    %v712 = vxor.u32 %v711, 2147483648
    %v713 = vmul.f32 %v712, 1.442695
    %v714 = vpow.pop %v713
    %v715 = vadd.f32 %v714, 1.0
    %v716 = vrcp.pop %v715
    %v717 = vmul.f32 1.0, %v716
    %v718 = vmul.f32 %v689, 0.0
    %v719 = vmul.f32 %v694, 0.0
    %v720 = vadd.f32 %v718, %v719
    %v721 = vadd.f32 %v706, %v720
    %v722 = vxor.u32 %v721, 2147483648
    %v723 = vmul.f32 %v722, 1.442695
    %v724 = vpow.pop %v723
    %v725 = vadd.f32 %v724, 1.0
    %v726 = vrcp.pop %v725
    %v727 = vmul.f32 1.0, %v726
    %v728 = vmul.f32 %v699, 0.0
    %v729 = vmul.f32 %v704, 0.0
    %v730 = vadd.f32 %v728, %v729
    %v731 = vadd.f32 %v730, %v666
    %v732 = vmul.f32 %v717, %v731
    %v733 = vadd.f32 %v707, %v732
    %v734 = vtanh.pop %v733
    %v735 = vsub.f32 1.0, %v727
    %v736 = vmul.f32 %v735, %v734
    %v737 = vmul.f32 %v727, 0.0
    %v738 = vadd.f32 %v736, %v737
    %v739 = vld [vmem:[%s7] sm:$0x3]
    %741 = vset.pattern.permute.xlu0 0
    %742 = vperm.xlu0 %741, %v738
    %v743 = vpop.permute.xlu0 %742
    %v745 = vlaneseq
    %v746 = vshrl.u32 %v745, 7
    %v747 = vsub.s32 0, %v746
    %v748 = vrot.slane %v739, %v747
    %v749 = vmul.f32 %v743, %v748
    %v750 = vadd.f32 %v749, 0.0
    %751 = vset.pattern.permute.xlu0 1
    %752 = vperm.xlu0 %751, %v738
    %v753 = vpop.permute.xlu0 %752
    %v755 = vlaneseq
    %v756 = vshrl.u32 %v755, 7
    %v757 = vsub.s32 1, %v756
    %v758 = vrot.slane %v739, %v757
    %v759 = vmul.f32 %v753, %v758
    %v760 = vadd.f32 %v750, %v759
    %s761 = scalar_lea.vmem [#allocation2], 8
    %v762 = vld [vmem:[%s761] sm:$0xff]
    %s763 = scalar_lea.vmem [#allocation3], 8
    %v764 = vld [vmem:[%s763] sm:$0xff]
    %s765 = scalar_lea.vmem [#allocation4], 8
    %v766 = vld [vmem:[%s765] sm:$0xff]
    %v767 = vmul.f32 %v743, %v679
    %v768 = vmul.f32 %v753, %v684
    %v769 = vadd.f32 %v767, %v768
    %v770 = vadd.f32 %v762, %v769
    %v771 = vxor.u32 %v770, 2147483648
    %v772 = vmul.f32 %v771, 1.442695
    %v773 = vpow.pop %v772
    %v774 = vadd.f32 %v773, 1.0
    %v775 = vrcp.pop %v774
    %v776 = vmul.f32 1.0, %v775
    %v777 = vmul.f32 %v743, %v689
    %v778 = vmul.f32 %v753, %v694
    %v779 = vadd.f32 %v777, %v778
    %v780 = vadd.f32 %v764, %v779
    %v781 = vxor.u32 %v780, 2147483648
    %v782 = vmul.f32 %v781, 1.442695
    %v783 = vpow.pop %v782
    %v784 = vadd.f32 %v783, 1.0
    %v785 = vrcp.pop %v784
    %v786 = vmul.f32 1.0, %v785
    %v787 = vmul.f32 %v743, %v699
    %v788 = vmul.f32 %v753, %v704
    %v789 = vadd.f32 %v787, %v788
    %v790 = vadd.f32 %v789, %v666
    %v791 = vmul.f32 %v776, %v790
    %v792 = vadd.f32 %v766, %v791
    %v793 = vtanh.pop %v792
    %v794 = vsub.f32 1.0, %v786
    %v795 = vmul.f32 %v794, %v793
    %v796 = vmul.f32 %v786, %v738
    %v797 = vadd.f32 %v795, %v796
    %s798 = scalar_lea.vmem %s7, 2
    %v799 = vld [vmem:[%s798] sm:$0x3]
    %801 = vset.pattern.permute.xlu0 0
    %802 = vperm.xlu0 %801, %v797
    %v803 = vpop.permute.xlu0 %802
    %v805 = vlaneseq
    %v806 = vshrl.u32 %v805, 7
    %v807 = vsub.s32 0, %v806
    %v808 = vrot.slane %v799, %v807
    %v809 = vmul.f32 %v803, %v808
    %v810 = vadd.f32 %v760, %v809
    %811 = vset.pattern.permute.xlu0 1
    %812 = vperm.xlu0 %811, %v797
    %v813 = vpop.permute.xlu0 %812
    %v815 = vlaneseq
    %v816 = vshrl.u32 %v815, 7
    %v817 = vsub.s32 1, %v816
    %v818 = vrot.slane %v799, %v817
    %v819 = vmul.f32 %v813, %v818
    %v820 = vadd.f32 %v810, %v819
    %s821 = scalar_lea.vmem [#allocation2], 16
    %v822 = vld [vmem:[%s821] sm:$0xff]
    %s823 = scalar_lea.vmem [#allocation3], 16
    %v824 = vld [vmem:[%s823] sm:$0xff]
    %s825 = scalar_lea.vmem [#allocation4], 16
    %v826 = vld [vmem:[%s825] sm:$0xff]
    %v827 = vmul.f32 %v803, %v679
    %v828 = vmul.f32 %v813, %v684
    %v829 = vadd.f32 %v827, %v828
    %v830 = vadd.f32 %v822, %v829
    %v831 = vxor.u32 %v830, 2147483648
    %v832 = vmul.f32 %v831, 1.442695
    %v833 = vpow.pop %v832
    %v834 = vadd.f32 %v833, 1.0
    %v835 = vrcp.pop %v834
    %v836 = vmul.f32 1.0, %v835
    %v837 = vmul.f32 %v803, %v689
    %v838 = vmul.f32 %v813, %v694
    %v839 = vadd.f32 %v837, %v838
    %v840 = vadd.f32 %v824, %v839
    %v841 = vxor.u32 %v840, 2147483648
    %v842 = vmul.f32 %v841, 1.442695
    %v843 = vpow.pop %v842
    %v844 = vadd.f32 %v843, 1.0
    %v845 = vrcp.pop %v844
    %v846 = vmul.f32 1.0, %v845
    %v847 = vmul.f32 %v803, %v699
    %v848 = vmul.f32 %v813, %v704
    %v849 = vadd.f32 %v847, %v848
    %v850 = vadd.f32 %v849, %v666
    %v851 = vmul.f32 %v836, %v850
    %v852 = vadd.f32 %v826, %v851
    %v853 = vtanh.pop %v852
    %v854 = vsub.f32 1.0, %v846
    %v855 = vmul.f32 %v854, %v853
    %v856 = vmul.f32 %v846, %v797
    %v857 = vadd.f32 %v855, %v856
    %s858 = scalar_lea.vmem %s7, 4
    %v859 = vld [vmem:[%s858] sm:$0x3]
    %861 = vset.pattern.permute.xlu0 0
    %862 = vperm.xlu0 %861, %v857
    %v863 = vpop.permute.xlu0 %862
    %v865 = vlaneseq
    %v866 = vshrl.u32 %v865, 7
    %v867 = vsub.s32 0, %v866
    %v868 = vrot.slane %v859, %v867
    %v869 = vmul.f32 %v863, %v868
    %v870 = vadd.f32 %v820, %v869
    %871 = vset.pattern.permute.xlu0 1
    %872 = vperm.xlu0 %871, %v857
    %v873 = vpop.permute.xlu0 %872
    %v875 = vlaneseq
    %v876 = vshrl.u32 %v875, 7
    %v877 = vsub.s32 1, %v876
    %v878 = vrot.slane %v859, %v877
    %v879 = vmul.f32 %v873, %v878
    %v880 = vadd.f32 %v870, %v879
    %s881 = scalar_lea.vmem [#allocation2], 24
    %v882 = vld [vmem:[%s881] sm:$0xff]
    %s883 = scalar_lea.vmem [#allocation3], 24
    %v884 = vld [vmem:[%s883] sm:$0xff]
    %s885 = scalar_lea.vmem [#allocation4], 24
    %v886 = vld [vmem:[%s885] sm:$0xff]
    %v887 = vmul.f32 %v863, %v679
    %v888 = vmul.f32 %v873, %v684
    %v889 = vadd.f32 %v887, %v888
    %v890 = vadd.f32 %v882, %v889
    %v891 = vxor.u32 %v890, 2147483648
    %v892 = vmul.f32 %v891, 1.442695
    %v893 = vpow.pop %v892
    %v894 = vadd.f32 %v893, 1.0
    %v895 = vrcp.pop %v894
    %v896 = vmul.f32 1.0, %v895
    %v897 = vmul.f32 %v863, %v689
    %v898 = vmul.f32 %v873, %v694
    %v899 = vadd.f32 %v897, %v898
    %v900 = vadd.f32 %v884, %v899
    %v901 = vxor.u32 %v900, 2147483648
    %v902 = vmul.f32 %v901, 1.442695
    %v903 = vpow.pop %v902
    %v904 = vadd.f32 %v903, 1.0
    %v905 = vrcp.pop %v904
    %v906 = vmul.f32 1.0, %v905
    %v907 = vmul.f32 %v863, %v699
    %v908 = vmul.f32 %v873, %v704
    %v909 = vadd.f32 %v907, %v908
    %v910 = vadd.f32 %v909, %v666
    %v911 = vmul.f32 %v896, %v910
    %v912 = vadd.f32 %v886, %v911
    %v913 = vtanh.pop %v912
    %v914 = vsub.f32 1.0, %v906
    %v915 = vmul.f32 %v914, %v913
    %v916 = vmul.f32 %v906, %v857
    %v917 = vadd.f32 %v915, %v916
    %s918 = scalar_lea.vmem %s7, 6
    %v919 = vld [vmem:[%s918] sm:$0x3]
    %921 = vset.pattern.permute.xlu0 0
    %922 = vperm.xlu0 %921, %v917
    %v923 = vpop.permute.xlu0 %922
    %v925 = vlaneseq
    %v926 = vshrl.u32 %v925, 7
    %v927 = vsub.s32 0, %v926
    %v928 = vrot.slane %v919, %v927
    %v929 = vmul.f32 %v923, %v928
    %v930 = vadd.f32 %v880, %v929
    %931 = vset.pattern.permute.xlu0 1
    %932 = vperm.xlu0 %931, %v917
    %v933 = vpop.permute.xlu0 %932
    %v935 = vlaneseq
    %v936 = vshrl.u32 %v935, 7
    %v937 = vsub.s32 1, %v936
    %v938 = vrot.slane %v919, %v937
    %v939 = vmul.f32 %v933, %v938
    %v940 = vadd.f32 %v930, %v939
    %s941 = scalar_lea.vmem [#allocation2], 32
    %v942 = vld [vmem:[%s941] sm:$0xff]
    %s943 = scalar_lea.vmem [#allocation3], 32
    %v944 = vld [vmem:[%s943] sm:$0xff]
    %s945 = scalar_lea.vmem [#allocation4], 32
    %v946 = vld [vmem:[%s945] sm:$0xff]
    %v947 = vmul.f32 %v923, %v679
    %v948 = vmul.f32 %v933, %v684
    %v949 = vadd.f32 %v947, %v948
    %v950 = vadd.f32 %v942, %v949
    %v951 = vxor.u32 %v950, 2147483648
    %v952 = vmul.f32 %v951, 1.442695
    %v953 = vpow.pop %v952
    %v954 = vadd.f32 %v953, 1.0
    %v955 = vrcp.pop %v954
    %v956 = vmul.f32 1.0, %v955
    %v957 = vmul.f32 %v923, %v689
    %v958 = vmul.f32 %v933, %v694
    %v959 = vadd.f32 %v957, %v958
    %v960 = vadd.f32 %v944, %v959
    %v961 = vxor.u32 %v960, 2147483648
    %v962 = vmul.f32 %v961, 1.442695
    %v963 = vpow.pop %v962
    %v964 = vadd.f32 %v963, 1.0
    %v965 = vrcp.pop %v964
    %v966 = vmul.f32 1.0, %v965
    %v967 = vmul.f32 %v923, %v699
    %v968 = vmul.f32 %v933, %v704
    %v969 = vadd.f32 %v967, %v968
    %v970 = vadd.f32 %v969, %v666
    %v971 = vmul.f32 %v956, %v970
    %v972 = vadd.f32 %v946, %v971
    %v973 = vtanh.pop %v972
    %v974 = vsub.f32 1.0, %v966
    %v975 = vmul.f32 %v974, %v973
    %v976 = vmul.f32 %v966, %v917
    %v977 = vadd.f32 %v975, %v976
    %s978 = scalar_lea.vmem %s7, 8
    %v979 = vld [vmem:[%s978] sm:$0x3]
    %981 = vset.pattern.permute.xlu0 0
    %982 = vperm.xlu0 %981, %v977
    %v983 = vpop.permute.xlu0 %982
    %v985 = vlaneseq
    %v986 = vshrl.u32 %v985, 7
    %v987 = vsub.s32 0, %v986
    %v988 = vrot.slane %v979, %v987
    %v989 = vmul.f32 %v983, %v988
    %v990 = vadd.f32 %v940, %v989
    %991 = vset.pattern.permute.xlu0 1
    %992 = vperm.xlu0 %991, %v977
    %v993 = vpop.permute.xlu0 %992
    %v995 = vlaneseq
    %v996 = vshrl.u32 %v995, 7
    %v997 = vsub.s32 1, %v996
    %v998 = vrot.slane %v979, %v997
    %v999 = vmul.f32 %v993, %v998
    %v1000 = vadd.f32 %v990, %v999
    %s1001 = scalar_lea.vmem [#allocation2], 40
    %v1002 = vld [vmem:[%s1001] sm:$0xff]
    %s1003 = scalar_lea.vmem [#allocation3], 40
    %v1004 = vld [vmem:[%s1003] sm:$0xff]
    %s1005 = scalar_lea.vmem [#allocation4], 40
    %v1006 = vld [vmem:[%s1005] sm:$0xff]
    %v1007 = vmul.f32 %v983, %v679
    %v1008 = vmul.f32 %v993, %v684
    %v1009 = vadd.f32 %v1007, %v1008
    %v1010 = vadd.f32 %v1002, %v1009
    %v1011 = vxor.u32 %v1010, 2147483648
    %v1012 = vmul.f32 %v1011, 1.442695
    %v1013 = vpow.pop %v1012
    %v1014 = vadd.f32 %v1013, 1.0
    %v1015 = vrcp.pop %v1014
    %v1016 = vmul.f32 1.0, %v1015
    %v1017 = vmul.f32 %v983, %v689
    %v1018 = vmul.f32 %v993, %v694
    %v1019 = vadd.f32 %v1017, %v1018
    %v1020 = vadd.f32 %v1004, %v1019
    %v1021 = vxor.u32 %v1020, 2147483648
    %v1022 = vmul.f32 %v1021, 1.442695
    %v1023 = vpow.pop %v1022
    %v1024 = vadd.f32 %v1023, 1.0
    %v1025 = vrcp.pop %v1024
    %v1026 = vmul.f32 1.0, %v1025
    %v1027 = vmul.f32 %v983, %v699
    %v1028 = vmul.f32 %v993, %v704
    %v1029 = vadd.f32 %v1027, %v1028
    %v1030 = vadd.f32 %v1029, %v666
    %v1031 = vmul.f32 %v1016, %v1030
    %v1032 = vadd.f32 %v1006, %v1031
    %v1033 = vtanh.pop %v1032
    %v1034 = vsub.f32 1.0, %v1026
    %v1035 = vmul.f32 %v1034, %v1033
    %v1036 = vmul.f32 %v1026, %v977
    %v1037 = vadd.f32 %v1035, %v1036
    %s1038 = scalar_lea.vmem %s7, 10
    %v1039 = vld [vmem:[%s1038] sm:$0x3]
    %1041 = vset.pattern.permute.xlu0 0
    %1042 = vperm.xlu0 %1041, %v1037
    %v1043 = vpop.permute.xlu0 %1042
    %v1045 = vlaneseq
    %v1046 = vshrl.u32 %v1045, 7
    %v1047 = vsub.s32 0, %v1046
    %v1048 = vrot.slane %v1039, %v1047
    %v1049 = vmul.f32 %v1043, %v1048
    %v1050 = vadd.f32 %v1000, %v1049
    %1051 = vset.pattern.permute.xlu0 1
    %1052 = vperm.xlu0 %1051, %v1037
    %v1053 = vpop.permute.xlu0 %1052
    %v1055 = vlaneseq
    %v1056 = vshrl.u32 %v1055, 7
    %v1057 = vsub.s32 1, %v1056
    %v1058 = vrot.slane %v1039, %v1057
    %v1059 = vmul.f32 %v1053, %v1058
    %v1060 = vadd.f32 %v1050, %v1059
    %s1061 = scalar_lea.vmem [#allocation2], 48
    %v1062 = vld [vmem:[%s1061] sm:$0xff]
    %s1063 = scalar_lea.vmem [#allocation3], 48
    %v1064 = vld [vmem:[%s1063] sm:$0xff]
    %s1065 = scalar_lea.vmem [#allocation4], 48
    %v1066 = vld [vmem:[%s1065] sm:$0xff]
    %v1067 = vmul.f32 %v1043, %v679
    %v1068 = vmul.f32 %v1053, %v684
    %v1069 = vadd.f32 %v1067, %v1068
    %v1070 = vadd.f32 %v1062, %v1069
    %v1071 = vxor.u32 %v1070, 2147483648
    %v1072 = vmul.f32 %v1071, 1.442695
    %v1073 = vpow.pop %v1072
    %v1074 = vadd.f32 %v1073, 1.0
    %v1075 = vrcp.pop %v1074
    %v1076 = vmul.f32 1.0, %v1075
    %v1077 = vmul.f32 %v1043, %v689
    %v1078 = vmul.f32 %v1053, %v694
    %v1079 = vadd.f32 %v1077, %v1078
    %v1080 = vadd.f32 %v1064, %v1079
    %v1081 = vxor.u32 %v1080, 2147483648
    %v1082 = vmul.f32 %v1081, 1.442695
    %v1083 = vpow.pop %v1082
    %v1084 = vadd.f32 %v1083, 1.0
    %v1085 = vrcp.pop %v1084
    %v1086 = vmul.f32 1.0, %v1085
    %v1087 = vmul.f32 %v1043, %v699
    %v1088 = vmul.f32 %v1053, %v704
    %v1089 = vadd.f32 %v1087, %v1088
    %v1090 = vadd.f32 %v1089, %v666
    %v1091 = vmul.f32 %v1076, %v1090
    %v1092 = vadd.f32 %v1066, %v1091
    %v1093 = vtanh.pop %v1092
    %v1094 = vsub.f32 1.0, %v1086
    %v1095 = vmul.f32 %v1094, %v1093
    %v1096 = vmul.f32 %v1086, %v1037
    %v1097 = vadd.f32 %v1095, %v1096
    %s1098 = scalar_lea.vmem %s7, 12
    %v1099 = vld [vmem:[%s1098] sm:$0x3]
    %1101 = vset.pattern.permute.xlu0 0
    %1102 = vperm.xlu0 %1101, %v1097
    %v1103 = vpop.permute.xlu0 %1102
    %v1105 = vlaneseq
    %v1106 = vshrl.u32 %v1105, 7
    %v1107 = vsub.s32 0, %v1106
    %v1108 = vrot.slane %v1099, %v1107
    %v1109 = vmul.f32 %v1103, %v1108
    %v1110 = vadd.f32 %v1060, %v1109
    %1111 = vset.pattern.permute.xlu0 1
    %1112 = vperm.xlu0 %1111, %v1097
    %v1113 = vpop.permute.xlu0 %1112
    %v1115 = vlaneseq
    %v1116 = vshrl.u32 %v1115, 7
    %v1117 = vsub.s32 1, %v1116
    %v1118 = vrot.slane %v1099, %v1117
    %v1119 = vmul.f32 %v1113, %v1118
    %v1120 = vadd.f32 %v1110, %v1119
    %s1121 = scalar_lea.vmem [#allocation2], 56
    %v1122 = vld [vmem:[%s1121] sm:$0xff]
    %s1123 = scalar_lea.vmem [#allocation3], 56
    %v1124 = vld [vmem:[%s1123] sm:$0xff]
    %s1125 = scalar_lea.vmem [#allocation4], 56
    %v1126 = vld [vmem:[%s1125] sm:$0xff]
    %v1127 = vmul.f32 %v1103, %v679
    %v1128 = vmul.f32 %v1113, %v684
    %v1129 = vadd.f32 %v1127, %v1128
    %v1130 = vadd.f32 %v1122, %v1129
    %v1131 = vxor.u32 %v1130, 2147483648
    %v1132 = vmul.f32 %v1131, 1.442695
    %v1133 = vpow.pop %v1132
    %v1134 = vadd.f32 %v1133, 1.0
    %v1135 = vrcp.pop %v1134
    %v1136 = vmul.f32 1.0, %v1135
    %v1137 = vmul.f32 %v1103, %v689
    %v1138 = vmul.f32 %v1113, %v694
    %v1139 = vadd.f32 %v1137, %v1138
    %v1140 = vadd.f32 %v1124, %v1139
    %v1141 = vxor.u32 %v1140, 2147483648
    %v1142 = vmul.f32 %v1141, 1.442695
    %v1143 = vpow.pop %v1142
    %v1144 = vadd.f32 %v1143, 1.0
    %v1145 = vrcp.pop %v1144
    %v1146 = vmul.f32 1.0, %v1145
    %v1147 = vmul.f32 %v1103, %v699
    %v1148 = vmul.f32 %v1113, %v704
    %v1149 = vadd.f32 %v1147, %v1148
    %v1150 = vadd.f32 %v1149, %v666
    %v1151 = vmul.f32 %v1136, %v1150
    %v1152 = vadd.f32 %v1126, %v1151
    %v1153 = vtanh.pop %v1152
    %v1154 = vsub.f32 1.0, %v1146
    %v1155 = vmul.f32 %v1154, %v1153
    %v1156 = vmul.f32 %v1146, %v1097
    %v1157 = vadd.f32 %v1155, %v1156
    %s1158 = scalar_lea.vmem %s7, 14
    %v1159 = vld [vmem:[%s1158] sm:$0x3]
    %1161 = vset.pattern.permute.xlu0 0
    %1162 = vperm.xlu0 %1161, %v1157
    %v1163 = vpop.permute.xlu0 %1162
    %v1165 = vlaneseq
    %v1166 = vshrl.u32 %v1165, 7
    %v1167 = vsub.s32 0, %v1166
    %v1168 = vrot.slane %v1159, %v1167
    %v1169 = vmul.f32 %v1163, %v1168
    %v1170 = vadd.f32 %v1120, %v1169
    %1171 = vset.pattern.permute.xlu0 1
    %1172 = vperm.xlu0 %1171, %v1157
    %v1173 = vpop.permute.xlu0 %1172
    %v1175 = vlaneseq
    %v1176 = vshrl.u32 %v1175, 7
    %v1177 = vsub.s32 1, %v1176
    %v1178 = vrot.slane %v1159, %v1177
    %v1179 = vmul.f32 %v1173, %v1178
    %v1180 = vadd.f32 %v1170, %v1179
    %s1181 = scalar_lea.vmem [#allocation2], 64
    %v1182 = vld [vmem:[%s1181] sm:$0xff]
    %s1183 = scalar_lea.vmem [#allocation3], 64
    %v1184 = vld [vmem:[%s1183] sm:$0xff]
    %s1185 = scalar_lea.vmem [#allocation4], 64
    %v1186 = vld [vmem:[%s1185] sm:$0xff]
    %v1187 = vmul.f32 %v1163, %v679
    %v1188 = vmul.f32 %v1173, %v684
    %v1189 = vadd.f32 %v1187, %v1188
    %v1190 = vadd.f32 %v1182, %v1189
    %v1191 = vxor.u32 %v1190, 2147483648
    %v1192 = vmul.f32 %v1191, 1.442695
    %v1193 = vpow.pop %v1192
    %v1194 = vadd.f32 %v1193, 1.0
    %v1195 = vrcp.pop %v1194
    %v1196 = vmul.f32 1.0, %v1195
    %v1197 = vmul.f32 %v1163, %v689
    %v1198 = vmul.f32 %v1173, %v694
    %v1199 = vadd.f32 %v1197, %v1198
    %v1200 = vadd.f32 %v1184, %v1199
    %v1201 = vxor.u32 %v1200, 2147483648
    %v1202 = vmul.f32 %v1201, 1.442695
    %v1203 = vpow.pop %v1202
    %v1204 = vadd.f32 %v1203, 1.0
    %v1205 = vrcp.pop %v1204
    %v1206 = vmul.f32 1.0, %v1205
    %v1207 = vmul.f32 %v1163, %v699
    %v1208 = vmul.f32 %v1173, %v704
    %v1209 = vadd.f32 %v1207, %v1208
    %v1210 = vadd.f32 %v1209, %v666
    %v1211 = vmul.f32 %v1196, %v1210
    %v1212 = vadd.f32 %v1186, %v1211
    %v1213 = vtanh.pop %v1212
    %v1214 = vsub.f32 1.0, %v1206
    %v1215 = vmul.f32 %v1214, %v1213
    %v1216 = vmul.f32 %v1206, %v1157
    %v1217 = vadd.f32 %v1215, %v1216
    %s1218 = scalar_lea.vmem %s7, 16
    %v1219 = vld [vmem:[%s1218] sm:$0x3]
    %1221 = vset.pattern.permute.xlu0 0
    %1222 = vperm.xlu0 %1221, %v1217
    %v1223 = vpop.permute.xlu0 %1222
    %v1225 = vlaneseq
    %v1226 = vshrl.u32 %v1225, 7
    %v1227 = vsub.s32 0, %v1226
    %v1228 = vrot.slane %v1219, %v1227
    %v1229 = vmul.f32 %v1223, %v1228
    %v1230 = vadd.f32 %v1180, %v1229
    %1231 = vset.pattern.permute.xlu0 1
    %1232 = vperm.xlu0 %1231, %v1217
    %v1233 = vpop.permute.xlu0 %1232
    %v1235 = vlaneseq
    %v1236 = vshrl.u32 %v1235, 7
    %v1237 = vsub.s32 1, %v1236
    %v1238 = vrot.slane %v1219, %v1237
    %v1239 = vmul.f32 %v1233, %v1238
    %v1240 = vadd.f32 %v1230, %v1239
    %s1241 = scalar_lea.vmem [#allocation2], 72
    %v1242 = vld [vmem:[%s1241] sm:$0xff]
    %s1243 = scalar_lea.vmem [#allocation3], 72
    %v1244 = vld [vmem:[%s1243] sm:$0xff]
    %s1245 = scalar_lea.vmem [#allocation4], 72
    %v1246 = vld [vmem:[%s1245] sm:$0xff]
    %v1247 = vmul.f32 %v1223, %v679
    %v1248 = vmul.f32 %v1233, %v684
    %v1249 = vadd.f32 %v1247, %v1248
    %v1250 = vadd.f32 %v1242, %v1249
    %v1251 = vxor.u32 %v1250, 2147483648
    %v1252 = vmul.f32 %v1251, 1.442695
    %v1253 = vpow.pop %v1252
    %v1254 = vadd.f32 %v1253, 1.0
    %v1255 = vrcp.pop %v1254
    %v1256 = vmul.f32 1.0, %v1255
    %v1257 = vmul.f32 %v1223, %v689
    %v1258 = vmul.f32 %v1233, %v694
    %v1259 = vadd.f32 %v1257, %v1258
    %v1260 = vadd.f32 %v1244, %v1259
    %v1261 = vxor.u32 %v1260, 2147483648
    %v1262 = vmul.f32 %v1261, 1.442695
    %v1263 = vpow.pop %v1262
    %v1264 = vadd.f32 %v1263, 1.0
    %v1265 = vrcp.pop %v1264
    %v1266 = vmul.f32 1.0, %v1265
    %v1267 = vmul.f32 %v1223, %v699
    %v1268 = vmul.f32 %v1233, %v704
    %v1269 = vadd.f32 %v1267, %v1268
    %v1270 = vadd.f32 %v1269, %v666
    %v1271 = vmul.f32 %v1256, %v1270
    %v1272 = vadd.f32 %v1246, %v1271
    %v1273 = vtanh.pop %v1272
    %v1274 = vsub.f32 1.0, %v1266
    %v1275 = vmul.f32 %v1274, %v1273
    %v1276 = vmul.f32 %v1266, %v1217
    %v1277 = vadd.f32 %v1275, %v1276
    %s1278 = scalar_lea.vmem %s7, 18
    %v1279 = vld [vmem:[%s1278] sm:$0x3]
    %1281 = vset.pattern.permute.xlu0 0
    %1282 = vperm.xlu0 %1281, %v1277
    %v1283 = vpop.permute.xlu0 %1282
    %v1285 = vlaneseq
    %v1286 = vshrl.u32 %v1285, 7
    %v1287 = vsub.s32 0, %v1286
    %v1288 = vrot.slane %v1279, %v1287
    %v1289 = vmul.f32 %v1283, %v1288
    %v1290 = vadd.f32 %v1240, %v1289
    %1291 = vset.pattern.permute.xlu0 1
    %1292 = vperm.xlu0 %1291, %v1277
    %v1293 = vpop.permute.xlu0 %1292
    %v1295 = vlaneseq
    %v1296 = vshrl.u32 %v1295, 7
    %v1297 = vsub.s32 1, %v1296
    %v1298 = vrot.slane %v1279, %v1297
    %v1299 = vmul.f32 %v1293, %v1298
    %v1300 = vadd.f32 %v1290, %v1299
    %s1301 = scalar_lea.vmem [#allocation2], 80
    %v1302 = vld [vmem:[%s1301] sm:$0xff]
    %s1303 = scalar_lea.vmem [#allocation3], 80
    %v1304 = vld [vmem:[%s1303] sm:$0xff]
    %s1305 = scalar_lea.vmem [#allocation4], 80
    %v1306 = vld [vmem:[%s1305] sm:$0xff]
    %v1307 = vmul.f32 %v1283, %v679
    %v1308 = vmul.f32 %v1293, %v684
    %v1309 = vadd.f32 %v1307, %v1308
    %v1310 = vadd.f32 %v1302, %v1309
    %v1311 = vxor.u32 %v1310, 2147483648
    %v1312 = vmul.f32 %v1311, 1.442695
    %v1313 = vpow.pop %v1312
    %v1314 = vadd.f32 %v1313, 1.0
    %v1315 = vrcp.pop %v1314
    %v1316 = vmul.f32 1.0, %v1315
    %v1317 = vmul.f32 %v1283, %v689
    %v1318 = vmul.f32 %v1293, %v694
    %v1319 = vadd.f32 %v1317, %v1318
    %v1320 = vadd.f32 %v1304, %v1319
    %v1321 = vxor.u32 %v1320, 2147483648
    %v1322 = vmul.f32 %v1321, 1.442695
    %v1323 = vpow.pop %v1322
    %v1324 = vadd.f32 %v1323, 1.0
    %v1325 = vrcp.pop %v1324
    %v1326 = vmul.f32 1.0, %v1325
    %v1327 = vmul.f32 %v1283, %v699
    %v1328 = vmul.f32 %v1293, %v704
    %v1329 = vadd.f32 %v1327, %v1328
    %v1330 = vadd.f32 %v1329, %v666
    %v1331 = vmul.f32 %v1316, %v1330
    %v1332 = vadd.f32 %v1306, %v1331
    %v1333 = vtanh.pop %v1332
    %v1334 = vsub.f32 1.0, %v1326
    %v1335 = vmul.f32 %v1334, %v1333
    %v1336 = vmul.f32 %v1326, %v1277
    %v1337 = vadd.f32 %v1335, %v1336
    %s1338 = scalar_lea.vmem %s7, 20
    %v1339 = vld [vmem:[%s1338] sm:$0x3]
    %1341 = vset.pattern.permute.xlu0 0
    %1342 = vperm.xlu0 %1341, %v1337
    %v1343 = vpop.permute.xlu0 %1342
    %v1345 = vlaneseq
    %v1346 = vshrl.u32 %v1345, 7
    %v1347 = vsub.s32 0, %v1346
    %v1348 = vrot.slane %v1339, %v1347
    %v1349 = vmul.f32 %v1343, %v1348
    %v1350 = vadd.f32 %v1300, %v1349
    %1351 = vset.pattern.permute.xlu0 1
    %1352 = vperm.xlu0 %1351, %v1337
    %v1353 = vpop.permute.xlu0 %1352
    %v1355 = vlaneseq
    %v1356 = vshrl.u32 %v1355, 7
    %v1357 = vsub.s32 1, %v1356
    %v1358 = vrot.slane %v1339, %v1357
    %v1359 = vmul.f32 %v1353, %v1358
    %v1360 = vadd.f32 %v1350, %v1359
    %s1361 = scalar_lea.vmem [#allocation2], 88
    %v1362 = vld [vmem:[%s1361] sm:$0xff]
    %s1363 = scalar_lea.vmem [#allocation3], 88
    %v1364 = vld [vmem:[%s1363] sm:$0xff]
    %s1365 = scalar_lea.vmem [#allocation4], 88
    %v1366 = vld [vmem:[%s1365] sm:$0xff]
    %v1367 = vmul.f32 %v1343, %v679
    %v1368 = vmul.f32 %v1353, %v684
    %v1369 = vadd.f32 %v1367, %v1368
    %v1370 = vadd.f32 %v1362, %v1369
    %v1371 = vxor.u32 %v1370, 2147483648
    %v1372 = vmul.f32 %v1371, 1.442695
    %v1373 = vpow.pop %v1372
    %v1374 = vadd.f32 %v1373, 1.0
    %v1375 = vrcp.pop %v1374
    %v1376 = vmul.f32 1.0, %v1375
    %v1377 = vmul.f32 %v1343, %v689
    %v1378 = vmul.f32 %v1353, %v694
    %v1379 = vadd.f32 %v1377, %v1378
    %v1380 = vadd.f32 %v1364, %v1379
    %v1381 = vxor.u32 %v1380, 2147483648
    %v1382 = vmul.f32 %v1381, 1.442695
    %v1383 = vpow.pop %v1382
    %v1384 = vadd.f32 %v1383, 1.0
    %v1385 = vrcp.pop %v1384
    %v1386 = vmul.f32 1.0, %v1385
    %v1387 = vmul.f32 %v1343, %v699
    %v1388 = vmul.f32 %v1353, %v704
    %v1389 = vadd.f32 %v1387, %v1388
    %v1390 = vadd.f32 %v1389, %v666
    %v1391 = vmul.f32 %v1376, %v1390
    %v1392 = vadd.f32 %v1366, %v1391
    %v1393 = vtanh.pop %v1392
    %v1394 = vsub.f32 1.0, %v1386
    %v1395 = vmul.f32 %v1394, %v1393
    %v1396 = vmul.f32 %v1386, %v1337
    %v1397 = vadd.f32 %v1395, %v1396
    %s1398 = scalar_lea.vmem %s7, 22
    %v1399 = vld [vmem:[%s1398] sm:$0x3]
    %1401 = vset.pattern.permute.xlu0 0
    %1402 = vperm.xlu0 %1401, %v1397
    %v1403 = vpop.permute.xlu0 %1402
    %v1405 = vlaneseq
    %v1406 = vshrl.u32 %v1405, 7
    %v1407 = vsub.s32 0, %v1406
    %v1408 = vrot.slane %v1399, %v1407
    %v1409 = vmul.f32 %v1403, %v1408
    %v1410 = vadd.f32 %v1360, %v1409
    %1411 = vset.pattern.permute.xlu0 1
    %1412 = vperm.xlu0 %1411, %v1397
    %v1413 = vpop.permute.xlu0 %1412
    %v1415 = vlaneseq
    %v1416 = vshrl.u32 %v1415, 7
    %v1417 = vsub.s32 1, %v1416
    %v1418 = vrot.slane %v1399, %v1417
    %v1419 = vmul.f32 %v1413, %v1418
    %v1420 = vadd.f32 %v1410, %v1419
    %s1421 = scalar_lea.vmem [#allocation2], 96
    %v1422 = vld [vmem:[%s1421] sm:$0xff]
    %s1423 = scalar_lea.vmem [#allocation3], 96
    %v1424 = vld [vmem:[%s1423] sm:$0xff]
    %s1425 = scalar_lea.vmem [#allocation4], 96
    %v1426 = vld [vmem:[%s1425] sm:$0xff]
    %v1427 = vmul.f32 %v1403, %v679
    %v1428 = vmul.f32 %v1413, %v684
    %v1429 = vadd.f32 %v1427, %v1428
    %v1430 = vadd.f32 %v1422, %v1429
    %v1431 = vxor.u32 %v1430, 2147483648
    %v1432 = vmul.f32 %v1431, 1.442695
    %v1433 = vpow.pop %v1432
    %v1434 = vadd.f32 %v1433, 1.0
    %v1435 = vrcp.pop %v1434
    %v1436 = vmul.f32 1.0, %v1435
    %v1437 = vmul.f32 %v1403, %v689
    %v1438 = vmul.f32 %v1413, %v694
    %v1439 = vadd.f32 %v1437, %v1438
    %v1440 = vadd.f32 %v1424, %v1439
    %v1441 = vxor.u32 %v1440, 2147483648
    %v1442 = vmul.f32 %v1441, 1.442695
    %v1443 = vpow.pop %v1442
    %v1444 = vadd.f32 %v1443, 1.0
    %v1445 = vrcp.pop %v1444
    %v1446 = vmul.f32 1.0, %v1445
    %v1447 = vmul.f32 %v1403, %v699
    %v1448 = vmul.f32 %v1413, %v704
    %v1449 = vadd.f32 %v1447, %v1448
    %v1450 = vadd.f32 %v1449, %v666
    %v1451 = vmul.f32 %v1436, %v1450
    %v1452 = vadd.f32 %v1426, %v1451
    %v1453 = vtanh.pop %v1452
    %v1454 = vsub.f32 1.0, %v1446
    %v1455 = vmul.f32 %v1454, %v1453
    %v1456 = vmul.f32 %v1446, %v1397
    %v1457 = vadd.f32 %v1455, %v1456
    %s1458 = scalar_lea.vmem %s7, 24
    %v1459 = vld [vmem:[%s1458] sm:$0x3]
    %1461 = vset.pattern.permute.xlu0 0
    %1462 = vperm.xlu0 %1461, %v1457
    %v1463 = vpop.permute.xlu0 %1462
    %v1465 = vlaneseq
    %v1466 = vshrl.u32 %v1465, 7
    %v1467 = vsub.s32 0, %v1466
    %v1468 = vrot.slane %v1459, %v1467
    %v1469 = vmul.f32 %v1463, %v1468
    %v1470 = vadd.f32 %v1420, %v1469
    %1471 = vset.pattern.permute.xlu0 1
    %1472 = vperm.xlu0 %1471, %v1457
    %v1473 = vpop.permute.xlu0 %1472
    %v1475 = vlaneseq
    %v1476 = vshrl.u32 %v1475, 7
    %v1477 = vsub.s32 1, %v1476
    %v1478 = vrot.slane %v1459, %v1477
    %v1479 = vmul.f32 %v1473, %v1478
    %v1480 = vadd.f32 %v1470, %v1479
    %s1481 = scalar_lea.vmem [#allocation2], 104
    %v1482 = vld [vmem:[%s1481] sm:$0xff]
    %s1483 = scalar_lea.vmem [#allocation3], 104
    %v1484 = vld [vmem:[%s1483] sm:$0xff]
    %s1485 = scalar_lea.vmem [#allocation4], 104
    %v1486 = vld [vmem:[%s1485] sm:$0xff]
    %v1487 = vmul.f32 %v1463, %v679
    %v1488 = vmul.f32 %v1473, %v684
    %v1489 = vadd.f32 %v1487, %v1488
    %v1490 = vadd.f32 %v1482, %v1489
    %v1491 = vxor.u32 %v1490, 2147483648
    %v1492 = vmul.f32 %v1491, 1.442695
    %v1493 = vpow.pop %v1492
    %v1494 = vadd.f32 %v1493, 1.0
    %v1495 = vrcp.pop %v1494
    %v1496 = vmul.f32 1.0, %v1495
    %v1497 = vmul.f32 %v1463, %v689
    %v1498 = vmul.f32 %v1473, %v694
    %v1499 = vadd.f32 %v1497, %v1498
    %v1500 = vadd.f32 %v1484, %v1499
    %v1501 = vxor.u32 %v1500, 2147483648
    %v1502 = vmul.f32 %v1501, 1.442695
    %v1503 = vpow.pop %v1502
    %v1504 = vadd.f32 %v1503, 1.0
    %v1505 = vrcp.pop %v1504
    %v1506 = vmul.f32 1.0, %v1505
    %v1507 = vmul.f32 %v1463, %v699
    %v1508 = vmul.f32 %v1473, %v704
    %v1509 = vadd.f32 %v1507, %v1508
    %v1510 = vadd.f32 %v1509, %v666
    %v1511 = vmul.f32 %v1496, %v1510
    %v1512 = vadd.f32 %v1486, %v1511
    %v1513 = vtanh.pop %v1512
    %v1514 = vsub.f32 1.0, %v1506
    %v1515 = vmul.f32 %v1514, %v1513
    %v1516 = vmul.f32 %v1506, %v1457
    %v1517 = vadd.f32 %v1515, %v1516
    %s1518 = scalar_lea.vmem %s7, 26
    %v1519 = vld [vmem:[%s1518] sm:$0x3]
    %1521 = vset.pattern.permute.xlu0 0
    %1522 = vperm.xlu0 %1521, %v1517
    %v1523 = vpop.permute.xlu0 %1522
    %v1525 = vlaneseq
    %v1526 = vshrl.u32 %v1525, 7
    %v1527 = vsub.s32 0, %v1526
    %v1528 = vrot.slane %v1519, %v1527
    %v1529 = vmul.f32 %v1523, %v1528
    %v1530 = vadd.f32 %v1480, %v1529
    %1531 = vset.pattern.permute.xlu0 1
    %1532 = vperm.xlu0 %1531, %v1517
    %v1533 = vpop.permute.xlu0 %1532
    %v1535 = vlaneseq
    %v1536 = vshrl.u32 %v1535, 7
    %v1537 = vsub.s32 1, %v1536
    %v1538 = vrot.slane %v1519, %v1537
    %v1539 = vmul.f32 %v1533, %v1538
    %v1540 = vadd.f32 %v1530, %v1539
    %s1541 = scalar_lea.vmem [#allocation2], 112
    %v1542 = vld [vmem:[%s1541] sm:$0xff]
    %s1543 = scalar_lea.vmem [#allocation3], 112
    %v1544 = vld [vmem:[%s1543] sm:$0xff]
    %s1545 = scalar_lea.vmem [#allocation4], 112
    %v1546 = vld [vmem:[%s1545] sm:$0xff]
    %v1547 = vmul.f32 %v1523, %v679
    %v1548 = vmul.f32 %v1533, %v684
    %v1549 = vadd.f32 %v1547, %v1548
    %v1550 = vadd.f32 %v1542, %v1549
    %v1551 = vxor.u32 %v1550, 2147483648
    %v1552 = vmul.f32 %v1551, 1.442695
    %v1553 = vpow.pop %v1552
    %v1554 = vadd.f32 %v1553, 1.0
    %v1555 = vrcp.pop %v1554
    %v1556 = vmul.f32 1.0, %v1555
    %v1557 = vmul.f32 %v1523, %v689
    %v1558 = vmul.f32 %v1533, %v694
    %v1559 = vadd.f32 %v1557, %v1558
    %v1560 = vadd.f32 %v1544, %v1559
    %v1561 = vxor.u32 %v1560, 2147483648
    %v1562 = vmul.f32 %v1561, 1.442695
    %v1563 = vpow.pop %v1562
    %v1564 = vadd.f32 %v1563, 1.0
    %v1565 = vrcp.pop %v1564
    %v1566 = vmul.f32 1.0, %v1565
    %v1567 = vmul.f32 %v1523, %v699
    %v1568 = vmul.f32 %v1533, %v704
    %v1569 = vadd.f32 %v1567, %v1568
    %v1570 = vadd.f32 %v1569, %v666
    %v1571 = vmul.f32 %v1556, %v1570
    %v1572 = vadd.f32 %v1546, %v1571
    %v1573 = vtanh.pop %v1572
    %v1574 = vsub.f32 1.0, %v1566
    %v1575 = vmul.f32 %v1574, %v1573
    %v1576 = vmul.f32 %v1566, %v1517
    %v1577 = vadd.f32 %v1575, %v1576
    %s1578 = scalar_lea.vmem %s7, 28
    %v1579 = vld [vmem:[%s1578] sm:$0x3]
    %1581 = vset.pattern.permute.xlu0 0
    %1582 = vperm.xlu0 %1581, %v1577
    %v1583 = vpop.permute.xlu0 %1582
    %v1585 = vlaneseq
    %v1586 = vshrl.u32 %v1585, 7
    %v1587 = vsub.s32 0, %v1586
    %v1588 = vrot.slane %v1579, %v1587
    %v1589 = vmul.f32 %v1583, %v1588
    %v1590 = vadd.f32 %v1540, %v1589
    %1591 = vset.pattern.permute.xlu0 1
    %1592 = vperm.xlu0 %1591, %v1577
    %v1593 = vpop.permute.xlu0 %1592
    %v1595 = vlaneseq
    %v1596 = vshrl.u32 %v1595, 7
    %v1597 = vsub.s32 1, %v1596
    %v1598 = vrot.slane %v1579, %v1597
    %v1599 = vmul.f32 %v1593, %v1598
    %v1600 = vadd.f32 %v1590, %v1599
    %s1601 = scalar_lea.vmem [#allocation2], 120
    %v1602 = vld [vmem:[%s1601] sm:$0xff]
    %s1603 = scalar_lea.vmem [#allocation3], 120
    %v1604 = vld [vmem:[%s1603] sm:$0xff]
    %s1605 = scalar_lea.vmem [#allocation4], 120
    %v1606 = vld [vmem:[%s1605] sm:$0xff]
    %v1607 = vmul.f32 %v1583, %v679
    %v1608 = vmul.f32 %v1593, %v684
    %v1609 = vadd.f32 %v1607, %v1608
    %v1610 = vadd.f32 %v1602, %v1609
    %v1611 = vxor.u32 %v1610, 2147483648
    %v1612 = vmul.f32 %v1611, 1.442695
    %v1613 = vpow.pop %v1612
    %v1614 = vadd.f32 %v1613, 1.0
    %v1615 = vrcp.pop %v1614
    %v1616 = vmul.f32 1.0, %v1615
    %v1617 = vmul.f32 %v1583, %v689
    %v1618 = vmul.f32 %v1593, %v694
    %v1619 = vadd.f32 %v1617, %v1618
    %v1620 = vadd.f32 %v1604, %v1619
    %v1621 = vxor.u32 %v1620, 2147483648
    %v1622 = vmul.f32 %v1621, 1.442695
    %v1623 = vpow.pop %v1622
    %v1624 = vadd.f32 %v1623, 1.0
    %v1625 = vrcp.pop %v1624
    %v1626 = vmul.f32 1.0, %v1625
    %v1627 = vmul.f32 %v1583, %v699
    %v1628 = vmul.f32 %v1593, %v704
    %v1629 = vadd.f32 %v1627, %v1628
    %v1630 = vadd.f32 %v1629, %v666
    %v1631 = vmul.f32 %v1616, %v1630
    %v1632 = vadd.f32 %v1606, %v1631
    %v1633 = vtanh.pop %v1632
    %v1634 = vsub.f32 1.0, %v1626
    %v1635 = vmul.f32 %v1634, %v1633
    %v1636 = vmul.f32 %v1626, %v1577
    %v1637 = vadd.f32 %v1635, %v1636
    %s1638 = scalar_lea.vmem %s7, 30
    %v1639 = vld [vmem:[%s1638] sm:$0x3]
    %1641 = vset.pattern.permute.xlu0 0
    %1642 = vperm.xlu0 %1641, %v1637
    %v1643 = vpop.permute.xlu0 %1642
    %v1645 = vlaneseq
    %v1646 = vshrl.u32 %v1645, 7
    %v1647 = vsub.s32 0, %v1646
    %v1648 = vrot.slane %v1639, %v1647
    %v1649 = vmul.f32 %v1643, %v1648
    %v1650 = vadd.f32 %v1600, %v1649
    %1651 = vset.pattern.permute.xlu0 1
    %1652 = vperm.xlu0 %1651, %v1637
    %v1653 = vpop.permute.xlu0 %1652
    %v1655 = vlaneseq
    %v1656 = vshrl.u32 %v1655, 7
    %v1657 = vsub.s32 1, %v1656
    %v1658 = vrot.slane %v1639, %v1657
    %v1659 = vmul.f32 %v1653, %v1658
    %v1660 = vadd.f32 %v1650, %v1659
    %s1661 = scalar_lea.vmem [#allocation2], 128
    %v1662 = vld [vmem:[%s1661] sm:$0xff]
    %s1663 = scalar_lea.vmem [#allocation3], 128
    %v1664 = vld [vmem:[%s1663] sm:$0xff]
    %s1665 = scalar_lea.vmem [#allocation4], 128
    %v1666 = vld [vmem:[%s1665] sm:$0xff]
    %v1667 = vmul.f32 %v1643, %v679
    %v1668 = vmul.f32 %v1653, %v684
    %v1669 = vadd.f32 %v1667, %v1668
    %v1670 = vadd.f32 %v1662, %v1669
    %v1671 = vxor.u32 %v1670, 2147483648
    %v1672 = vmul.f32 %v1671, 1.442695
    %v1673 = vpow.pop %v1672
    %v1674 = vadd.f32 %v1673, 1.0
    %v1675 = vrcp.pop %v1674
    %v1676 = vmul.f32 1.0, %v1675
    %v1677 = vmul.f32 %v1643, %v689
    %v1678 = vmul.f32 %v1653, %v694
    %v1679 = vadd.f32 %v1677, %v1678
    %v1680 = vadd.f32 %v1664, %v1679
    %v1681 = vxor.u32 %v1680, 2147483648
    %v1682 = vmul.f32 %v1681, 1.442695
    %v1683 = vpow.pop %v1682
    %v1684 = vadd.f32 %v1683, 1.0
    %v1685 = vrcp.pop %v1684
    %v1686 = vmul.f32 1.0, %v1685
    %v1687 = vmul.f32 %v1643, %v699
    %v1688 = vmul.f32 %v1653, %v704
    %v1689 = vadd.f32 %v1687, %v1688
    %v1690 = vadd.f32 %v1689, %v666
    %v1691 = vmul.f32 %v1676, %v1690
    %v1692 = vadd.f32 %v1666, %v1691
    %v1693 = vtanh.pop %v1692
    %v1694 = vsub.f32 1.0, %v1686
    %v1695 = vmul.f32 %v1694, %v1693
    %v1696 = vmul.f32 %v1686, %v1637
    %v1697 = vadd.f32 %v1695, %v1696
    %s1698 = scalar_lea.vmem %s7, 32
    %v1699 = vld [vmem:[%s1698] sm:$0x3]
    %1701 = vset.pattern.permute.xlu0 0
    %1702 = vperm.xlu0 %1701, %v1697
    %v1703 = vpop.permute.xlu0 %1702
    %v1705 = vlaneseq
    %v1706 = vshrl.u32 %v1705, 7
    %v1707 = vsub.s32 0, %v1706
    %v1708 = vrot.slane %v1699, %v1707
    %v1709 = vmul.f32 %v1703, %v1708
    %v1710 = vadd.f32 %v1660, %v1709
    %1711 = vset.pattern.permute.xlu0 1
    %1712 = vperm.xlu0 %1711, %v1697
    %v1713 = vpop.permute.xlu0 %1712
    %v1715 = vlaneseq
    %v1716 = vshrl.u32 %v1715, 7
    %v1717 = vsub.s32 1, %v1716
    %v1718 = vrot.slane %v1699, %v1717
    %v1719 = vmul.f32 %v1713, %v1718
    %v1720 = vadd.f32 %v1710, %v1719
    %s1721 = scalar_lea.vmem [#allocation2], 136
    %v1722 = vld [vmem:[%s1721] sm:$0xff]
    %s1723 = scalar_lea.vmem [#allocation3], 136
    %v1724 = vld [vmem:[%s1723] sm:$0xff]
    %s1725 = scalar_lea.vmem [#allocation4], 136
    %v1726 = vld [vmem:[%s1725] sm:$0xff]
    %v1727 = vmul.f32 %v1703, %v679
    %v1728 = vmul.f32 %v1713, %v684
    %v1729 = vadd.f32 %v1727, %v1728
    %v1730 = vadd.f32 %v1722, %v1729
    %v1731 = vxor.u32 %v1730, 2147483648
    %v1732 = vmul.f32 %v1731, 1.442695
    %v1733 = vpow.pop %v1732
    %v1734 = vadd.f32 %v1733, 1.0
    %v1735 = vrcp.pop %v1734
    %v1736 = vmul.f32 1.0, %v1735
    %v1737 = vmul.f32 %v1703, %v689
    %v1738 = vmul.f32 %v1713, %v694
    %v1739 = vadd.f32 %v1737, %v1738
    %v1740 = vadd.f32 %v1724, %v1739
    %v1741 = vxor.u32 %v1740, 2147483648
    %v1742 = vmul.f32 %v1741, 1.442695
    %v1743 = vpow.pop %v1742
    %v1744 = vadd.f32 %v1743, 1.0
    %v1745 = vrcp.pop %v1744
    %v1746 = vmul.f32 1.0, %v1745
    %v1747 = vmul.f32 %v1703, %v699
    %v1748 = vmul.f32 %v1713, %v704
    %v1749 = vadd.f32 %v1747, %v1748
    %v1750 = vadd.f32 %v1749, %v666
    %v1751 = vmul.f32 %v1736, %v1750
    %v1752 = vadd.f32 %v1726, %v1751
    %v1753 = vtanh.pop %v1752
    %v1754 = vsub.f32 1.0, %v1746
    %v1755 = vmul.f32 %v1754, %v1753
    %v1756 = vmul.f32 %v1746, %v1697
    %v1757 = vadd.f32 %v1755, %v1756
    %s1758 = scalar_lea.vmem %s7, 34
    %v1759 = vld [vmem:[%s1758] sm:$0x3]
    %1761 = vset.pattern.permute.xlu0 0
    %1762 = vperm.xlu0 %1761, %v1757
    %v1763 = vpop.permute.xlu0 %1762
    %v1765 = vlaneseq
    %v1766 = vshrl.u32 %v1765, 7
    %v1767 = vsub.s32 0, %v1766
    %v1768 = vrot.slane %v1759, %v1767
    %v1769 = vmul.f32 %v1763, %v1768
    %v1770 = vadd.f32 %v1720, %v1769
    %1771 = vset.pattern.permute.xlu0 1
    %1772 = vperm.xlu0 %1771, %v1757
    %v1773 = vpop.permute.xlu0 %1772
    %v1775 = vlaneseq
    %v1776 = vshrl.u32 %v1775, 7
    %v1777 = vsub.s32 1, %v1776
    %v1778 = vrot.slane %v1759, %v1777
    %v1779 = vmul.f32 %v1773, %v1778
    %v1780 = vadd.f32 %v1770, %v1779
    %s1781 = scalar_lea.vmem [#allocation2], 144
    %v1782 = vld [vmem:[%s1781] sm:$0xff]
    %s1783 = scalar_lea.vmem [#allocation3], 144
    %v1784 = vld [vmem:[%s1783] sm:$0xff]
    %s1785 = scalar_lea.vmem [#allocation4], 144
    %v1786 = vld [vmem:[%s1785] sm:$0xff]
    %v1787 = vmul.f32 %v1763, %v679
    %v1788 = vmul.f32 %v1773, %v684
    %v1789 = vadd.f32 %v1787, %v1788
    %v1790 = vadd.f32 %v1782, %v1789
    %v1791 = vxor.u32 %v1790, 2147483648
    %v1792 = vmul.f32 %v1791, 1.442695
    %v1793 = vpow.pop %v1792
    %v1794 = vadd.f32 %v1793, 1.0
    %v1795 = vrcp.pop %v1794
    %v1796 = vmul.f32 1.0, %v1795
    %v1797 = vmul.f32 %v1763, %v689
    %v1798 = vmul.f32 %v1773, %v694
    %v1799 = vadd.f32 %v1797, %v1798
    %v1800 = vadd.f32 %v1784, %v1799
    %v1801 = vxor.u32 %v1800, 2147483648
    %v1802 = vmul.f32 %v1801, 1.442695
    %v1803 = vpow.pop %v1802
    %v1804 = vadd.f32 %v1803, 1.0
    %v1805 = vrcp.pop %v1804
    %v1806 = vmul.f32 1.0, %v1805
    %v1807 = vmul.f32 %v1763, %v699
    %v1808 = vmul.f32 %v1773, %v704
    %v1809 = vadd.f32 %v1807, %v1808
    %v1810 = vadd.f32 %v1809, %v666
    %v1811 = vmul.f32 %v1796, %v1810
    %v1812 = vadd.f32 %v1786, %v1811
    %v1813 = vtanh.pop %v1812
    %v1814 = vsub.f32 1.0, %v1806
    %v1815 = vmul.f32 %v1814, %v1813
    %v1816 = vmul.f32 %v1806, %v1757
    %v1817 = vadd.f32 %v1815, %v1816
    %s1818 = scalar_lea.vmem %s7, 36
    %v1819 = vld [vmem:[%s1818] sm:$0x3]
    %1821 = vset.pattern.permute.xlu0 0
    %1822 = vperm.xlu0 %1821, %v1817
    %v1823 = vpop.permute.xlu0 %1822
    %v1825 = vlaneseq
    %v1826 = vshrl.u32 %v1825, 7
    %v1827 = vsub.s32 0, %v1826
    %v1828 = vrot.slane %v1819, %v1827
    %v1829 = vmul.f32 %v1823, %v1828
    %v1830 = vadd.f32 %v1780, %v1829
    %1831 = vset.pattern.permute.xlu0 1
    %1832 = vperm.xlu0 %1831, %v1817
    %v1833 = vpop.permute.xlu0 %1832
    %v1835 = vlaneseq
    %v1836 = vshrl.u32 %v1835, 7
    %v1837 = vsub.s32 1, %v1836
    %v1838 = vrot.slane %v1819, %v1837
    %v1839 = vmul.f32 %v1833, %v1838
    %v1840 = vadd.f32 %v1830, %v1839
    %s1841 = scalar_lea.vmem [#allocation2], 152
    %v1842 = vld [vmem:[%s1841] sm:$0xff]
    %s1843 = scalar_lea.vmem [#allocation3], 152
    %v1844 = vld [vmem:[%s1843] sm:$0xff]
    %s1845 = scalar_lea.vmem [#allocation4], 152
    %v1846 = vld [vmem:[%s1845] sm:$0xff]
    %v1847 = vmul.f32 %v1823, %v679
    %v1848 = vmul.f32 %v1833, %v684
    %v1849 = vadd.f32 %v1847, %v1848
    %v1850 = vadd.f32 %v1842, %v1849
    %v1851 = vxor.u32 %v1850, 2147483648
    %v1852 = vmul.f32 %v1851, 1.442695
    %v1853 = vpow.pop %v1852
    %v1854 = vadd.f32 %v1853, 1.0
    %v1855 = vrcp.pop %v1854
    %v1856 = vmul.f32 1.0, %v1855
    %v1857 = vmul.f32 %v1823, %v689
    %v1858 = vmul.f32 %v1833, %v694
    %v1859 = vadd.f32 %v1857, %v1858
    %v1860 = vadd.f32 %v1844, %v1859
    %v1861 = vxor.u32 %v1860, 2147483648
    %v1862 = vmul.f32 %v1861, 1.442695
    %v1863 = vpow.pop %v1862
    %v1864 = vadd.f32 %v1863, 1.0
    %v1865 = vrcp.pop %v1864
    %v1866 = vmul.f32 1.0, %v1865
    %v1867 = vmul.f32 %v1823, %v699
    %v1868 = vmul.f32 %v1833, %v704
    %v1869 = vadd.f32 %v1867, %v1868
    %v1870 = vadd.f32 %v1869, %v666
    %v1871 = vmul.f32 %v1856, %v1870
    %v1872 = vadd.f32 %v1846, %v1871
    %v1873 = vtanh.pop %v1872
    %v1874 = vsub.f32 1.0, %v1866
    %v1875 = vmul.f32 %v1874, %v1873
    %v1876 = vmul.f32 %v1866, %v1817
    %v1877 = vadd.f32 %v1875, %v1876
    %s1878 = scalar_lea.vmem %s7, 38
    %v1879 = vld [vmem:[%s1878] sm:$0x3]
    %1881 = vset.pattern.permute.xlu0 0
    %1882 = vperm.xlu0 %1881, %v1877
    %v1883 = vpop.permute.xlu0 %1882
    %v1885 = vlaneseq
    %v1886 = vshrl.u32 %v1885, 7
    %v1887 = vsub.s32 0, %v1886
    %v1888 = vrot.slane %v1879, %v1887
    %v1889 = vmul.f32 %v1883, %v1888
    %v1890 = vadd.f32 %v1840, %v1889
    %1891 = vset.pattern.permute.xlu0 1
    %1892 = vperm.xlu0 %1891, %v1877
    %v1893 = vpop.permute.xlu0 %1892
    %v1895 = vlaneseq
    %v1896 = vshrl.u32 %v1895, 7
    %v1897 = vsub.s32 1, %v1896
    %v1898 = vrot.slane %v1879, %v1897
    %v1899 = vmul.f32 %v1893, %v1898
    %v1900 = vadd.f32 %v1890, %v1899
    %s1901 = scalar_lea.vmem [#allocation2], 160
    %v1902 = vld [vmem:[%s1901] sm:$0xff]
    %s1903 = scalar_lea.vmem [#allocation3], 160
    %v1904 = vld [vmem:[%s1903] sm:$0xff]
    %s1905 = scalar_lea.vmem [#allocation4], 160
    %v1906 = vld [vmem:[%s1905] sm:$0xff]
    %v1907 = vmul.f32 %v1883, %v679
    %v1908 = vmul.f32 %v1893, %v684
    %v1909 = vadd.f32 %v1907, %v1908
    %v1910 = vadd.f32 %v1902, %v1909
    %v1911 = vxor.u32 %v1910, 2147483648
    %v1912 = vmul.f32 %v1911, 1.442695
    %v1913 = vpow.pop %v1912
    %v1914 = vadd.f32 %v1913, 1.0
    %v1915 = vrcp.pop %v1914
    %v1916 = vmul.f32 1.0, %v1915
    %v1917 = vmul.f32 %v1883, %v689
    %v1918 = vmul.f32 %v1893, %v694
    %v1919 = vadd.f32 %v1917, %v1918
    %v1920 = vadd.f32 %v1904, %v1919
    %v1921 = vxor.u32 %v1920, 2147483648
    %v1922 = vmul.f32 %v1921, 1.442695
    %v1923 = vpow.pop %v1922
    %v1924 = vadd.f32 %v1923, 1.0
    %v1925 = vrcp.pop %v1924
    %v1926 = vmul.f32 1.0, %v1925
    %v1927 = vmul.f32 %v1883, %v699
    %v1928 = vmul.f32 %v1893, %v704
    %v1929 = vadd.f32 %v1927, %v1928
    %v1930 = vadd.f32 %v1929, %v666
    %v1931 = vmul.f32 %v1916, %v1930
    %v1932 = vadd.f32 %v1906, %v1931
    %v1933 = vtanh.pop %v1932
    %v1934 = vsub.f32 1.0, %v1926
    %v1935 = vmul.f32 %v1934, %v1933
    %v1936 = vmul.f32 %v1926, %v1877
    %v1937 = vadd.f32 %v1935, %v1936
    %s1938 = scalar_lea.vmem %s7, 40
    %v1939 = vld [vmem:[%s1938] sm:$0x3]
    %1941 = vset.pattern.permute.xlu0 0
    %1942 = vperm.xlu0 %1941, %v1937
    %v1943 = vpop.permute.xlu0 %1942
    %v1945 = vlaneseq
    %v1946 = vshrl.u32 %v1945, 7
    %v1947 = vsub.s32 0, %v1946
    %v1948 = vrot.slane %v1939, %v1947
    %v1949 = vmul.f32 %v1943, %v1948
    %v1950 = vadd.f32 %v1900, %v1949
    %1951 = vset.pattern.permute.xlu0 1
    %1952 = vperm.xlu0 %1951, %v1937
    %v1953 = vpop.permute.xlu0 %1952
    %v1955 = vlaneseq
    %v1956 = vshrl.u32 %v1955, 7
    %v1957 = vsub.s32 1, %v1956
    %v1958 = vrot.slane %v1939, %v1957
    %v1959 = vmul.f32 %v1953, %v1958
    %v1960 = vadd.f32 %v1950, %v1959
    %s1961 = scalar_lea.vmem [#allocation2], 168
    %v1962 = vld [vmem:[%s1961] sm:$0xff]
    %s1963 = scalar_lea.vmem [#allocation3], 168
    %v1964 = vld [vmem:[%s1963] sm:$0xff]
    %s1965 = scalar_lea.vmem [#allocation4], 168
    %v1966 = vld [vmem:[%s1965] sm:$0xff]
    %v1967 = vmul.f32 %v1943, %v679
    %v1968 = vmul.f32 %v1953, %v684
    %v1969 = vadd.f32 %v1967, %v1968
    %v1970 = vadd.f32 %v1962, %v1969
    %v1971 = vxor.u32 %v1970, 2147483648
    %v1972 = vmul.f32 %v1971, 1.442695
    %v1973 = vpow.pop %v1972
    %v1974 = vadd.f32 %v1973, 1.0
    %v1975 = vrcp.pop %v1974
    %v1976 = vmul.f32 1.0, %v1975
    %v1977 = vmul.f32 %v1943, %v689
    %v1978 = vmul.f32 %v1953, %v694
    %v1979 = vadd.f32 %v1977, %v1978
    %v1980 = vadd.f32 %v1964, %v1979
    %v1981 = vxor.u32 %v1980, 2147483648
    %v1982 = vmul.f32 %v1981, 1.442695
    %v1983 = vpow.pop %v1982
    %v1984 = vadd.f32 %v1983, 1.0
    %v1985 = vrcp.pop %v1984
    %v1986 = vmul.f32 1.0, %v1985
    %v1987 = vmul.f32 %v1943, %v699
    %v1988 = vmul.f32 %v1953, %v704
    %v1989 = vadd.f32 %v1987, %v1988
    %v1990 = vadd.f32 %v1989, %v666
    %v1991 = vmul.f32 %v1976, %v1990
    %v1992 = vadd.f32 %v1966, %v1991
    %v1993 = vtanh.pop %v1992
    %v1994 = vsub.f32 1.0, %v1986
    %v1995 = vmul.f32 %v1994, %v1993
    %v1996 = vmul.f32 %v1986, %v1937
    %v1997 = vadd.f32 %v1995, %v1996
    %s1998 = scalar_lea.vmem %s7, 42
    %v1999 = vld [vmem:[%s1998] sm:$0x3]
    %2001 = vset.pattern.permute.xlu0 0
    %2002 = vperm.xlu0 %2001, %v1997
    %v2003 = vpop.permute.xlu0 %2002
    %v2005 = vlaneseq
    %v2006 = vshrl.u32 %v2005, 7
    %v2007 = vsub.s32 0, %v2006
    %v2008 = vrot.slane %v1999, %v2007
    %v2009 = vmul.f32 %v2003, %v2008
    %v2010 = vadd.f32 %v1960, %v2009
    %2011 = vset.pattern.permute.xlu0 1
    %2012 = vperm.xlu0 %2011, %v1997
    %v2013 = vpop.permute.xlu0 %2012
    %v2015 = vlaneseq
    %v2016 = vshrl.u32 %v2015, 7
    %v2017 = vsub.s32 1, %v2016
    %v2018 = vrot.slane %v1999, %v2017
    %v2019 = vmul.f32 %v2013, %v2018
    %v2020 = vadd.f32 %v2010, %v2019
    %s2021 = scalar_lea.vmem [#allocation2], 176
    %v2022 = vld [vmem:[%s2021] sm:$0xff]
    %s2023 = scalar_lea.vmem [#allocation3], 176
    %v2024 = vld [vmem:[%s2023] sm:$0xff]
    %s2025 = scalar_lea.vmem [#allocation4], 176
    %v2026 = vld [vmem:[%s2025] sm:$0xff]
    %v2027 = vmul.f32 %v2003, %v679
    %v2028 = vmul.f32 %v2013, %v684
    %v2029 = vadd.f32 %v2027, %v2028
    %v2030 = vadd.f32 %v2022, %v2029
    %v2031 = vxor.u32 %v2030, 2147483648
    %v2032 = vmul.f32 %v2031, 1.442695
    %v2033 = vpow.pop %v2032
    %v2034 = vadd.f32 %v2033, 1.0
    %v2035 = vrcp.pop %v2034
    %v2036 = vmul.f32 1.0, %v2035
    %v2037 = vmul.f32 %v2003, %v689
    %v2038 = vmul.f32 %v2013, %v694
    %v2039 = vadd.f32 %v2037, %v2038
    %v2040 = vadd.f32 %v2024, %v2039
    %v2041 = vxor.u32 %v2040, 2147483648
    %v2042 = vmul.f32 %v2041, 1.442695
    %v2043 = vpow.pop %v2042
    %v2044 = vadd.f32 %v2043, 1.0
    %v2045 = vrcp.pop %v2044
    %v2046 = vmul.f32 1.0, %v2045
    %v2047 = vmul.f32 %v2003, %v699
    %v2048 = vmul.f32 %v2013, %v704
    %v2049 = vadd.f32 %v2047, %v2048
    %v2050 = vadd.f32 %v2049, %v666
    %v2051 = vmul.f32 %v2036, %v2050
    %v2052 = vadd.f32 %v2026, %v2051
    %v2053 = vtanh.pop %v2052
    %v2054 = vsub.f32 1.0, %v2046
    %v2055 = vmul.f32 %v2054, %v2053
    %v2056 = vmul.f32 %v2046, %v1997
    %v2057 = vadd.f32 %v2055, %v2056
    %s2058 = scalar_lea.vmem %s7, 44
    %v2059 = vld [vmem:[%s2058] sm:$0x3]
    %2061 = vset.pattern.permute.xlu0 0
    %2062 = vperm.xlu0 %2061, %v2057
    %v2063 = vpop.permute.xlu0 %2062
    %v2065 = vlaneseq
    %v2066 = vshrl.u32 %v2065, 7
    %v2067 = vsub.s32 0, %v2066
    %v2068 = vrot.slane %v2059, %v2067
    %v2069 = vmul.f32 %v2063, %v2068
    %v2070 = vadd.f32 %v2020, %v2069
    %2071 = vset.pattern.permute.xlu0 1
    %2072 = vperm.xlu0 %2071, %v2057
    %v2073 = vpop.permute.xlu0 %2072
    %v2075 = vlaneseq
    %v2076 = vshrl.u32 %v2075, 7
    %v2077 = vsub.s32 1, %v2076
    %v2078 = vrot.slane %v2059, %v2077
    %v2079 = vmul.f32 %v2073, %v2078
    %v2080 = vadd.f32 %v2070, %v2079
    %s2081 = scalar_lea.vmem [#allocation2], 184
    %v2082 = vld [vmem:[%s2081] sm:$0xff]
    %s2083 = scalar_lea.vmem [#allocation3], 184
    %v2084 = vld [vmem:[%s2083] sm:$0xff]
    %s2085 = scalar_lea.vmem [#allocation4], 184
    %v2086 = vld [vmem:[%s2085] sm:$0xff]
    %v2087 = vmul.f32 %v2063, %v679
    %v2088 = vmul.f32 %v2073, %v684
    %v2089 = vadd.f32 %v2087, %v2088
    %v2090 = vadd.f32 %v2082, %v2089
    %v2091 = vxor.u32 %v2090, 2147483648
    %v2092 = vmul.f32 %v2091, 1.442695
    %v2093 = vpow.pop %v2092
    %v2094 = vadd.f32 %v2093, 1.0
    %v2095 = vrcp.pop %v2094
    %v2096 = vmul.f32 1.0, %v2095
    %v2097 = vmul.f32 %v2063, %v689
    %v2098 = vmul.f32 %v2073, %v694
    %v2099 = vadd.f32 %v2097, %v2098
    %v2100 = vadd.f32 %v2084, %v2099
    %v2101 = vxor.u32 %v2100, 2147483648
    %v2102 = vmul.f32 %v2101, 1.442695
    %v2103 = vpow.pop %v2102
    %v2104 = vadd.f32 %v2103, 1.0
    %v2105 = vrcp.pop %v2104
    %v2106 = vmul.f32 1.0, %v2105
    %v2107 = vmul.f32 %v2063, %v699
    %v2108 = vmul.f32 %v2073, %v704
    %v2109 = vadd.f32 %v2107, %v2108
    %v2110 = vadd.f32 %v2109, %v666
    %v2111 = vmul.f32 %v2096, %v2110
    %v2112 = vadd.f32 %v2086, %v2111
    %v2113 = vtanh.pop %v2112
    %v2114 = vsub.f32 1.0, %v2106
    %v2115 = vmul.f32 %v2114, %v2113
    %v2116 = vmul.f32 %v2106, %v2057
    %v2117 = vadd.f32 %v2115, %v2116
    %s2118 = scalar_lea.vmem %s7, 46
    %v2119 = vld [vmem:[%s2118] sm:$0x3]
    %2121 = vset.pattern.permute.xlu0 0
    %2122 = vperm.xlu0 %2121, %v2117
    %v2123 = vpop.permute.xlu0 %2122
    %v2125 = vlaneseq
    %v2126 = vshrl.u32 %v2125, 7
    %v2127 = vsub.s32 0, %v2126
    %v2128 = vrot.slane %v2119, %v2127
    %v2129 = vmul.f32 %v2123, %v2128
    %v2130 = vadd.f32 %v2080, %v2129
    %2131 = vset.pattern.permute.xlu0 1
    %2132 = vperm.xlu0 %2131, %v2117
    %v2133 = vpop.permute.xlu0 %2132
    %v2135 = vlaneseq
    %v2136 = vshrl.u32 %v2135, 7
    %v2137 = vsub.s32 1, %v2136
    %v2138 = vrot.slane %v2119, %v2137
    %v2139 = vmul.f32 %v2133, %v2138
    %v2140 = vadd.f32 %v2130, %v2139
    %s2141 = scalar_lea.vmem [#allocation2], 192
    %v2142 = vld [vmem:[%s2141] sm:$0xff]
    %s2143 = scalar_lea.vmem [#allocation3], 192
    %v2144 = vld [vmem:[%s2143] sm:$0xff]
    %s2145 = scalar_lea.vmem [#allocation4], 192
    %v2146 = vld [vmem:[%s2145] sm:$0xff]
    %v2147 = vmul.f32 %v2123, %v679
    %v2148 = vmul.f32 %v2133, %v684
    %v2149 = vadd.f32 %v2147, %v2148
    %v2150 = vadd.f32 %v2142, %v2149
    %v2151 = vxor.u32 %v2150, 2147483648
    %v2152 = vmul.f32 %v2151, 1.442695
    %v2153 = vpow.pop %v2152
    %v2154 = vadd.f32 %v2153, 1.0
    %v2155 = vrcp.pop %v2154
    %v2156 = vmul.f32 1.0, %v2155
    %v2157 = vmul.f32 %v2123, %v689
    %v2158 = vmul.f32 %v2133, %v694
    %v2159 = vadd.f32 %v2157, %v2158
    %v2160 = vadd.f32 %v2144, %v2159
    %v2161 = vxor.u32 %v2160, 2147483648
    %v2162 = vmul.f32 %v2161, 1.442695
    %v2163 = vpow.pop %v2162
    %v2164 = vadd.f32 %v2163, 1.0
    %v2165 = vrcp.pop %v2164
    %v2166 = vmul.f32 1.0, %v2165
    %v2167 = vmul.f32 %v2123, %v699
    %v2168 = vmul.f32 %v2133, %v704
    %v2169 = vadd.f32 %v2167, %v2168
    %v2170 = vadd.f32 %v2169, %v666
    %v2171 = vmul.f32 %v2156, %v2170
    %v2172 = vadd.f32 %v2146, %v2171
    %v2173 = vtanh.pop %v2172
    %v2174 = vsub.f32 1.0, %v2166
    %v2175 = vmul.f32 %v2174, %v2173
    %v2176 = vmul.f32 %v2166, %v2117
    %v2177 = vadd.f32 %v2175, %v2176
    %s2178 = scalar_lea.vmem %s7, 48
    %v2179 = vld [vmem:[%s2178] sm:$0x3]
    %2181 = vset.pattern.permute.xlu0 0
    %2182 = vperm.xlu0 %2181, %v2177
    %v2183 = vpop.permute.xlu0 %2182
    %v2185 = vlaneseq
    %v2186 = vshrl.u32 %v2185, 7
    %v2187 = vsub.s32 0, %v2186
    %v2188 = vrot.slane %v2179, %v2187
    %v2189 = vmul.f32 %v2183, %v2188
    %v2190 = vadd.f32 %v2140, %v2189
    %2191 = vset.pattern.permute.xlu0 1
    %2192 = vperm.xlu0 %2191, %v2177
    %v2193 = vpop.permute.xlu0 %2192
    %v2195 = vlaneseq
    %v2196 = vshrl.u32 %v2195, 7
    %v2197 = vsub.s32 1, %v2196
    %v2198 = vrot.slane %v2179, %v2197
    %v2199 = vmul.f32 %v2193, %v2198
    %v2200 = vadd.f32 %v2190, %v2199
    %s2201 = scalar_lea.vmem [#allocation2], 200
    %v2202 = vld [vmem:[%s2201] sm:$0xff]
    %s2203 = scalar_lea.vmem [#allocation3], 200
    %v2204 = vld [vmem:[%s2203] sm:$0xff]
    %s2205 = scalar_lea.vmem [#allocation4], 200
    %v2206 = vld [vmem:[%s2205] sm:$0xff]
    %v2207 = vmul.f32 %v2183, %v679
    %v2208 = vmul.f32 %v2193, %v684
    %v2209 = vadd.f32 %v2207, %v2208
    %v2210 = vadd.f32 %v2202, %v2209
    %v2211 = vxor.u32 %v2210, 2147483648
    %v2212 = vmul.f32 %v2211, 1.442695
    %v2213 = vpow.pop %v2212
    %v2214 = vadd.f32 %v2213, 1.0
    %v2215 = vrcp.pop %v2214
    %v2216 = vmul.f32 1.0, %v2215
    %v2217 = vmul.f32 %v2183, %v689
    %v2218 = vmul.f32 %v2193, %v694
    %v2219 = vadd.f32 %v2217, %v2218
    %v2220 = vadd.f32 %v2204, %v2219
    %v2221 = vxor.u32 %v2220, 2147483648
    %v2222 = vmul.f32 %v2221, 1.442695
    %v2223 = vpow.pop %v2222
    %v2224 = vadd.f32 %v2223, 1.0
    %v2225 = vrcp.pop %v2224
    %v2226 = vmul.f32 1.0, %v2225
    %v2227 = vmul.f32 %v2183, %v699
    %v2228 = vmul.f32 %v2193, %v704
    %v2229 = vadd.f32 %v2227, %v2228
    %v2230 = vadd.f32 %v2229, %v666
    %v2231 = vmul.f32 %v2216, %v2230
    %v2232 = vadd.f32 %v2206, %v2231
    %v2233 = vtanh.pop %v2232
    %v2234 = vsub.f32 1.0, %v2226
    %v2235 = vmul.f32 %v2234, %v2233
    %v2236 = vmul.f32 %v2226, %v2177
    %v2237 = vadd.f32 %v2235, %v2236
    %s2238 = scalar_lea.vmem %s7, 50
    %v2239 = vld [vmem:[%s2238] sm:$0x3]
    %2241 = vset.pattern.permute.xlu0 0
    %2242 = vperm.xlu0 %2241, %v2237
    %v2243 = vpop.permute.xlu0 %2242
    %v2245 = vlaneseq
    %v2246 = vshrl.u32 %v2245, 7
    %v2247 = vsub.s32 0, %v2246
    %v2248 = vrot.slane %v2239, %v2247
    %v2249 = vmul.f32 %v2243, %v2248
    %v2250 = vadd.f32 %v2200, %v2249
    %2251 = vset.pattern.permute.xlu0 1
    %2252 = vperm.xlu0 %2251, %v2237
    %v2253 = vpop.permute.xlu0 %2252
    %v2255 = vlaneseq
    %v2256 = vshrl.u32 %v2255, 7
    %v2257 = vsub.s32 1, %v2256
    %v2258 = vrot.slane %v2239, %v2257
    %v2259 = vmul.f32 %v2253, %v2258
    %v2260 = vadd.f32 %v2250, %v2259
    %s2261 = scalar_lea.vmem [#allocation2], 208
    %v2262 = vld [vmem:[%s2261] sm:$0xff]
    %s2263 = scalar_lea.vmem [#allocation3], 208
    %v2264 = vld [vmem:[%s2263] sm:$0xff]
    %s2265 = scalar_lea.vmem [#allocation4], 208
    %v2266 = vld [vmem:[%s2265] sm:$0xff]
    %v2267 = vmul.f32 %v2243, %v679
    %v2268 = vmul.f32 %v2253, %v684
    %v2269 = vadd.f32 %v2267, %v2268
    %v2270 = vadd.f32 %v2262, %v2269
    %v2271 = vxor.u32 %v2270, 2147483648
    %v2272 = vmul.f32 %v2271, 1.442695
    %v2273 = vpow.pop %v2272
    %v2274 = vadd.f32 %v2273, 1.0
    %v2275 = vrcp.pop %v2274
    %v2276 = vmul.f32 1.0, %v2275
    %v2277 = vmul.f32 %v2243, %v689
    %v2278 = vmul.f32 %v2253, %v694
    %v2279 = vadd.f32 %v2277, %v2278
    %v2280 = vadd.f32 %v2264, %v2279
    %v2281 = vxor.u32 %v2280, 2147483648
    %v2282 = vmul.f32 %v2281, 1.442695
    %v2283 = vpow.pop %v2282
    %v2284 = vadd.f32 %v2283, 1.0
    %v2285 = vrcp.pop %v2284
    %v2286 = vmul.f32 1.0, %v2285
    %v2287 = vmul.f32 %v2243, %v699
    %v2288 = vmul.f32 %v2253, %v704
    %v2289 = vadd.f32 %v2287, %v2288
    %v2290 = vadd.f32 %v2289, %v666
    %v2291 = vmul.f32 %v2276, %v2290
    %v2292 = vadd.f32 %v2266, %v2291
    %v2293 = vtanh.pop %v2292
    %v2294 = vsub.f32 1.0, %v2286
    %v2295 = vmul.f32 %v2294, %v2293
    %v2296 = vmul.f32 %v2286, %v2237
    %v2297 = vadd.f32 %v2295, %v2296
    %s2298 = scalar_lea.vmem %s7, 52
    %v2299 = vld [vmem:[%s2298] sm:$0x3]
    %2301 = vset.pattern.permute.xlu0 0
    %2302 = vperm.xlu0 %2301, %v2297
    %v2303 = vpop.permute.xlu0 %2302
    %v2305 = vlaneseq
    %v2306 = vshrl.u32 %v2305, 7
    %v2307 = vsub.s32 0, %v2306
    %v2308 = vrot.slane %v2299, %v2307
    %v2309 = vmul.f32 %v2303, %v2308
    %v2310 = vadd.f32 %v2260, %v2309
    %2311 = vset.pattern.permute.xlu0 1
    %2312 = vperm.xlu0 %2311, %v2297
    %v2313 = vpop.permute.xlu0 %2312
    %v2315 = vlaneseq
    %v2316 = vshrl.u32 %v2315, 7
    %v2317 = vsub.s32 1, %v2316
    %v2318 = vrot.slane %v2299, %v2317
    %v2319 = vmul.f32 %v2313, %v2318
    %v2320 = vadd.f32 %v2310, %v2319
    %s2321 = scalar_lea.vmem [#allocation2], 216
    %v2322 = vld [vmem:[%s2321] sm:$0xff]
    %s2323 = scalar_lea.vmem [#allocation3], 216
    %v2324 = vld [vmem:[%s2323] sm:$0xff]
    %s2325 = scalar_lea.vmem [#allocation4], 216
    %v2326 = vld [vmem:[%s2325] sm:$0xff]
    %v2327 = vmul.f32 %v2303, %v679
    %v2328 = vmul.f32 %v2313, %v684
    %v2329 = vadd.f32 %v2327, %v2328
    %v2330 = vadd.f32 %v2322, %v2329
    %v2331 = vxor.u32 %v2330, 2147483648
    %v2332 = vmul.f32 %v2331, 1.442695
    %v2333 = vpow.pop %v2332
    %v2334 = vadd.f32 %v2333, 1.0
    %v2335 = vrcp.pop %v2334
    %v2336 = vmul.f32 1.0, %v2335
    %v2337 = vmul.f32 %v2303, %v689
    %v2338 = vmul.f32 %v2313, %v694
    %v2339 = vadd.f32 %v2337, %v2338
    %v2340 = vadd.f32 %v2324, %v2339
    %v2341 = vxor.u32 %v2340, 2147483648
    %v2342 = vmul.f32 %v2341, 1.442695
    %v2343 = vpow.pop %v2342
    %v2344 = vadd.f32 %v2343, 1.0
    %v2345 = vrcp.pop %v2344
    %v2346 = vmul.f32 1.0, %v2345
    %v2347 = vmul.f32 %v2303, %v699
    %v2348 = vmul.f32 %v2313, %v704
    %v2349 = vadd.f32 %v2347, %v2348
    %v2350 = vadd.f32 %v2349, %v666
    %v2351 = vmul.f32 %v2336, %v2350
    %v2352 = vadd.f32 %v2326, %v2351
    %v2353 = vtanh.pop %v2352
    %v2354 = vsub.f32 1.0, %v2346
    %v2355 = vmul.f32 %v2354, %v2353
    %v2356 = vmul.f32 %v2346, %v2297
    %v2357 = vadd.f32 %v2355, %v2356
    %s2358 = scalar_lea.vmem %s7, 54
    %v2359 = vld [vmem:[%s2358] sm:$0x3]
    %2361 = vset.pattern.permute.xlu0 0
    %2362 = vperm.xlu0 %2361, %v2357
    %v2363 = vpop.permute.xlu0 %2362
    %v2365 = vlaneseq
    %v2366 = vshrl.u32 %v2365, 7
    %v2367 = vsub.s32 0, %v2366
    %v2368 = vrot.slane %v2359, %v2367
    %v2369 = vmul.f32 %v2363, %v2368
    %v2370 = vadd.f32 %v2320, %v2369
    %2371 = vset.pattern.permute.xlu0 1
    %2372 = vperm.xlu0 %2371, %v2357
    %v2373 = vpop.permute.xlu0 %2372
    %v2375 = vlaneseq
    %v2376 = vshrl.u32 %v2375, 7
    %v2377 = vsub.s32 1, %v2376
    %v2378 = vrot.slane %v2359, %v2377
    %v2379 = vmul.f32 %v2373, %v2378
    %v2380 = vadd.f32 %v2370, %v2379
    %v2381 = vadd.f32 %v2380, %v673
    %2382 = vst [vmem:[#allocation8] sm:$0xff] %v2381
    // Predicated region
    $region42: #{tpu_custom_call.1} parent=1 // pred_check
      _
    $region43: #{tpu_custom_call.1} parent=1 // pred_check_branch
      %2384 = sbr.rel (0) target = $region45
    $region44: #{tpu_custom_call.1} parent=1 // pred_region
      %s2386 = ssub.s32 128, 128
      %2387 = vsyncadd [#allocation7], %s2386
      %s2389 = sshll.u32 [#allocation8], 4
      %s2390 = int_to_ptr.vmem [resolvable:$true] %s2389
      %2392 = dma.vmem_to_hbm [thread:$0]  %s2390, 128, %s9, [#allocation7]
    $region45: #{tpu_custom_call.1} parent=1 // pred_fallthru
      _
    // Predicated region
    $region46: #{tpu_custom_call.1} parent=1 // pred_check
      _
    $region47: #{tpu_custom_call.1} parent=1 // pred_check_branch
      %2394 = sbr.rel (0) target = $region49
    $region48: #{tpu_custom_call.1} parent=1 // pred_region
      %2395 = dma.done [#allocation7], 128
    $region49: #{tpu_custom_call.1} parent=1 // pred_fallthru
      _
    %2396 = vsyncpa [#allocation6], 1
    %2397 = vsyncpa [#allocation7], 1

</llo_original>
